<compile_context>
chip_gen: v7x
topology: tpu7x:2x2x1
jax: 0.10.0
libtpu: 0.0.40
codegen_flags: <defaults>
</compile_context>

<pallas_src>
import jax
import jax.numpy as jnp
import numpy as np
from jax.experimental import pallas as pl
from jax.experimental.pallas import tpu as pltpu


# ----------------------------- Pallas kernel --------------------------------

def make_spectral_stack_kernel(layer_sizes, tb):
    """Build the fused SpectralStack kernel.

    layer_sizes: list of (C_in, C_out) per Spectral layer (static Python ints).
    tb:          number of (b, t) slices packed per grid step (static).
    """
    n_layers = len(layer_sizes)

    def kernel(x_ref, eig_ref, eigt_ref, *rest):
        # rest = (w_ref_0, ..., w_ref_{L-1}, o_ref)
        w_refs = rest[:n_layers]
        o_ref = rest[n_layers]

        eig = eig_ref[...]            # (E, N)
        eig_t = eigt_ref[...]         # (N, E)   -- avoids any in-kernel transpose
        act = x_ref[0]                # (N, C0 * tb)  lane-dense activation slab

        for (c_in, c_out), w_ref in zip(layer_sizes, w_refs):
            # x1[e, c*tb + s] = sum_n eig[e, n] * act[n, c*tb + s]
            #   == torch.matmul(f, eig.T) for every packed slice s.     (MXU)
            x1 = jnp.dot(eig, act, preferred_element_type=jnp.float32)   # (E, C*tb)

            # x3[e, o*tb + s] = sum_c param[o, c, e] * x1[e, c*tb + s]
            #   == (x1_exp * p_exp).sum(dim=3).  Unrolled over the tiny (o, c)
            #   grid as f32 FMAs on lane-dense (E, tb) tiles; weight rows are
            #   (E, 1) sublane vectors that lane-broadcast for free.     (VPU)
            cols = []
            for o in range(c_out):
                acc = w_ref[o * c_in] * x1[:, 0:tb]
                for c in range(1, c_in):
                    acc = acc + w_ref[o * c_in + c] * x1[:, c * tb:(c + 1) * tb]
                cols.append(acc)
            x3 = jnp.concatenate(cols, axis=1)                           # (E, O*tb)

            # x4[n, o*tb + s] = sum_e eig[e, n] * x3[e, o*tb + s]
            #   == torch.matmul(x3, eig) already in (node, chan) order.  (MXU)
            x4 = jnp.dot(eig_t, x3, preferred_element_type=jnp.float32)  # (N, O*tb)

            act = jnp.maximum(x4, 0.0)                                   # ReLU

        o_ref[0] = act.astype(o_ref.dtype)

    return kernel


def spectral_stack_forward(feats, times, params, eig, eig_dims, slice_block=128):
    """SpectralStack.forward with eig provided (static path), fused in one kernel."""
    x_sq = get_square_feats(feats, times)                # (B, T, N, C0)
    B, T, N, C0 = x_sq.shape
    eig_p = pad_eig(eig, eig_dims).astype(jnp.float32)   # (E, N), E == eig_dims
    E = eig_p.shape[0]

    BT = B * T
    TB = slice_block if BT % slice_block == 0 else BT    # packed slices / grid step
    nblk = BT // TB

    # Lane-dense slab layout: (nblk, N, C0*TB); column index = c*TB + slice.
    x = x_sq.reshape(BT, N, C0).reshape(nblk, TB, N, C0)
    x = jnp.transpose(x, (0, 2, 3, 1)).reshape(nblk, N, C0 * TB).astype(jnp.float32)

    layer_sizes = []
    w_packed = []
    c_prev = C0
    for w in params:
        O, Cw, Ew = w.shape
        assert Cw == c_prev and Ew == E
        layer_sizes.append((Cw, O))
        # (O, C, E) -> (O*C, E, 1): row o*C + c is param[o, c, :] as an (E, 1)
        # sublane vector, ready to lane-broadcast against (E, TB) tiles.
        w_packed.append(jnp.asarray(w, jnp.float32).reshape(O * Cw, Ew)[:, :, None])
        c_prev = O
    O_last = layer_sizes[-1][1]

    kernel = make_spectral_stack_kernel(layer_sizes, TB)

    in_specs = [
        pl.BlockSpec((1, N, C0 * TB), lambda i: (i, 0, 0)),   # activation slab
        pl.BlockSpec((E, N), lambda i: (0, 0)),               # eig
        pl.BlockSpec((N, E), lambda i: (0, 0)),               # eig^T
    ] + [
        pl.BlockSpec((co * ci, E, 1), lambda i: (0, 0, 0))    # per-layer weights
        for (ci, co) in layer_sizes
    ]

    out = pl.pallas_call(
        kernel,
        out_shape=jax.ShapeDtypeStruct((nblk, N, O_last * TB), jnp.float32),
        grid_spec=pltpu.PrefetchScalarGridSpec(
            num_scalar_prefetch=0,
            grid=(nblk,),
            in_specs=in_specs,
            out_specs=pl.BlockSpec((1, N, O_last * TB), lambda i: (i, 0, 0)),
        ),
        compiler_params=pltpu.CompilerParams(
            dimension_semantics=("parallel",),   # even nblk keeps both v7x TCs busy
            vmem_limit_bytes=32 * 1024 * 1024,   # explicit, safe on v5e/v6e/v7x
        ),
    )(x, eig_p, eig_p.T, *w_packed)

    # (nblk, N, O*TB) -> (B, T, N, O) -> (B, T*N, O)
    out = out.reshape(nblk, N, O_last, TB)
    out = jnp.transpose(out, (0, 3, 1, 2)).reshape(B, T, N, O_last)
    return out.reshape(B, T * N, O_last)


# ------------------------------- JAX glue ------------------------------------

def get_square_feats(feats, times):
    # Mirrors torch get_square_feats under its own assertion that every batch
    # element shares the same time structure (same ids / counts per time).
    t_row = np.asarray(times[0])
    all_times = np.unique(t_row)
    slices = []
    for t in all_times:
        idx = np.nonzero(t_row == t)[0]
        slices.append(feats[:, idx, :])          # (B, N_t, C)
    return jnp.stack(slices, axis=1)             # (B, T, N, C)


def pad_eig(eig, eig_dims):
    # torch Spectral.transform zero-pads eig rows up to eig_dims.
    E = eig.shape[0]
    if E < eig_dims:
        pad = jnp.zeros((eig_dims - E,) + eig.shape[1:], eig.dtype)
        eig = jnp.concatenate([eig, pad], axis=0)
    return eig


def spectral_stack_reference(feats, times, params, eig, eig_dims):
    """float64 numpy reference reproducing the torch math for verification."""
    x = np.asarray(get_square_feats(feats, times), np.float64)   # (B,T,N,C)
    e = np.asarray(pad_eig(eig, eig_dims), np.float64)           # (E,N)
    for w in params:
        wf = np.asarray(w, np.float64)                           # (O,C,E)
        f = np.transpose(x, (0, 1, 3, 2))                        # (B,T,C,N)
        x1 = f @ e.T                                             # (B,T,C,E)
        x2 = x1[:, :, None, :, :] * wf[None, None]               # (B,T,O,C,E)
        x3 = x2.sum(axis=3)                                      # (B,T,O,E)
        x4 = x3 @ e                                              # (B,T,O,N)
        x = np.maximum(np.transpose(x4, (0, 1, 3, 2)), 0.0)      # (B,T,N,O)
    return x.reshape(x.shape[0], -1, x.shape[-1])


def init_kaiming_uniform(key, out_size, in_size, eig_dims):
    # nn.init.kaiming_uniform_(param, nonlinearity='relu'):
    #   fan_in = in_size * eig_dims, bound = sqrt(2) * sqrt(3 / fan_in)
    fan_in = in_size * eig_dims
    bound = np.sqrt(2.0) * np.sqrt(3.0 / fan_in)
    return jax.random.uniform(
        key, (out_size, in_size, eig_dims), jnp.float32, -bound, bound)


# --------------------------------- main ---------------------------------------

if __name__ == "__main__":
    # Module config (pos_size=0: the static-eig path calls transform without
    # concatenating pos, exactly as SpectralStack.forward does when eig given).
    in_size, out_size, pos_size = 4, 8, 0
    hidden = (8,)
    eig_dims = 8
    sizes = [in_size, *hidden, out_size]

    B, T, N = 2, 128, 16          # batch, unique times, nodes per time
    eig_cutoff = 6                # < eig_dims to exercise the zero-padding path

    key = jax.random.PRNGKey(0)
    k_feats, k_eig, *k_params = jax.random.split(key, 2 + len(sizes) - 1)

    feats = jax.random.normal(k_feats, (B, T * N, in_size), jnp.float32)
    # each unique time repeated N times, identical across batch elements
    times = jnp.tile(jnp.repeat(jnp.arange(T, dtype=jnp.int32), N)[None, :], (B, 1))
    # synthetic eigenvector rows (stand-in for calc_spec(laplacian)[:cutoff])
    eig = jax.random.normal(k_eig, (eig_cutoff, N), jnp.float32)

    params = [
        init_kaiming_uniform(k, o, i + pos_size, eig_dims)
        for k, (i, o) in zip(k_params, zip(sizes[:-1], sizes[1:]))
    ]

    out = spectral_stack_forward(feats, times, params, eig, eig_dims)
    out = jax.block_until_ready(out)
    assert out.shape == (B, T * N, out_size)

    ref = spectral_stack_reference(feats, times, params, eig, eig_dims)
    np.testing.assert_allclose(np.asarray(out), ref, rtol=5e-4, atol=5e-4)

    # TODO(synk): dynamic_eigs path (np.linalg.eig of per-time Laplacians with
    # data-dependent node counts) is host-side bookkeeping, not a kernel hot path.
    print("KERNEL_OK")
</pallas_src>

<mosaic_0001>
module attributes {stable_mosaic.version = 11 : i64} {
  func.func @kernel(%arg0: i32, %arg1: memref<1x16x512xf32, #tpu.memory_space<vmem>>, %arg2: memref<8x16xf32, #tpu.memory_space<vmem>>, %arg3: memref<16x8xf32, #tpu.memory_space<vmem>>, %arg4: memref<32x8x1xf32, #tpu.memory_space<vmem>>, %arg5: memref<64x8x1xf32, #tpu.memory_space<vmem>>, %arg6: memref<1x16x1024xf32, #tpu.memory_space<vmem>>) attributes {dimension_semantics = [#tpu.dimension_semantics<parallel>], iteration_bounds = array<i64: 2>, scalar_prefetch = 0 : i64, scratch_operands = 0 : i64, tpu.core_type = #tpu.core_type<tc>, window_params = [{transform_indices = @transform_0, window_bounds = array<i64: 1, 16, 512>}, {pipeline_mode = #tpu.pipeline_mode<synchronous>, transform_indices = @transform_1, window_bounds = array<i64: 8, 16>}, {pipeline_mode = #tpu.pipeline_mode<synchronous>, transform_indices = @transform_2, window_bounds = array<i64: 16, 8>}, {pipeline_mode = #tpu.pipeline_mode<synchronous>, transform_indices = @transform_3, window_bounds = array<i64: 32, 8, 1>}, {pipeline_mode = #tpu.pipeline_mode<synchronous>, transform_indices = @transform_4, window_bounds = array<i64: 64, 8, 1>}, {transform_indices = @transform_5, window_bounds = array<i64: 1, 16, 1024>}]} {
    %c0 = arith.constant 0 : index
    %c0_0 = arith.constant 0 : index
    %0 = vector.load %arg2[%c0, %c0_0] : memref<8x16xf32, #tpu.memory_space<vmem>>, vector<8x16xf32>
    %c0_1 = arith.constant 0 : index
    %c0_2 = arith.constant 0 : index
    %1 = vector.load %arg3[%c0_1, %c0_2] : memref<16x8xf32, #tpu.memory_space<vmem>>, vector<16x8xf32>
    %c0_3 = arith.constant 0 : index
    %c0_4 = arith.constant 0 : index
    %c0_5 = arith.constant 0 : index
    %2 = vector.load %arg1[%c0_3, %c0_4, %c0_5] : memref<1x16x512xf32, #tpu.memory_space<vmem>>, vector<1x16x512xf32>
    %3 = vector.shape_cast %2 : vector<1x16x512xf32> to vector<16x512xf32>
    %cst = arith.constant dense<0.000000e+00> : vector<8x512xf32>
    %4 = tpu.matmul %0, %3, %cst {dimension_numbers = #tpu.dot_dimension_numbers<[1], [0], [0], [1], [0, 0, 1, 1], [], []>} : vector<8x16xf32>, vector<16x512xf32>, vector<8x512xf32> -> vector<8x512xf32>
    %c0_6 = arith.constant 0 : index
    %c0_7 = arith.constant 0 : index
    %c0_8 = arith.constant 0 : index
    %5 = vector.load %arg4[%c0_6, %c0_7, %c0_8] : memref<32x8x1xf32, #tpu.memory_space<vmem>>, vector<1x8x1xf32>
    %6 = vector.shape_cast %5 : vector<1x8x1xf32> to vector<8x1xf32>
    %7 = vector.extract_strided_slice %4 {offsets = [0, 0], sizes = [8, 128], strides = [1, 1]} : vector<8x512xf32> to vector<8x128xf32>
    %8 = vector.broadcast %6 : vector<8x1xf32> to vector<8x128xf32>
    %9 = arith.mulf %8, %7 : vector<8x128xf32>
    %c1 = arith.constant 1 : index
    %c0_9 = arith.constant 0 : index
    %c0_10 = arith.constant 0 : index
    %10 = vector.load %arg4[%c1, %c0_9, %c0_10] : memref<32x8x1xf32, #tpu.memory_space<vmem>>, vector<1x8x1xf32>
    %11 = vector.shape_cast %10 : vector<1x8x1xf32> to vector<8x1xf32>
    %12 = vector.extract_strided_slice %4 {offsets = [0, 128], sizes = [8, 128], strides = [1, 1]} : vector<8x512xf32> to vector<8x128xf32>
    %13 = vector.broadcast %11 : vector<8x1xf32> to vector<8x128xf32>
    %14 = arith.mulf %13, %12 : vector<8x128xf32>
    %15 = arith.addf %9, %14 : vector<8x128xf32>
    %c2 = arith.constant 2 : index
    %c0_11 = arith.constant 0 : index
    %c0_12 = arith.constant 0 : index
    %16 = vector.load %arg4[%c2, %c0_11, %c0_12] : memref<32x8x1xf32, #tpu.memory_space<vmem>>, vector<1x8x1xf32>
    %17 = vector.shape_cast %16 : vector<1x8x1xf32> to vector<8x1xf32>
    %18 = vector.extract_strided_slice %4 {offsets = [0, 256], sizes = [8, 128], strides = [1, 1]} : vector<8x512xf32> to vector<8x128xf32>
    %19 = vector.broadcast %17 : vector<8x1xf32> to vector<8x128xf32>
    %20 = arith.mulf %19, %18 : vector<8x128xf32>
    %21 = arith.addf %15, %20 : vector<8x128xf32>
    %c3 = arith.constant 3 : index
    %c0_13 = arith.constant 0 : index
    %c0_14 = arith.constant 0 : index
    %22 = vector.load %arg4[%c3, %c0_13, %c0_14] : memref<32x8x1xf32, #tpu.memory_space<vmem>>, vector<1x8x1xf32>
    %23 = vector.shape_cast %22 : vector<1x8x1xf32> to vector<8x1xf32>
    %24 = vector.extract_strided_slice %4 {offsets = [0, 384], sizes = [8, 128], strides = [1, 1]} : vector<8x512xf32> to vector<8x128xf32>
    %25 = vector.broadcast %23 : vector<8x1xf32> to vector<8x128xf32>
    %26 = arith.mulf %25, %24 : vector<8x128xf32>
    %27 = arith.addf %21, %26 : vector<8x128xf32>
    %c4 = arith.constant 4 : index
    %c0_15 = arith.constant 0 : index
    %c0_16 = arith.constant 0 : index
    %28 = vector.load %arg4[%c4, %c0_15, %c0_16] : memref<32x8x1xf32, #tpu.memory_space<vmem>>, vector<1x8x1xf32>
    %29 = vector.shape_cast %28 : vector<1x8x1xf32> to vector<8x1xf32>
    %30 = vector.extract_strided_slice %4 {offsets = [0, 0], sizes = [8, 128], strides = [1, 1]} : vector<8x512xf32> to vector<8x128xf32>
    %31 = vector.broadcast %29 : vector<8x1xf32> to vector<8x128xf32>
    %32 = arith.mulf %31, %30 : vector<8x128xf32>
    %c5 = arith.constant 5 : index
    %c0_17 = arith.constant 0 : index
    %c0_18 = arith.constant 0 : index
    %33 = vector.load %arg4[%c5, %c0_17, %c0_18] : memref<32x8x1xf32, #tpu.memory_space<vmem>>, vector<1x8x1xf32>
    %34 = vector.shape_cast %33 : vector<1x8x1xf32> to vector<8x1xf32>
    %35 = vector.extract_strided_slice %4 {offsets = [0, 128], sizes = [8, 128], strides = [1, 1]} : vector<8x512xf32> to vector<8x128xf32>
    %36 = vector.broadcast %34 : vector<8x1xf32> to vector<8x128xf32>
    %37 = arith.mulf %36, %35 : vector<8x128xf32>
    %38 = arith.addf %32, %37 : vector<8x128xf32>
    %c6 = arith.constant 6 : index
    %c0_19 = arith.constant 0 : index
    %c0_20 = arith.constant 0 : index
    %39 = vector.load %arg4[%c6, %c0_19, %c0_20] : memref<32x8x1xf32, #tpu.memory_space<vmem>>, vector<1x8x1xf32>
    %40 = vector.shape_cast %39 : vector<1x8x1xf32> to vector<8x1xf32>
    %41 = vector.extract_strided_slice %4 {offsets = [0, 256], sizes = [8, 128], strides = [1, 1]} : vector<8x512xf32> to vector<8x128xf32>
    %42 = vector.broadcast %40 : vector<8x1xf32> to vector<8x128xf32>
    %43 = arith.mulf %42, %41 : vector<8x128xf32>
    %44 = arith.addf %38, %43 : vector<8x128xf32>
    %c7 = arith.constant 7 : index
    %c0_21 = arith.constant 0 : index
    %c0_22 = arith.constant 0 : index
    %45 = vector.load %arg4[%c7, %c0_21, %c0_22] : memref<32x8x1xf32, #tpu.memory_space<vmem>>, vector<1x8x1xf32>
    %46 = vector.shape_cast %45 : vector<1x8x1xf32> to vector<8x1xf32>
    %47 = vector.extract_strided_slice %4 {offsets = [0, 384], sizes = [8, 128], strides = [1, 1]} : vector<8x512xf32> to vector<8x128xf32>
    %48 = vector.broadcast %46 : vector<8x1xf32> to vector<8x128xf32>
    %49 = arith.mulf %48, %47 : vector<8x128xf32>
    %50 = arith.addf %44, %49 : vector<8x128xf32>
    %c8 = arith.constant 8 : index
    %c0_23 = arith.constant 0 : index
    %c0_24 = arith.constant 0 : index
    %51 = vector.load %arg4[%c8, %c0_23, %c0_24] : memref<32x8x1xf32, #tpu.memory_space<vmem>>, vector<1x8x1xf32>
    %52 = vector.shape_cast %51 : vector<1x8x1xf32> to vector<8x1xf32>
    %53 = vector.extract_strided_slice %4 {offsets = [0, 0], sizes = [8, 128], strides = [1, 1]} : vector<8x512xf32> to vector<8x128xf32>
    %54 = vector.broadcast %52 : vector<8x1xf32> to vector<8x128xf32>
    %55 = arith.mulf %54, %53 : vector<8x128xf32>
    %c9 = arith.constant 9 : index
    %c0_25 = arith.constant 0 : index
    %c0_26 = arith.constant 0 : index
    %56 = vector.load %arg4[%c9, %c0_25, %c0_26] : memref<32x8x1xf32, #tpu.memory_space<vmem>>, vector<1x8x1xf32>
    %57 = vector.shape_cast %56 : vector<1x8x1xf32> to vector<8x1xf32>
    %58 = vector.extract_strided_slice %4 {offsets = [0, 128], sizes = [8, 128], strides = [1, 1]} : vector<8x512xf32> to vector<8x128xf32>
    %59 = vector.broadcast %57 : vector<8x1xf32> to vector<8x128xf32>
    %60 = arith.mulf %59, %58 : vector<8x128xf32>
    %61 = arith.addf %55, %60 : vector<8x128xf32>
    %c10 = arith.constant 10 : index
    %c0_27 = arith.constant 0 : index
    %c0_28 = arith.constant 0 : index
    %62 = vector.load %arg4[%c10, %c0_27, %c0_28] : memref<32x8x1xf32, #tpu.memory_space<vmem>>, vector<1x8x1xf32>
    %63 = vector.shape_cast %62 : vector<1x8x1xf32> to vector<8x1xf32>
    %64 = vector.extract_strided_slice %4 {offsets = [0, 256], sizes = [8, 128], strides = [1, 1]} : vector<8x512xf32> to vector<8x128xf32>
    %65 = vector.broadcast %63 : vector<8x1xf32> to vector<8x128xf32>
    %66 = arith.mulf %65, %64 : vector<8x128xf32>
    %67 = arith.addf %61, %66 : vector<8x128xf32>
    %c11 = arith.constant 11 : index
    %c0_29 = arith.constant 0 : index
    %c0_30 = arith.constant 0 : index
    %68 = vector.load %arg4[%c11, %c0_29, %c0_30] : memref<32x8x1xf32, #tpu.memory_space<vmem>>, vector<1x8x1xf32>
    %69 = vector.shape_cast %68 : vector<1x8x1xf32> to vector<8x1xf32>
    %70 = vector.extract_strided_slice %4 {offsets = [0, 384], sizes = [8, 128], strides = [1, 1]} : vector<8x512xf32> to vector<8x128xf32>
    %71 = vector.broadcast %69 : vector<8x1xf32> to vector<8x128xf32>
    %72 = arith.mulf %71, %70 : vector<8x128xf32>
    %73 = arith.addf %67, %72 : vector<8x128xf32>
    %c12 = arith.constant 12 : index
    %c0_31 = arith.constant 0 : index
    %c0_32 = arith.constant 0 : index
    %74 = vector.load %arg4[%c12, %c0_31, %c0_32] : memref<32x8x1xf32, #tpu.memory_space<vmem>>, vector<1x8x1xf32>
    %75 = vector.shape_cast %74 : vector<1x8x1xf32> to vector<8x1xf32>
    %76 = vector.extract_strided_slice %4 {offsets = [0, 0], sizes = [8, 128], strides = [1, 1]} : vector<8x512xf32> to vector<8x128xf32>
    %77 = vector.broadcast %75 : vector<8x1xf32> to vector<8x128xf32>
    %78 = arith.mulf %77, %76 : vector<8x128xf32>
    %c13 = arith.constant 13 : index
    %c0_33 = arith.constant 0 : index
    %c0_34 = arith.constant 0 : index
    %79 = vector.load %arg4[%c13, %c0_33, %c0_34] : memref<32x8x1xf32, #tpu.memory_space<vmem>>, vector<1x8x1xf32>
    %80 = vector.shape_cast %79 : vector<1x8x1xf32> to vector<8x1xf32>
    %81 = vector.extract_strided_slice %4 {offsets = [0, 128], sizes = [8, 128], strides = [1, 1]} : vector<8x512xf32> to vector<8x128xf32>
    %82 = vector.broadcast %80 : vector<8x1xf32> to vector<8x128xf32>
    %83 = arith.mulf %82, %81 : vector<8x128xf32>
    %84 = arith.addf %78, %83 : vector<8x128xf32>
    %c14 = arith.constant 14 : index
    %c0_35 = arith.constant 0 : index
    %c0_36 = arith.constant 0 : index
    %85 = vector.load %arg4[%c14, %c0_35, %c0_36] : memref<32x8x1xf32, #tpu.memory_space<vmem>>, vector<1x8x1xf32>
    %86 = vector.shape_cast %85 : vector<1x8x1xf32> to vector<8x1xf32>
    %87 = vector.extract_strided_slice %4 {offsets = [0, 256], sizes = [8, 128], strides = [1, 1]} : vector<8x512xf32> to vector<8x128xf32>
    %88 = vector.broadcast %86 : vector<8x1xf32> to vector<8x128xf32>
    %89 = arith.mulf %88, %87 : vector<8x128xf32>
    %90 = arith.addf %84, %89 : vector<8x128xf32>
    %c15 = arith.constant 15 : index
    %c0_37 = arith.constant 0 : index
    %c0_38 = arith.constant 0 : index
    %91 = vector.load %arg4[%c15, %c0_37, %c0_38] : memref<32x8x1xf32, #tpu.memory_space<vmem>>, vector<1x8x1xf32>
    %92 = vector.shape_cast %91 : vector<1x8x1xf32> to vector<8x1xf32>
    %93 = vector.extract_strided_slice %4 {offsets = [0, 384], sizes = [8, 128], strides = [1, 1]} : vector<8x512xf32> to vector<8x128xf32>
    %94 = vector.broadcast %92 : vector<8x1xf32> to vector<8x128xf32>
    %95 = arith.mulf %94, %93 : vector<8x128xf32>
    %96 = arith.addf %90, %95 : vector<8x128xf32>
    %c16 = arith.constant 16 : index
    %c0_39 = arith.constant 0 : index
    %c0_40 = arith.constant 0 : index
    %97 = vector.load %arg4[%c16, %c0_39, %c0_40] : memref<32x8x1xf32, #tpu.memory_space<vmem>>, vector<1x8x1xf32>
    %98 = vector.shape_cast %97 : vector<1x8x1xf32> to vector<8x1xf32>
    %99 = vector.extract_strided_slice %4 {offsets = [0, 0], sizes = [8, 128], strides = [1, 1]} : vector<8x512xf32> to vector<8x128xf32>
    %100 = vector.broadcast %98 : vector<8x1xf32> to vector<8x128xf32>
    %101 = arith.mulf %100, %99 : vector<8x128xf32>
    %c17 = arith.constant 17 : index
    %c0_41 = arith.constant 0 : index
    %c0_42 = arith.constant 0 : index
    %102 = vector.load %arg4[%c17, %c0_41, %c0_42] : memref<32x8x1xf32, #tpu.memory_space<vmem>>, vector<1x8x1xf32>
    %103 = vector.shape_cast %102 : vector<1x8x1xf32> to vector<8x1xf32>
    %104 = vector.extract_strided_slice %4 {offsets = [0, 128], sizes = [8, 128], strides = [1, 1]} : vector<8x512xf32> to vector<8x128xf32>
    %105 = vector.broadcast %103 : vector<8x1xf32> to vector<8x128xf32>
    %106 = arith.mulf %105, %104 : vector<8x128xf32>
    %107 = arith.addf %101, %106 : vector<8x128xf32>
    %c18 = arith.constant 18 : index
    %c0_43 = arith.constant 0 : index
    %c0_44 = arith.constant 0 : index
    %108 = vector.load %arg4[%c18, %c0_43, %c0_44] : memref<32x8x1xf32, #tpu.memory_space<vmem>>, vector<1x8x1xf32>
    %109 = vector.shape_cast %108 : vector<1x8x1xf32> to vector<8x1xf32>
    %110 = vector.extract_strided_slice %4 {offsets = [0, 256], sizes = [8, 128], strides = [1, 1]} : vector<8x512xf32> to vector<8x128xf32>
    %111 = vector.broadcast %109 : vector<8x1xf32> to vector<8x128xf32>
    %112 = arith.mulf %111, %110 : vector<8x128xf32>
    %113 = arith.addf %107, %112 : vector<8x128xf32>
    %c19 = arith.constant 19 : index
    %c0_45 = arith.constant 0 : index
    %c0_46 = arith.constant 0 : index
    %114 = vector.load %arg4[%c19, %c0_45, %c0_46] : memref<32x8x1xf32, #tpu.memory_space<vmem>>, vector<1x8x1xf32>
    %115 = vector.shape_cast %114 : vector<1x8x1xf32> to vector<8x1xf32>
    %116 = vector.extract_strided_slice %4 {offsets = [0, 384], sizes = [8, 128], strides = [1, 1]} : vector<8x512xf32> to vector<8x128xf32>
    %117 = vector.broadcast %115 : vector<8x1xf32> to vector<8x128xf32>
    %118 = arith.mulf %117, %116 : vector<8x128xf32>
    %119 = arith.addf %113, %118 : vector<8x128xf32>
    %c20 = arith.constant 20 : index
    %c0_47 = arith.constant 0 : index
    %c0_48 = arith.constant 0 : index
    %120 = vector.load %arg4[%c20, %c0_47, %c0_48] : memref<32x8x1xf32, #tpu.memory_space<vmem>>, vector<1x8x1xf32>
    %121 = vector.shape_cast %120 : vector<1x8x1xf32> to vector<8x1xf32>
    %122 = vector.extract_strided_slice %4 {offsets = [0, 0], sizes = [8, 128], strides = [1, 1]} : vector<8x512xf32> to vector<8x128xf32>
    %123 = vector.broadcast %121 : vector<8x1xf32> to vector<8x128xf32>
    %124 = arith.mulf %123, %122 : vector<8x128xf32>
    %c21 = arith.constant 21 : index
    %c0_49 = arith.constant 0 : index
    %c0_50 = arith.constant 0 : index
    %125 = vector.load %arg4[%c21, %c0_49, %c0_50] : memref<32x8x1xf32, #tpu.memory_space<vmem>>, vector<1x8x1xf32>
    %126 = vector.shape_cast %125 : vector<1x8x1xf32> to vector<8x1xf32>
    %127 = vector.extract_strided_slice %4 {offsets = [0, 128], sizes = [8, 128], strides = [1, 1]} : vector<8x512xf32> to vector<8x128xf32>
    %128 = vector.broadcast %126 : vector<8x1xf32> to vector<8x128xf32>
    %129 = arith.mulf %128, %127 : vector<8x128xf32>
    %130 = arith.addf %124, %129 : vector<8x128xf32>
    %c22 = arith.constant 22 : index
    %c0_51 = arith.constant 0 : index
    %c0_52 = arith.constant 0 : index
    %131 = vector.load %arg4[%c22, %c0_51, %c0_52] : memref<32x8x1xf32, #tpu.memory_space<vmem>>, vector<1x8x1xf32>
    %132 = vector.shape_cast %131 : vector<1x8x1xf32> to vector<8x1xf32>
    %133 = vector.extract_strided_slice %4 {offsets = [0, 256], sizes = [8, 128], strides = [1, 1]} : vector<8x512xf32> to vector<8x128xf32>
    %134 = vector.broadcast %132 : vector<8x1xf32> to vector<8x128xf32>
    %135 = arith.mulf %134, %133 : vector<8x128xf32>
    %136 = arith.addf %130, %135 : vector<8x128xf32>
    %c23 = arith.constant 23 : index
    %c0_53 = arith.constant 0 : index
    %c0_54 = arith.constant 0 : index
    %137 = vector.load %arg4[%c23, %c0_53, %c0_54] : memref<32x8x1xf32, #tpu.memory_space<vmem>>, vector<1x8x1xf32>
    %138 = vector.shape_cast %137 : vector<1x8x1xf32> to vector<8x1xf32>
    %139 = vector.extract_strided_slice %4 {offsets = [0, 384], sizes = [8, 128], strides = [1, 1]} : vector<8x512xf32> to vector<8x128xf32>
    %140 = vector.broadcast %138 : vector<8x1xf32> to vector<8x128xf32>
    %141 = arith.mulf %140, %139 : vector<8x128xf32>
    %142 = arith.addf %136, %141 : vector<8x128xf32>
    %c24 = arith.constant 24 : index
    %c0_55 = arith.constant 0 : index
    %c0_56 = arith.constant 0 : index
    %143 = vector.load %arg4[%c24, %c0_55, %c0_56] : memref<32x8x1xf32, #tpu.memory_space<vmem>>, vector<1x8x1xf32>
    %144 = vector.shape_cast %143 : vector<1x8x1xf32> to vector<8x1xf32>
    %145 = vector.extract_strided_slice %4 {offsets = [0, 0], sizes = [8, 128], strides = [1, 1]} : vector<8x512xf32> to vector<8x128xf32>
    %146 = vector.broadcast %144 : vector<8x1xf32> to vector<8x128xf32>
    %147 = arith.mulf %146, %145 : vector<8x128xf32>
    %c25 = arith.constant 25 : index
    %c0_57 = arith.constant 0 : index
    %c0_58 = arith.constant 0 : index
    %148 = vector.load %arg4[%c25, %c0_57, %c0_58] : memref<32x8x1xf32, #tpu.memory_space<vmem>>, vector<1x8x1xf32>
    %149 = vector.shape_cast %148 : vector<1x8x1xf32> to vector<8x1xf32>
    %150 = vector.extract_strided_slice %4 {offsets = [0, 128], sizes = [8, 128], strides = [1, 1]} : vector<8x512xf32> to vector<8x128xf32>
    %151 = vector.broadcast %149 : vector<8x1xf32> to vector<8x128xf32>
    %152 = arith.mulf %151, %150 : vector<8x128xf32>
    %153 = arith.addf %147, %152 : vector<8x128xf32>
    %c26 = arith.constant 26 : index
    %c0_59 = arith.constant 0 : index
    %c0_60 = arith.constant 0 : index
    %154 = vector.load %arg4[%c26, %c0_59, %c0_60] : memref<32x8x1xf32, #tpu.memory_space<vmem>>, vector<1x8x1xf32>
    %155 = vector.shape_cast %154 : vector<1x8x1xf32> to vector<8x1xf32>
    %156 = vector.extract_strided_slice %4 {offsets = [0, 256], sizes = [8, 128], strides = [1, 1]} : vector<8x512xf32> to vector<8x128xf32>
    %157 = vector.broadcast %155 : vector<8x1xf32> to vector<8x128xf32>
    %158 = arith.mulf %157, %156 : vector<8x128xf32>
    %159 = arith.addf %153, %158 : vector<8x128xf32>
    %c27 = arith.constant 27 : index
    %c0_61 = arith.constant 0 : index
    %c0_62 = arith.constant 0 : index
    %160 = vector.load %arg4[%c27, %c0_61, %c0_62] : memref<32x8x1xf32, #tpu.memory_space<vmem>>, vector<1x8x1xf32>
    %161 = vector.shape_cast %160 : vector<1x8x1xf32> to vector<8x1xf32>
    %162 = vector.extract_strided_slice %4 {offsets = [0, 384], sizes = [8, 128], strides = [1, 1]} : vector<8x512xf32> to vector<8x128xf32>
    %163 = vector.broadcast %161 : vector<8x1xf32> to vector<8x128xf32>
    %164 = arith.mulf %163, %162 : vector<8x128xf32>
    %165 = arith.addf %159, %164 : vector<8x128xf32>
    %c28 = arith.constant 28 : index
    %c0_63 = arith.constant 0 : index
    %c0_64 = arith.constant 0 : index
    %166 = vector.load %arg4[%c28, %c0_63, %c0_64] : memref<32x8x1xf32, #tpu.memory_space<vmem>>, vector<1x8x1xf32>
    %167 = vector.shape_cast %166 : vector<1x8x1xf32> to vector<8x1xf32>
    %168 = vector.extract_strided_slice %4 {offsets = [0, 0], sizes = [8, 128], strides = [1, 1]} : vector<8x512xf32> to vector<8x128xf32>
    %169 = vector.broadcast %167 : vector<8x1xf32> to vector<8x128xf32>
    %170 = arith.mulf %169, %168 : vector<8x128xf32>
    %c29 = arith.constant 29 : index
    %c0_65 = arith.constant 0 : index
    %c0_66 = arith.constant 0 : index
    %171 = vector.load %arg4[%c29, %c0_65, %c0_66] : memref<32x8x1xf32, #tpu.memory_space<vmem>>, vector<1x8x1xf32>
    %172 = vector.shape_cast %171 : vector<1x8x1xf32> to vector<8x1xf32>
    %173 = vector.extract_strided_slice %4 {offsets = [0, 128], sizes = [8, 128], strides = [1, 1]} : vector<8x512xf32> to vector<8x128xf32>
    %174 = vector.broadcast %172 : vector<8x1xf32> to vector<8x128xf32>
    %175 = arith.mulf %174, %173 : vector<8x128xf32>
    %176 = arith.addf %170, %175 : vector<8x128xf32>
    %c30 = arith.constant 30 : index
    %c0_67 = arith.constant 0 : index
    %c0_68 = arith.constant 0 : index
    %177 = vector.load %arg4[%c30, %c0_67, %c0_68] : memref<32x8x1xf32, #tpu.memory_space<vmem>>, vector<1x8x1xf32>
    %178 = vector.shape_cast %177 : vector<1x8x1xf32> to vector<8x1xf32>
    %179 = vector.extract_strided_slice %4 {offsets = [0, 256], sizes = [8, 128], strides = [1, 1]} : vector<8x512xf32> to vector<8x128xf32>
    %180 = vector.broadcast %178 : vector<8x1xf32> to vector<8x128xf32>
    %181 = arith.mulf %180, %179 : vector<8x128xf32>
    %182 = arith.addf %176, %181 : vector<8x128xf32>
    %c31 = arith.constant 31 : index
    %c0_69 = arith.constant 0 : index
    %c0_70 = arith.constant 0 : index
    %183 = vector.load %arg4[%c31, %c0_69, %c0_70] : memref<32x8x1xf32, #tpu.memory_space<vmem>>, vector<1x8x1xf32>
    %184 = vector.shape_cast %183 : vector<1x8x1xf32> to vector<8x1xf32>
    %185 = vector.extract_strided_slice %4 {offsets = [0, 384], sizes = [8, 128], strides = [1, 1]} : vector<8x512xf32> to vector<8x128xf32>
    %186 = vector.broadcast %184 : vector<8x1xf32> to vector<8x128xf32>
    %187 = arith.mulf %186, %185 : vector<8x128xf32>
    %188 = arith.addf %182, %187 : vector<8x128xf32>
    %189 = tpu.concatenate %27, %50, %73, %96, %119, %142, %165, %188 in 1 : vector<8x128xf32>, vector<8x128xf32>, vector<8x128xf32>, vector<8x128xf32>, vector<8x128xf32>, vector<8x128xf32>, vector<8x128xf32>, vector<8x128xf32> -> vector<8x1024xf32>
    %cst_71 = arith.constant dense<0.000000e+00> : vector<16x1024xf32>
    %190 = tpu.matmul %1, %189, %cst_71 {dimension_numbers = #tpu.dot_dimension_numbers<[1], [0], [0], [1], [0, 0, 1, 1], [], []>} : vector<16x8xf32>, vector<8x1024xf32>, vector<16x1024xf32> -> vector<16x1024xf32>
    %cst_72 = arith.constant 0.000000e+00 : f32
    %191 = vector.broadcast %cst_72 : f32 to vector<16x1024xf32>
    %192 = arith.maximumf %190, %191 : vector<16x1024xf32>
    %cst_73 = arith.constant dense<0.000000e+00> : vector<8x1024xf32>
    %193 = tpu.matmul %0, %192, %cst_73 {dimension_numbers = #tpu.dot_dimension_numbers<[1], [0], [0], [1], [0, 0, 1, 1], [], []>} : vector<8x16xf32>, vector<16x1024xf32>, vector<8x1024xf32> -> vector<8x1024xf32>
    %c0_74 = arith.constant 0 : index
    %c0_75 = arith.constant 0 : index
    %c0_76 = arith.constant 0 : index
    %194 = vector.load %arg5[%c0_74, %c0_75, %c0_76] : memref<64x8x1xf32, #tpu.memory_space<vmem>>, vector<1x8x1xf32>
    %195 = vector.shape_cast %194 : vector<1x8x1xf32> to vector<8x1xf32>
    %196 = vector.extract_strided_slice %193 {offsets = [0, 0], sizes = [8, 128], strides = [1, 1]} : vector<8x1024xf32> to vector<8x128xf32>
    %197 = vector.broadcast %195 : vector<8x1xf32> to vector<8x128xf32>
    %198 = arith.mulf %197, %196 : vector<8x128xf32>
    %c1_77 = arith.constant 1 : index
    %c0_78 = arith.constant 0 : index
    %c0_79 = arith.constant 0 : index
    %199 = vector.load %arg5[%c1_77, %c0_78, %c0_79] : memref<64x8x1xf32, #tpu.memory_space<vmem>>, vector<1x8x1xf32>
    %200 = vector.shape_cast %199 : vector<1x8x1xf32> to vector<8x1xf32>
    %201 = vector.extract_strided_slice %193 {offsets = [0, 128], sizes = [8, 128], strides = [1, 1]} : vector<8x1024xf32> to vector<8x128xf32>
    %202 = vector.broadcast %200 : vector<8x1xf32> to vector<8x128xf32>
    %203 = arith.mulf %202, %201 : vector<8x128xf32>
    %204 = arith.addf %198, %203 : vector<8x128xf32>
    %c2_80 = arith.constant 2 : index
    %c0_81 = arith.constant 0 : index
    %c0_82 = arith.constant 0 : index
    %205 = vector.load %arg5[%c2_80, %c0_81, %c0_82] : memref<64x8x1xf32, #tpu.memory_space<vmem>>, vector<1x8x1xf32>
    %206 = vector.shape_cast %205 : vector<1x8x1xf32> to vector<8x1xf32>
    %207 = vector.extract_strided_slice %193 {offsets = [0, 256], sizes = [8, 128], strides = [1, 1]} : vector<8x1024xf32> to vector<8x128xf32>
    %208 = vector.broadcast %206 : vector<8x1xf32> to vector<8x128xf32>
    %209 = arith.mulf %208, %207 : vector<8x128xf32>
    %210 = arith.addf %204, %209 : vector<8x128xf32>
    %c3_83 = arith.constant 3 : index
    %c0_84 = arith.constant 0 : index
    %c0_85 = arith.constant 0 : index
    %211 = vector.load %arg5[%c3_83, %c0_84, %c0_85] : memref<64x8x1xf32, #tpu.memory_space<vmem>>, vector<1x8x1xf32>
    %212 = vector.shape_cast %211 : vector<1x8x1xf32> to vector<8x1xf32>
    %213 = vector.extract_strided_slice %193 {offsets = [0, 384], sizes = [8, 128], strides = [1, 1]} : vector<8x1024xf32> to vector<8x128xf32>
    %214 = vector.broadcast %212 : vector<8x1xf32> to vector<8x128xf32>
    %215 = arith.mulf %214, %213 : vector<8x128xf32>
    %216 = arith.addf %210, %215 : vector<8x128xf32>
    %c4_86 = arith.constant 4 : index
    %c0_87 = arith.constant 0 : index
    %c0_88 = arith.constant 0 : index
    %217 = vector.load %arg5[%c4_86, %c0_87, %c0_88] : memref<64x8x1xf32, #tpu.memory_space<vmem>>, vector<1x8x1xf32>
    %218 = vector.shape_cast %217 : vector<1x8x1xf32> to vector<8x1xf32>
    %219 = vector.extract_strided_slice %193 {offsets = [0, 512], sizes = [8, 128], strides = [1, 1]} : vector<8x1024xf32> to vector<8x128xf32>
    %220 = vector.broadcast %218 : vector<8x1xf32> to vector<8x128xf32>
    %221 = arith.mulf %220, %219 : vector<8x128xf32>
    %222 = arith.addf %216, %221 : vector<8x128xf32>
    %c5_89 = arith.constant 5 : index
    %c0_90 = arith.constant 0 : index
    %c0_91 = arith.constant 0 : index
    %223 = vector.load %arg5[%c5_89, %c0_90, %c0_91] : memref<64x8x1xf32, #tpu.memory_space<vmem>>, vector<1x8x1xf32>
    %224 = vector.shape_cast %223 : vector<1x8x1xf32> to vector<8x1xf32>
    %225 = vector.extract_strided_slice %193 {offsets = [0, 640], sizes = [8, 128], strides = [1, 1]} : vector<8x1024xf32> to vector<8x128xf32>
    %226 = vector.broadcast %224 : vector<8x1xf32> to vector<8x128xf32>
    %227 = arith.mulf %226, %225 : vector<8x128xf32>
    %228 = arith.addf %222, %227 : vector<8x128xf32>
    %c6_92 = arith.constant 6 : index
    %c0_93 = arith.constant 0 : index
    %c0_94 = arith.constant 0 : index
    %229 = vector.load %arg5[%c6_92, %c0_93, %c0_94] : memref<64x8x1xf32, #tpu.memory_space<vmem>>, vector<1x8x1xf32>
    %230 = vector.shape_cast %229 : vector<1x8x1xf32> to vector<8x1xf32>
    %231 = vector.extract_strided_slice %193 {offsets = [0, 768], sizes = [8, 128], strides = [1, 1]} : vector<8x1024xf32> to vector<8x128xf32>
    %232 = vector.broadcast %230 : vector<8x1xf32> to vector<8x128xf32>
    %233 = arith.mulf %232, %231 : vector<8x128xf32>
    %234 = arith.addf %228, %233 : vector<8x128xf32>
    %c7_95 = arith.constant 7 : index
    %c0_96 = arith.constant 0 : index
    %c0_97 = arith.constant 0 : index
    %235 = vector.load %arg5[%c7_95, %c0_96, %c0_97] : memref<64x8x1xf32, #tpu.memory_space<vmem>>, vector<1x8x1xf32>
    %236 = vector.shape_cast %235 : vector<1x8x1xf32> to vector<8x1xf32>
    %237 = vector.extract_strided_slice %193 {offsets = [0, 896], sizes = [8, 128], strides = [1, 1]} : vector<8x1024xf32> to vector<8x128xf32>
    %238 = vector.broadcast %236 : vector<8x1xf32> to vector<8x128xf32>
    %239 = arith.mulf %238, %237 : vector<8x128xf32>
    %240 = arith.addf %234, %239 : vector<8x128xf32>
    %c8_98 = arith.constant 8 : index
    %c0_99 = arith.constant 0 : index
    %c0_100 = arith.constant 0 : index
    %241 = vector.load %arg5[%c8_98, %c0_99, %c0_100] : memref<64x8x1xf32, #tpu.memory_space<vmem>>, vector<1x8x1xf32>
    %242 = vector.shape_cast %241 : vector<1x8x1xf32> to vector<8x1xf32>
    %243 = vector.extract_strided_slice %193 {offsets = [0, 0], sizes = [8, 128], strides = [1, 1]} : vector<8x1024xf32> to vector<8x128xf32>
    %244 = vector.broadcast %242 : vector<8x1xf32> to vector<8x128xf32>
    %245 = arith.mulf %244, %243 : vector<8x128xf32>
    %c9_101 = arith.constant 9 : index
    %c0_102 = arith.constant 0 : index
    %c0_103 = arith.constant 0 : index
    %246 = vector.load %arg5[%c9_101, %c0_102, %c0_103] : memref<64x8x1xf32, #tpu.memory_space<vmem>>, vector<1x8x1xf32>
    %247 = vector.shape_cast %246 : vector<1x8x1xf32> to vector<8x1xf32>
    %248 = vector.extract_strided_slice %193 {offsets = [0, 128], sizes = [8, 128], strides = [1, 1]} : vector<8x1024xf32> to vector<8x128xf32>
    %249 = vector.broadcast %247 : vector<8x1xf32> to vector<8x128xf32>
    %250 = arith.mulf %249, %248 : vector<8x128xf32>
    %251 = arith.addf %245, %250 : vector<8x128xf32>
    %c10_104 = arith.constant 10 : index
    %c0_105 = arith.constant 0 : index
    %c0_106 = arith.constant 0 : index
    %252 = vector.load %arg5[%c10_104, %c0_105, %c0_106] : memref<64x8x1xf32, #tpu.memory_space<vmem>>, vector<1x8x1xf32>
    %253 = vector.shape_cast %252 : vector<1x8x1xf32> to vector<8x1xf32>
    %254 = vector.extract_strided_slice %193 {offsets = [0, 256], sizes = [8, 128], strides = [1, 1]} : vector<8x1024xf32> to vector<8x128xf32>
    %255 = vector.broadcast %253 : vector<8x1xf32> to vector<8x128xf32>
    %256 = arith.mulf %255, %254 : vector<8x128xf32>
    %257 = arith.addf %251, %256 : vector<8x128xf32>
    %c11_107 = arith.constant 11 : index
    %c0_108 = arith.constant 0 : index
    %c0_109 = arith.constant 0 : index
    %258 = vector.load %arg5[%c11_107, %c0_108, %c0_109] : memref<64x8x1xf32, #tpu.memory_space<vmem>>, vector<1x8x1xf32>
    %259 = vector.shape_cast %258 : vector<1x8x1xf32> to vector<8x1xf32>
    %260 = vector.extract_strided_slice %193 {offsets = [0, 384], sizes = [8, 128], strides = [1, 1]} : vector<8x1024xf32> to vector<8x128xf32>
    %261 = vector.broadcast %259 : vector<8x1xf32> to vector<8x128xf32>
    %262 = arith.mulf %261, %260 : vector<8x128xf32>
    %263 = arith.addf %257, %262 : vector<8x128xf32>
    %c12_110 = arith.constant 12 : index
    %c0_111 = arith.constant 0 : index
    %c0_112 = arith.constant 0 : index
    %264 = vector.load %arg5[%c12_110, %c0_111, %c0_112] : memref<64x8x1xf32, #tpu.memory_space<vmem>>, vector<1x8x1xf32>
    %265 = vector.shape_cast %264 : vector<1x8x1xf32> to vector<8x1xf32>
    %266 = vector.extract_strided_slice %193 {offsets = [0, 512], sizes = [8, 128], strides = [1, 1]} : vector<8x1024xf32> to vector<8x128xf32>
    %267 = vector.broadcast %265 : vector<8x1xf32> to vector<8x128xf32>
    %268 = arith.mulf %267, %266 : vector<8x128xf32>
    %269 = arith.addf %263, %268 : vector<8x128xf32>
    %c13_113 = arith.constant 13 : index
    %c0_114 = arith.constant 0 : index
    %c0_115 = arith.constant 0 : index
    %270 = vector.load %arg5[%c13_113, %c0_114, %c0_115] : memref<64x8x1xf32, #tpu.memory_space<vmem>>, vector<1x8x1xf32>
    %271 = vector.shape_cast %270 : vector<1x8x1xf32> to vector<8x1xf32>
    %272 = vector.extract_strided_slice %193 {offsets = [0, 640], sizes = [8, 128], strides = [1, 1]} : vector<8x1024xf32> to vector<8x128xf32>
    %273 = vector.broadcast %271 : vector<8x1xf32> to vector<8x128xf32>
    %274 = arith.mulf %273, %272 : vector<8x128xf32>
    %275 = arith.addf %269, %274 : vector<8x128xf32>
    %c14_116 = arith.constant 14 : index
    %c0_117 = arith.constant 0 : index
    %c0_118 = arith.constant 0 : index
    %276 = vector.load %arg5[%c14_116, %c0_117, %c0_118] : memref<64x8x1xf32, #tpu.memory_space<vmem>>, vector<1x8x1xf32>
    %277 = vector.shape_cast %276 : vector<1x8x1xf32> to vector<8x1xf32>
    %278 = vector.extract_strided_slice %193 {offsets = [0, 768], sizes = [8, 128], strides = [1, 1]} : vector<8x1024xf32> to vector<8x128xf32>
    %279 = vector.broadcast %277 : vector<8x1xf32> to vector<8x128xf32>
    %280 = arith.mulf %279, %278 : vector<8x128xf32>
    %281 = arith.addf %275, %280 : vector<8x128xf32>
    %c15_119 = arith.constant 15 : index
    %c0_120 = arith.constant 0 : index
    %c0_121 = arith.constant 0 : index
    %282 = vector.load %arg5[%c15_119, %c0_120, %c0_121] : memref<64x8x1xf32, #tpu.memory_space<vmem>>, vector<1x8x1xf32>
    %283 = vector.shape_cast %282 : vector<1x8x1xf32> to vector<8x1xf32>
    %284 = vector.extract_strided_slice %193 {offsets = [0, 896], sizes = [8, 128], strides = [1, 1]} : vector<8x1024xf32> to vector<8x128xf32>
    %285 = vector.broadcast %283 : vector<8x1xf32> to vector<8x128xf32>
    %286 = arith.mulf %285, %284 : vector<8x128xf32>
    %287 = arith.addf %281, %286 : vector<8x128xf32>
    %c16_122 = arith.constant 16 : index
    %c0_123 = arith.constant 0 : index
    %c0_124 = arith.constant 0 : index
    %288 = vector.load %arg5[%c16_122, %c0_123, %c0_124] : memref<64x8x1xf32, #tpu.memory_space<vmem>>, vector<1x8x1xf32>
    %289 = vector.shape_cast %288 : vector<1x8x1xf32> to vector<8x1xf32>
    %290 = vector.extract_strided_slice %193 {offsets = [0, 0], sizes = [8, 128], strides = [1, 1]} : vector<8x1024xf32> to vector<8x128xf32>
    %291 = vector.broadcast %289 : vector<8x1xf32> to vector<8x128xf32>
    %292 = arith.mulf %291, %290 : vector<8x128xf32>
    %c17_125 = arith.constant 17 : index
    %c0_126 = arith.constant 0 : index
    %c0_127 = arith.constant 0 : index
    %293 = vector.load %arg5[%c17_125, %c0_126, %c0_127] : memref<64x8x1xf32, #tpu.memory_space<vmem>>, vector<1x8x1xf32>
    %294 = vector.shape_cast %293 : vector<1x8x1xf32> to vector<8x1xf32>
    %295 = vector.extract_strided_slice %193 {offsets = [0, 128], sizes = [8, 128], strides = [1, 1]} : vector<8x1024xf32> to vector<8x128xf32>
    %296 = vector.broadcast %294 : vector<8x1xf32> to vector<8x128xf32>
    %297 = arith.mulf %296, %295 : vector<8x128xf32>
    %298 = arith.addf %292, %297 : vector<8x128xf32>
    %c18_128 = arith.constant 18 : index
    %c0_129 = arith.constant 0 : index
    %c0_130 = arith.constant 0 : index
    %299 = vector.load %arg5[%c18_128, %c0_129, %c0_130] : memref<64x8x1xf32, #tpu.memory_space<vmem>>, vector<1x8x1xf32>
    %300 = vector.shape_cast %299 : vector<1x8x1xf32> to vector<8x1xf32>
    %301 = vector.extract_strided_slice %193 {offsets = [0, 256], sizes = [8, 128], strides = [1, 1]} : vector<8x1024xf32> to vector<8x128xf32>
    %302 = vector.broadcast %300 : vector<8x1xf32> to vector<8x128xf32>
    %303 = arith.mulf %302, %301 : vector<8x128xf32>
    %304 = arith.addf %298, %303 : vector<8x128xf32>
    %c19_131 = arith.constant 19 : index
    %c0_132 = arith.constant 0 : index
    %c0_133 = arith.constant 0 : index
    %305 = vector.load %arg5[%c19_131, %c0_132, %c0_133] : memref<64x8x1xf32, #tpu.memory_space<vmem>>, vector<1x8x1xf32>
    %306 = vector.shape_cast %305 : vector<1x8x1xf32> to vector<8x1xf32>
    %307 = vector.extract_strided_slice %193 {offsets = [0, 384], sizes = [8, 128], strides = [1, 1]} : vector<8x1024xf32> to vector<8x128xf32>
    %308 = vector.broadcast %306 : vector<8x1xf32> to vector<8x128xf32>
    %309 = arith.mulf %308, %307 : vector<8x128xf32>
    %310 = arith.addf %304, %309 : vector<8x128xf32>
    %c20_134 = arith.constant 20 : index
    %c0_135 = arith.constant 0 : index
    %c0_136 = arith.constant 0 : index
    %311 = vector.load %arg5[%c20_134, %c0_135, %c0_136] : memref<64x8x1xf32, #tpu.memory_space<vmem>>, vector<1x8x1xf32>
    %312 = vector.shape_cast %311 : vector<1x8x1xf32> to vector<8x1xf32>
    %313 = vector.extract_strided_slice %193 {offsets = [0, 512], sizes = [8, 128], strides = [1, 1]} : vector<8x1024xf32> to vector<8x128xf32>
    %314 = vector.broadcast %312 : vector<8x1xf32> to vector<8x128xf32>
    %315 = arith.mulf %314, %313 : vector<8x128xf32>
    %316 = arith.addf %310, %315 : vector<8x128xf32>
    %c21_137 = arith.constant 21 : index
    %c0_138 = arith.constant 0 : index
    %c0_139 = arith.constant 0 : index
    %317 = vector.load %arg5[%c21_137, %c0_138, %c0_139] : memref<64x8x1xf32, #tpu.memory_space<vmem>>, vector<1x8x1xf32>
    %318 = vector.shape_cast %317 : vector<1x8x1xf32> to vector<8x1xf32>
    %319 = vector.extract_strided_slice %193 {offsets = [0, 640], sizes = [8, 128], strides = [1, 1]} : vector<8x1024xf32> to vector<8x128xf32>
    %320 = vector.broadcast %318 : vector<8x1xf32> to vector<8x128xf32>
    %321 = arith.mulf %320, %319 : vector<8x128xf32>
    %322 = arith.addf %316, %321 : vector<8x128xf32>
    %c22_140 = arith.constant 22 : index
    %c0_141 = arith.constant 0 : index
    %c0_142 = arith.constant 0 : index
    %323 = vector.load %arg5[%c22_140, %c0_141, %c0_142] : memref<64x8x1xf32, #tpu.memory_space<vmem>>, vector<1x8x1xf32>
    %324 = vector.shape_cast %323 : vector<1x8x1xf32> to vector<8x1xf32>
    %325 = vector.extract_strided_slice %193 {offsets = [0, 768], sizes = [8, 128], strides = [1, 1]} : vector<8x1024xf32> to vector<8x128xf32>
    %326 = vector.broadcast %324 : vector<8x1xf32> to vector<8x128xf32>
    %327 = arith.mulf %326, %325 : vector<8x128xf32>
    %328 = arith.addf %322, %327 : vector<8x128xf32>
    %c23_143 = arith.constant 23 : index
    %c0_144 = arith.constant 0 : index
    %c0_145 = arith.constant 0 : index
    %329 = vector.load %arg5[%c23_143, %c0_144, %c0_145] : memref<64x8x1xf32, #tpu.memory_space<vmem>>, vector<1x8x1xf32>
    %330 = vector.shape_cast %329 : vector<1x8x1xf32> to vector<8x1xf32>
    %331 = vector.extract_strided_slice %193 {offsets = [0, 896], sizes = [8, 128], strides = [1, 1]} : vector<8x1024xf32> to vector<8x128xf32>
    %332 = vector.broadcast %330 : vector<8x1xf32> to vector<8x128xf32>
    %333 = arith.mulf %332, %331 : vector<8x128xf32>
    %334 = arith.addf %328, %333 : vector<8x128xf32>
    %c24_146 = arith.constant 24 : index
    %c0_147 = arith.constant 0 : index
    %c0_148 = arith.constant 0 : index
    %335 = vector.load %arg5[%c24_146, %c0_147, %c0_148] : memref<64x8x1xf32, #tpu.memory_space<vmem>>, vector<1x8x1xf32>
    %336 = vector.shape_cast %335 : vector<1x8x1xf32> to vector<8x1xf32>
    %337 = vector.extract_strided_slice %193 {offsets = [0, 0], sizes = [8, 128], strides = [1, 1]} : vector<8x1024xf32> to vector<8x128xf32>
    %338 = vector.broadcast %336 : vector<8x1xf32> to vector<8x128xf32>
    %339 = arith.mulf %338, %337 : vector<8x128xf32>
    %c25_149 = arith.constant 25 : index
    %c0_150 = arith.constant 0 : index
    %c0_151 = arith.constant 0 : index
    %340 = vector.load %arg5[%c25_149, %c0_150, %c0_151] : memref<64x8x1xf32, #tpu.memory_space<vmem>>, vector<1x8x1xf32>
    %341 = vector.shape_cast %340 : vector<1x8x1xf32> to vector<8x1xf32>
    %342 = vector.extract_strided_slice %193 {offsets = [0, 128], sizes = [8, 128], strides = [1, 1]} : vector<8x1024xf32> to vector<8x128xf32>
    %343 = vector.broadcast %341 : vector<8x1xf32> to vector<8x128xf32>
    %344 = arith.mulf %343, %342 : vector<8x128xf32>
    %345 = arith.addf %339, %344 : vector<8x128xf32>
    %c26_152 = arith.constant 26 : index
    %c0_153 = arith.constant 0 : index
    %c0_154 = arith.constant 0 : index
    %346 = vector.load %arg5[%c26_152, %c0_153, %c0_154] : memref<64x8x1xf32, #tpu.memory_space<vmem>>, vector<1x8x1xf32>
    %347 = vector.shape_cast %346 : vector<1x8x1xf32> to vector<8x1xf32>
    %348 = vector.extract_strided_slice %193 {offsets = [0, 256], sizes = [8, 128], strides = [1, 1]} : vector<8x1024xf32> to vector<8x128xf32>
    %349 = vector.broadcast %347 : vector<8x1xf32> to vector<8x128xf32>
    %350 = arith.mulf %349, %348 : vector<8x128xf32>
    %351 = arith.addf %345, %350 : vector<8x128xf32>
    %c27_155 = arith.constant 27 : index
    %c0_156 = arith.constant 0 : index
    %c0_157 = arith.constant 0 : index
    %352 = vector.load %arg5[%c27_155, %c0_156, %c0_157] : memref<64x8x1xf32, #tpu.memory_space<vmem>>, vector<1x8x1xf32>
    %353 = vector.shape_cast %352 : vector<1x8x1xf32> to vector<8x1xf32>
    %354 = vector.extract_strided_slice %193 {offsets = [0, 384], sizes = [8, 128], strides = [1, 1]} : vector<8x1024xf32> to vector<8x128xf32>
    %355 = vector.broadcast %353 : vector<8x1xf32> to vector<8x128xf32>
    %356 = arith.mulf %355, %354 : vector<8x128xf32>
    %357 = arith.addf %351, %356 : vector<8x128xf32>
    %c28_158 = arith.constant 28 : index
    %c0_159 = arith.constant 0 : index
    %c0_160 = arith.constant 0 : index
    %358 = vector.load %arg5[%c28_158, %c0_159, %c0_160] : memref<64x8x1xf32, #tpu.memory_space<vmem>>, vector<1x8x1xf32>
    %359 = vector.shape_cast %358 : vector<1x8x1xf32> to vector<8x1xf32>
    %360 = vector.extract_strided_slice %193 {offsets = [0, 512], sizes = [8, 128], strides = [1, 1]} : vector<8x1024xf32> to vector<8x128xf32>
    %361 = vector.broadcast %359 : vector<8x1xf32> to vector<8x128xf32>
    %362 = arith.mulf %361, %360 : vector<8x128xf32>
    %363 = arith.addf %357, %362 : vector<8x128xf32>
    %c29_161 = arith.constant 29 : index
    %c0_162 = arith.constant 0 : index
    %c0_163 = arith.constant 0 : index
    %364 = vector.load %arg5[%c29_161, %c0_162, %c0_163] : memref<64x8x1xf32, #tpu.memory_space<vmem>>, vector<1x8x1xf32>
    %365 = vector.shape_cast %364 : vector<1x8x1xf32> to vector<8x1xf32>
    %366 = vector.extract_strided_slice %193 {offsets = [0, 640], sizes = [8, 128], strides = [1, 1]} : vector<8x1024xf32> to vector<8x128xf32>
    %367 = vector.broadcast %365 : vector<8x1xf32> to vector<8x128xf32>
    %368 = arith.mulf %367, %366 : vector<8x128xf32>
    %369 = arith.addf %363, %368 : vector<8x128xf32>
    %c30_164 = arith.constant 30 : index
    %c0_165 = arith.constant 0 : index
    %c0_166 = arith.constant 0 : index
    %370 = vector.load %arg5[%c30_164, %c0_165, %c0_166] : memref<64x8x1xf32, #tpu.memory_space<vmem>>, vector<1x8x1xf32>
    %371 = vector.shape_cast %370 : vector<1x8x1xf32> to vector<8x1xf32>
    %372 = vector.extract_strided_slice %193 {offsets = [0, 768], sizes = [8, 128], strides = [1, 1]} : vector<8x1024xf32> to vector<8x128xf32>
    %373 = vector.broadcast %371 : vector<8x1xf32> to vector<8x128xf32>
    %374 = arith.mulf %373, %372 : vector<8x128xf32>
    %375 = arith.addf %369, %374 : vector<8x128xf32>
    %c31_167 = arith.constant 31 : index
    %c0_168 = arith.constant 0 : index
    %c0_169 = arith.constant 0 : index
    %376 = vector.load %arg5[%c31_167, %c0_168, %c0_169] : memref<64x8x1xf32, #tpu.memory_space<vmem>>, vector<1x8x1xf32>
    %377 = vector.shape_cast %376 : vector<1x8x1xf32> to vector<8x1xf32>
    %378 = vector.extract_strided_slice %193 {offsets = [0, 896], sizes = [8, 128], strides = [1, 1]} : vector<8x1024xf32> to vector<8x128xf32>
    %379 = vector.broadcast %377 : vector<8x1xf32> to vector<8x128xf32>
    %380 = arith.mulf %379, %378 : vector<8x128xf32>
    %381 = arith.addf %375, %380 : vector<8x128xf32>
    %c32 = arith.constant 32 : index
    %c0_170 = arith.constant 0 : index
    %c0_171 = arith.constant 0 : index
    %382 = vector.load %arg5[%c32, %c0_170, %c0_171] : memref<64x8x1xf32, #tpu.memory_space<vmem>>, vector<1x8x1xf32>
    %383 = vector.shape_cast %382 : vector<1x8x1xf32> to vector<8x1xf32>
    %384 = vector.extract_strided_slice %193 {offsets = [0, 0], sizes = [8, 128], strides = [1, 1]} : vector<8x1024xf32> to vector<8x128xf32>
    %385 = vector.broadcast %383 : vector<8x1xf32> to vector<8x128xf32>
    %386 = arith.mulf %385, %384 : vector<8x128xf32>
    %c33 = arith.constant 33 : index
    %c0_172 = arith.constant 0 : index
    %c0_173 = arith.constant 0 : index
    %387 = vector.load %arg5[%c33, %c0_172, %c0_173] : memref<64x8x1xf32, #tpu.memory_space<vmem>>, vector<1x8x1xf32>
    %388 = vector.shape_cast %387 : vector<1x8x1xf32> to vector<8x1xf32>
    %389 = vector.extract_strided_slice %193 {offsets = [0, 128], sizes = [8, 128], strides = [1, 1]} : vector<8x1024xf32> to vector<8x128xf32>
    %390 = vector.broadcast %388 : vector<8x1xf32> to vector<8x128xf32>
    %391 = arith.mulf %390, %389 : vector<8x128xf32>
    %392 = arith.addf %386, %391 : vector<8x128xf32>
    %c34 = arith.constant 34 : index
    %c0_174 = arith.constant 0 : index
    %c0_175 = arith.constant 0 : index
    %393 = vector.load %arg5[%c34, %c0_174, %c0_175] : memref<64x8x1xf32, #tpu.memory_space<vmem>>, vector<1x8x1xf32>
    %394 = vector.shape_cast %393 : vector<1x8x1xf32> to vector<8x1xf32>
    %395 = vector.extract_strided_slice %193 {offsets = [0, 256], sizes = [8, 128], strides = [1, 1]} : vector<8x1024xf32> to vector<8x128xf32>
    %396 = vector.broadcast %394 : vector<8x1xf32> to vector<8x128xf32>
    %397 = arith.mulf %396, %395 : vector<8x128xf32>
    %398 = arith.addf %392, %397 : vector<8x128xf32>
    %c35 = arith.constant 35 : index
    %c0_176 = arith.constant 0 : index
    %c0_177 = arith.constant 0 : index
    %399 = vector.load %arg5[%c35, %c0_176, %c0_177] : memref<64x8x1xf32, #tpu.memory_space<vmem>>, vector<1x8x1xf32>
    %400 = vector.shape_cast %399 : vector<1x8x1xf32> to vector<8x1xf32>
    %401 = vector.extract_strided_slice %193 {offsets = [0, 384], sizes = [8, 128], strides = [1, 1]} : vector<8x1024xf32> to vector<8x128xf32>
    %402 = vector.broadcast %400 : vector<8x1xf32> to vector<8x128xf32>
    %403 = arith.mulf %402, %401 : vector<8x128xf32>
    %404 = arith.addf %398, %403 : vector<8x128xf32>
    %c36 = arith.constant 36 : index
    %c0_178 = arith.constant 0 : index
    %c0_179 = arith.constant 0 : index
    %405 = vector.load %arg5[%c36, %c0_178, %c0_179] : memref<64x8x1xf32, #tpu.memory_space<vmem>>, vector<1x8x1xf32>
    %406 = vector.shape_cast %405 : vector<1x8x1xf32> to vector<8x1xf32>
    %407 = vector.extract_strided_slice %193 {offsets = [0, 512], sizes = [8, 128], strides = [1, 1]} : vector<8x1024xf32> to vector<8x128xf32>
    %408 = vector.broadcast %406 : vector<8x1xf32> to vector<8x128xf32>
    %409 = arith.mulf %408, %407 : vector<8x128xf32>
    %410 = arith.addf %404, %409 : vector<8x128xf32>
    %c37 = arith.constant 37 : index
    %c0_180 = arith.constant 0 : index
    %c0_181 = arith.constant 0 : index
    %411 = vector.load %arg5[%c37, %c0_180, %c0_181] : memref<64x8x1xf32, #tpu.memory_space<vmem>>, vector<1x8x1xf32>
    %412 = vector.shape_cast %411 : vector<1x8x1xf32> to vector<8x1xf32>
    %413 = vector.extract_strided_slice %193 {offsets = [0, 640], sizes = [8, 128], strides = [1, 1]} : vector<8x1024xf32> to vector<8x128xf32>
    %414 = vector.broadcast %412 : vector<8x1xf32> to vector<8x128xf32>
    %415 = arith.mulf %414, %413 : vector<8x128xf32>
    %416 = arith.addf %410, %415 : vector<8x128xf32>
    %c38 = arith.constant 38 : index
    %c0_182 = arith.constant 0 : index
    %c0_183 = arith.constant 0 : index
    %417 = vector.load %arg5[%c38, %c0_182, %c0_183] : memref<64x8x1xf32, #tpu.memory_space<vmem>>, vector<1x8x1xf32>
    %418 = vector.shape_cast %417 : vector<1x8x1xf32> to vector<8x1xf32>
    %419 = vector.extract_strided_slice %193 {offsets = [0, 768], sizes = [8, 128], strides = [1, 1]} : vector<8x1024xf32> to vector<8x128xf32>
    %420 = vector.broadcast %418 : vector<8x1xf32> to vector<8x128xf32>
    %421 = arith.mulf %420, %419 : vector<8x128xf32>
    %422 = arith.addf %416, %421 : vector<8x128xf32>
    %c39 = arith.constant 39 : index
    %c0_184 = arith.constant 0 : index
    %c0_185 = arith.constant 0 : index
    %423 = vector.load %arg5[%c39, %c0_184, %c0_185] : memref<64x8x1xf32, #tpu.memory_space<vmem>>, vector<1x8x1xf32>
    %424 = vector.shape_cast %423 : vector<1x8x1xf32> to vector<8x1xf32>
    %425 = vector.extract_strided_slice %193 {offsets = [0, 896], sizes = [8, 128], strides = [1, 1]} : vector<8x1024xf32> to vector<8x128xf32>
    %426 = vector.broadcast %424 : vector<8x1xf32> to vector<8x128xf32>
    %427 = arith.mulf %426, %425 : vector<8x128xf32>
    %428 = arith.addf %422, %427 : vector<8x128xf32>
    %c40 = arith.constant 40 : index
    %c0_186 = arith.constant 0 : index
    %c0_187 = arith.constant 0 : index
    %429 = vector.load %arg5[%c40, %c0_186, %c0_187] : memref<64x8x1xf32, #tpu.memory_space<vmem>>, vector<1x8x1xf32>
    %430 = vector.shape_cast %429 : vector<1x8x1xf32> to vector<8x1xf32>
    %431 = vector.extract_strided_slice %193 {offsets = [0, 0], sizes = [8, 128], strides = [1, 1]} : vector<8x1024xf32> to vector<8x128xf32>
    %432 = vector.broadcast %430 : vector<8x1xf32> to vector<8x128xf32>
    %433 = arith.mulf %432, %431 : vector<8x128xf32>
    %c41 = arith.constant 41 : index
    %c0_188 = arith.constant 0 : index
    %c0_189 = arith.constant 0 : index
    %434 = vector.load %arg5[%c41, %c0_188, %c0_189] : memref<64x8x1xf32, #tpu.memory_space<vmem>>, vector<1x8x1xf32>
    %435 = vector.shape_cast %434 : vector<1x8x1xf32> to vector<8x1xf32>
    %436 = vector.extract_strided_slice %193 {offsets = [0, 128], sizes = [8, 128], strides = [1, 1]} : vector<8x1024xf32> to vector<8x128xf32>
    %437 = vector.broadcast %435 : vector<8x1xf32> to vector<8x128xf32>
    %438 = arith.mulf %437, %436 : vector<8x128xf32>
    %439 = arith.addf %433, %438 : vector<8x128xf32>
    %c42 = arith.constant 42 : index
    %c0_190 = arith.constant 0 : index
    %c0_191 = arith.constant 0 : index
    %440 = vector.load %arg5[%c42, %c0_190, %c0_191] : memref<64x8x1xf32, #tpu.memory_space<vmem>>, vector<1x8x1xf32>
    %441 = vector.shape_cast %440 : vector<1x8x1xf32> to vector<8x1xf32>
    %442 = vector.extract_strided_slice %193 {offsets = [0, 256], sizes = [8, 128], strides = [1, 1]} : vector<8x1024xf32> to vector<8x128xf32>
    %443 = vector.broadcast %441 : vector<8x1xf32> to vector<8x128xf32>
    %444 = arith.mulf %443, %442 : vector<8x128xf32>
    %445 = arith.addf %439, %444 : vector<8x128xf32>
    %c43 = arith.constant 43 : index
    %c0_192 = arith.constant 0 : index
    %c0_193 = arith.constant 0 : index
    %446 = vector.load %arg5[%c43, %c0_192, %c0_193] : memref<64x8x1xf32, #tpu.memory_space<vmem>>, vector<1x8x1xf32>
    %447 = vector.shape_cast %446 : vector<1x8x1xf32> to vector<8x1xf32>
    %448 = vector.extract_strided_slice %193 {offsets = [0, 384], sizes = [8, 128], strides = [1, 1]} : vector<8x1024xf32> to vector<8x128xf32>
    %449 = vector.broadcast %447 : vector<8x1xf32> to vector<8x128xf32>
    %450 = arith.mulf %449, %448 : vector<8x128xf32>
    %451 = arith.addf %445, %450 : vector<8x128xf32>
    %c44 = arith.constant 44 : index
    %c0_194 = arith.constant 0 : index
    %c0_195 = arith.constant 0 : index
    %452 = vector.load %arg5[%c44, %c0_194, %c0_195] : memref<64x8x1xf32, #tpu.memory_space<vmem>>, vector<1x8x1xf32>
    %453 = vector.shape_cast %452 : vector<1x8x1xf32> to vector<8x1xf32>
    %454 = vector.extract_strided_slice %193 {offsets = [0, 512], sizes = [8, 128], strides = [1, 1]} : vector<8x1024xf32> to vector<8x128xf32>
    %455 = vector.broadcast %453 : vector<8x1xf32> to vector<8x128xf32>
    %456 = arith.mulf %455, %454 : vector<8x128xf32>
    %457 = arith.addf %451, %456 : vector<8x128xf32>
    %c45 = arith.constant 45 : index
    %c0_196 = arith.constant 0 : index
    %c0_197 = arith.constant 0 : index
    %458 = vector.load %arg5[%c45, %c0_196, %c0_197] : memref<64x8x1xf32, #tpu.memory_space<vmem>>, vector<1x8x1xf32>
    %459 = vector.shape_cast %458 : vector<1x8x1xf32> to vector<8x1xf32>
    %460 = vector.extract_strided_slice %193 {offsets = [0, 640], sizes = [8, 128], strides = [1, 1]} : vector<8x1024xf32> to vector<8x128xf32>
    %461 = vector.broadcast %459 : vector<8x1xf32> to vector<8x128xf32>
    %462 = arith.mulf %461, %460 : vector<8x128xf32>
    %463 = arith.addf %457, %462 : vector<8x128xf32>
    %c46 = arith.constant 46 : index
    %c0_198 = arith.constant 0 : index
    %c0_199 = arith.constant 0 : index
    %464 = vector.load %arg5[%c46, %c0_198, %c0_199] : memref<64x8x1xf32, #tpu.memory_space<vmem>>, vector<1x8x1xf32>
    %465 = vector.shape_cast %464 : vector<1x8x1xf32> to vector<8x1xf32>
    %466 = vector.extract_strided_slice %193 {offsets = [0, 768], sizes = [8, 128], strides = [1, 1]} : vector<8x1024xf32> to vector<8x128xf32>
    %467 = vector.broadcast %465 : vector<8x1xf32> to vector<8x128xf32>
    %468 = arith.mulf %467, %466 : vector<8x128xf32>
    %469 = arith.addf %463, %468 : vector<8x128xf32>
    %c47 = arith.constant 47 : index
    %c0_200 = arith.constant 0 : index
    %c0_201 = arith.constant 0 : index
    %470 = vector.load %arg5[%c47, %c0_200, %c0_201] : memref<64x8x1xf32, #tpu.memory_space<vmem>>, vector<1x8x1xf32>
    %471 = vector.shape_cast %470 : vector<1x8x1xf32> to vector<8x1xf32>
    %472 = vector.extract_strided_slice %193 {offsets = [0, 896], sizes = [8, 128], strides = [1, 1]} : vector<8x1024xf32> to vector<8x128xf32>
    %473 = vector.broadcast %471 : vector<8x1xf32> to vector<8x128xf32>
    %474 = arith.mulf %473, %472 : vector<8x128xf32>
    %475 = arith.addf %469, %474 : vector<8x128xf32>
    %c48 = arith.constant 48 : index
    %c0_202 = arith.constant 0 : index
    %c0_203 = arith.constant 0 : index
    %476 = vector.load %arg5[%c48, %c0_202, %c0_203] : memref<64x8x1xf32, #tpu.memory_space<vmem>>, vector<1x8x1xf32>
    %477 = vector.shape_cast %476 : vector<1x8x1xf32> to vector<8x1xf32>
    %478 = vector.extract_strided_slice %193 {offsets = [0, 0], sizes = [8, 128], strides = [1, 1]} : vector<8x1024xf32> to vector<8x128xf32>
    %479 = vector.broadcast %477 : vector<8x1xf32> to vector<8x128xf32>
    %480 = arith.mulf %479, %478 : vector<8x128xf32>
    %c49 = arith.constant 49 : index
    %c0_204 = arith.constant 0 : index
    %c0_205 = arith.constant 0 : index
    %481 = vector.load %arg5[%c49, %c0_204, %c0_205] : memref<64x8x1xf32, #tpu.memory_space<vmem>>, vector<1x8x1xf32>
    %482 = vector.shape_cast %481 : vector<1x8x1xf32> to vector<8x1xf32>
    %483 = vector.extract_strided_slice %193 {offsets = [0, 128], sizes = [8, 128], strides = [1, 1]} : vector<8x1024xf32> to vector<8x128xf32>
    %484 = vector.broadcast %482 : vector<8x1xf32> to vector<8x128xf32>
    %485 = arith.mulf %484, %483 : vector<8x128xf32>
    %486 = arith.addf %480, %485 : vector<8x128xf32>
    %c50 = arith.constant 50 : index
    %c0_206 = arith.constant 0 : index
    %c0_207 = arith.constant 0 : index
    %487 = vector.load %arg5[%c50, %c0_206, %c0_207] : memref<64x8x1xf32, #tpu.memory_space<vmem>>, vector<1x8x1xf32>
    %488 = vector.shape_cast %487 : vector<1x8x1xf32> to vector<8x1xf32>
    %489 = vector.extract_strided_slice %193 {offsets = [0, 256], sizes = [8, 128], strides = [1, 1]} : vector<8x1024xf32> to vector<8x128xf32>
    %490 = vector.broadcast %488 : vector<8x1xf32> to vector<8x128xf32>
    %491 = arith.mulf %490, %489 : vector<8x128xf32>
    %492 = arith.addf %486, %491 : vector<8x128xf32>
    %c51 = arith.constant 51 : index
    %c0_208 = arith.constant 0 : index
    %c0_209 = arith.constant 0 : index
    %493 = vector.load %arg5[%c51, %c0_208, %c0_209] : memref<64x8x1xf32, #tpu.memory_space<vmem>>, vector<1x8x1xf32>
    %494 = vector.shape_cast %493 : vector<1x8x1xf32> to vector<8x1xf32>
    %495 = vector.extract_strided_slice %193 {offsets = [0, 384], sizes = [8, 128], strides = [1, 1]} : vector<8x1024xf32> to vector<8x128xf32>
    %496 = vector.broadcast %494 : vector<8x1xf32> to vector<8x128xf32>
    %497 = arith.mulf %496, %495 : vector<8x128xf32>
    %498 = arith.addf %492, %497 : vector<8x128xf32>
    %c52 = arith.constant 52 : index
    %c0_210 = arith.constant 0 : index
    %c0_211 = arith.constant 0 : index
    %499 = vector.load %arg5[%c52, %c0_210, %c0_211] : memref<64x8x1xf32, #tpu.memory_space<vmem>>, vector<1x8x1xf32>
    %500 = vector.shape_cast %499 : vector<1x8x1xf32> to vector<8x1xf32>
    %501 = vector.extract_strided_slice %193 {offsets = [0, 512], sizes = [8, 128], strides = [1, 1]} : vector<8x1024xf32> to vector<8x128xf32>
    %502 = vector.broadcast %500 : vector<8x1xf32> to vector<8x128xf32>
    %503 = arith.mulf %502, %501 : vector<8x128xf32>
    %504 = arith.addf %498, %503 : vector<8x128xf32>
    %c53 = arith.constant 53 : index
    %c0_212 = arith.constant 0 : index
    %c0_213 = arith.constant 0 : index
    %505 = vector.load %arg5[%c53, %c0_212, %c0_213] : memref<64x8x1xf32, #tpu.memory_space<vmem>>, vector<1x8x1xf32>
    %506 = vector.shape_cast %505 : vector<1x8x1xf32> to vector<8x1xf32>
    %507 = vector.extract_strided_slice %193 {offsets = [0, 640], sizes = [8, 128], strides = [1, 1]} : vector<8x1024xf32> to vector<8x128xf32>
    %508 = vector.broadcast %506 : vector<8x1xf32> to vector<8x128xf32>
    %509 = arith.mulf %508, %507 : vector<8x128xf32>
    %510 = arith.addf %504, %509 : vector<8x128xf32>
    %c54 = arith.constant 54 : index
    %c0_214 = arith.constant 0 : index
    %c0_215 = arith.constant 0 : index
    %511 = vector.load %arg5[%c54, %c0_214, %c0_215] : memref<64x8x1xf32, #tpu.memory_space<vmem>>, vector<1x8x1xf32>
    %512 = vector.shape_cast %511 : vector<1x8x1xf32> to vector<8x1xf32>
    %513 = vector.extract_strided_slice %193 {offsets = [0, 768], sizes = [8, 128], strides = [1, 1]} : vector<8x1024xf32> to vector<8x128xf32>
    %514 = vector.broadcast %512 : vector<8x1xf32> to vector<8x128xf32>
    %515 = arith.mulf %514, %513 : vector<8x128xf32>
    %516 = arith.addf %510, %515 : vector<8x128xf32>
    %c55 = arith.constant 55 : index
    %c0_216 = arith.constant 0 : index
    %c0_217 = arith.constant 0 : index
    %517 = vector.load %arg5[%c55, %c0_216, %c0_217] : memref<64x8x1xf32, #tpu.memory_space<vmem>>, vector<1x8x1xf32>
    %518 = vector.shape_cast %517 : vector<1x8x1xf32> to vector<8x1xf32>
    %519 = vector.extract_strided_slice %193 {offsets = [0, 896], sizes = [8, 128], strides = [1, 1]} : vector<8x1024xf32> to vector<8x128xf32>
    %520 = vector.broadcast %518 : vector<8x1xf32> to vector<8x128xf32>
    %521 = arith.mulf %520, %519 : vector<8x128xf32>
    %522 = arith.addf %516, %521 : vector<8x128xf32>
    %c56 = arith.constant 56 : index
    %c0_218 = arith.constant 0 : index
    %c0_219 = arith.constant 0 : index
    %523 = vector.load %arg5[%c56, %c0_218, %c0_219] : memref<64x8x1xf32, #tpu.memory_space<vmem>>, vector<1x8x1xf32>
    %524 = vector.shape_cast %523 : vector<1x8x1xf32> to vector<8x1xf32>
    %525 = vector.extract_strided_slice %193 {offsets = [0, 0], sizes = [8, 128], strides = [1, 1]} : vector<8x1024xf32> to vector<8x128xf32>
    %526 = vector.broadcast %524 : vector<8x1xf32> to vector<8x128xf32>
    %527 = arith.mulf %526, %525 : vector<8x128xf32>
    %c57 = arith.constant 57 : index
    %c0_220 = arith.constant 0 : index
    %c0_221 = arith.constant 0 : index
    %528 = vector.load %arg5[%c57, %c0_220, %c0_221] : memref<64x8x1xf32, #tpu.memory_space<vmem>>, vector<1x8x1xf32>
    %529 = vector.shape_cast %528 : vector<1x8x1xf32> to vector<8x1xf32>
    %530 = vector.extract_strided_slice %193 {offsets = [0, 128], sizes = [8, 128], strides = [1, 1]} : vector<8x1024xf32> to vector<8x128xf32>
    %531 = vector.broadcast %529 : vector<8x1xf32> to vector<8x128xf32>
    %532 = arith.mulf %531, %530 : vector<8x128xf32>
    %533 = arith.addf %527, %532 : vector<8x128xf32>
    %c58 = arith.constant 58 : index
    %c0_222 = arith.constant 0 : index
    %c0_223 = arith.constant 0 : index
    %534 = vector.load %arg5[%c58, %c0_222, %c0_223] : memref<64x8x1xf32, #tpu.memory_space<vmem>>, vector<1x8x1xf32>
    %535 = vector.shape_cast %534 : vector<1x8x1xf32> to vector<8x1xf32>
    %536 = vector.extract_strided_slice %193 {offsets = [0, 256], sizes = [8, 128], strides = [1, 1]} : vector<8x1024xf32> to vector<8x128xf32>
    %537 = vector.broadcast %535 : vector<8x1xf32> to vector<8x128xf32>
    %538 = arith.mulf %537, %536 : vector<8x128xf32>
    %539 = arith.addf %533, %538 : vector<8x128xf32>
    %c59 = arith.constant 59 : index
    %c0_224 = arith.constant 0 : index
    %c0_225 = arith.constant 0 : index
    %540 = vector.load %arg5[%c59, %c0_224, %c0_225] : memref<64x8x1xf32, #tpu.memory_space<vmem>>, vector<1x8x1xf32>
    %541 = vector.shape_cast %540 : vector<1x8x1xf32> to vector<8x1xf32>
    %542 = vector.extract_strided_slice %193 {offsets = [0, 384], sizes = [8, 128], strides = [1, 1]} : vector<8x1024xf32> to vector<8x128xf32>
    %543 = vector.broadcast %541 : vector<8x1xf32> to vector<8x128xf32>
    %544 = arith.mulf %543, %542 : vector<8x128xf32>
    %545 = arith.addf %539, %544 : vector<8x128xf32>
    %c60 = arith.constant 60 : index
    %c0_226 = arith.constant 0 : index
    %c0_227 = arith.constant 0 : index
    %546 = vector.load %arg5[%c60, %c0_226, %c0_227] : memref<64x8x1xf32, #tpu.memory_space<vmem>>, vector<1x8x1xf32>
    %547 = vector.shape_cast %546 : vector<1x8x1xf32> to vector<8x1xf32>
    %548 = vector.extract_strided_slice %193 {offsets = [0, 512], sizes = [8, 128], strides = [1, 1]} : vector<8x1024xf32> to vector<8x128xf32>
    %549 = vector.broadcast %547 : vector<8x1xf32> to vector<8x128xf32>
    %550 = arith.mulf %549, %548 : vector<8x128xf32>
    %551 = arith.addf %545, %550 : vector<8x128xf32>
    %c61 = arith.constant 61 : index
    %c0_228 = arith.constant 0 : index
    %c0_229 = arith.constant 0 : index
    %552 = vector.load %arg5[%c61, %c0_228, %c0_229] : memref<64x8x1xf32, #tpu.memory_space<vmem>>, vector<1x8x1xf32>
    %553 = vector.shape_cast %552 : vector<1x8x1xf32> to vector<8x1xf32>
    %554 = vector.extract_strided_slice %193 {offsets = [0, 640], sizes = [8, 128], strides = [1, 1]} : vector<8x1024xf32> to vector<8x128xf32>
    %555 = vector.broadcast %553 : vector<8x1xf32> to vector<8x128xf32>
    %556 = arith.mulf %555, %554 : vector<8x128xf32>
    %557 = arith.addf %551, %556 : vector<8x128xf32>
    %c62 = arith.constant 62 : index
    %c0_230 = arith.constant 0 : index
    %c0_231 = arith.constant 0 : index
    %558 = vector.load %arg5[%c62, %c0_230, %c0_231] : memref<64x8x1xf32, #tpu.memory_space<vmem>>, vector<1x8x1xf32>
    %559 = vector.shape_cast %558 : vector<1x8x1xf32> to vector<8x1xf32>
    %560 = vector.extract_strided_slice %193 {offsets = [0, 768], sizes = [8, 128], strides = [1, 1]} : vector<8x1024xf32> to vector<8x128xf32>
    %561 = vector.broadcast %559 : vector<8x1xf32> to vector<8x128xf32>
    %562 = arith.mulf %561, %560 : vector<8x128xf32>
    %563 = arith.addf %557, %562 : vector<8x128xf32>
    %c63 = arith.constant 63 : index
    %c0_232 = arith.constant 0 : index
    %c0_233 = arith.constant 0 : index
    %564 = vector.load %arg5[%c63, %c0_232, %c0_233] : memref<64x8x1xf32, #tpu.memory_space<vmem>>, vector<1x8x1xf32>
    %565 = vector.shape_cast %564 : vector<1x8x1xf32> to vector<8x1xf32>
    %566 = vector.extract_strided_slice %193 {offsets = [0, 896], sizes = [8, 128], strides = [1, 1]} : vector<8x1024xf32> to vector<8x128xf32>
    %567 = vector.broadcast %565 : vector<8x1xf32> to vector<8x128xf32>
    %568 = arith.mulf %567, %566 : vector<8x128xf32>
    %569 = arith.addf %563, %568 : vector<8x128xf32>
    %570 = tpu.concatenate %240, %287, %334, %381, %428, %475, %522, %569 in 1 : vector<8x128xf32>, vector<8x128xf32>, vector<8x128xf32>, vector<8x128xf32>, vector<8x128xf32>, vector<8x128xf32>, vector<8x128xf32>, vector<8x128xf32> -> vector<8x1024xf32>
    %cst_234 = arith.constant dense<0.000000e+00> : vector<16x1024xf32>
    %571 = tpu.matmul %1, %570, %cst_234 {dimension_numbers = #tpu.dot_dimension_numbers<[1], [0], [0], [1], [0, 0, 1, 1], [], []>} : vector<16x8xf32>, vector<8x1024xf32>, vector<16x1024xf32> -> vector<16x1024xf32>
    %cst_235 = arith.constant 0.000000e+00 : f32
    %572 = vector.broadcast %cst_235 : f32 to vector<16x1024xf32>
    %573 = arith.maximumf %571, %572 : vector<16x1024xf32>
    %c0_236 = arith.constant 0 : index
    %c0_237 = arith.constant 0 : index
    %c0_238 = arith.constant 0 : index
    %574 = vector.load %arg6[%c0_236, %c0_237, %c0_238] : memref<1x16x1024xf32, #tpu.memory_space<vmem>>, vector<1x16x1024xf32>
    %575 = vector.shape_cast %574 : vector<1x16x1024xf32> to vector<16x1024xf32>
    %576 = vector.shape_cast %573 : vector<16x1024xf32> to vector<1x16x1024xf32>
    tpu.vector_store %arg6[%c0_236, %c0_237, %c0_238], %576 {strides = array<i32>} : memref<1x16x1024xf32, #tpu.memory_space<vmem>>, vector<1x16x1024xf32>,
    return
  }
  func.func @transform_0(%arg0: i32) -> (i32, i32, i32) {
    %c0_i32 = arith.constant 0 : i32
    %c0_i32_0 = arith.constant 0 : i32
    %c0_i32_1 = arith.constant 0 : i32
    return %arg0, %c0_i32, %c0_i32_0 : i32, i32, i32
  }
  func.func @transform_1(%arg0: i32) -> (i32, i32) {
    %c0_i32 = arith.constant 0 : i32
    %c0_i32_0 = arith.constant 0 : i32
    %c0_i32_1 = arith.constant 0 : i32
    return %c0_i32, %c0_i32_0 : i32, i32
  }
  func.func @transform_2(%arg0: i32) -> (i32, i32) {
    %c0_i32 = arith.constant 0 : i32
    %c0_i32_0 = arith.constant 0 : i32
    %c0_i32_1 = arith.constant 0 : i32
    return %c0_i32, %c0_i32_0 : i32, i32
  }
  func.func @transform_3(%arg0: i32) -> (i32, i32, i32) {
    %c0_i32 = arith.constant 0 : i32
    %c0_i32_0 = arith.constant 0 : i32
    %c0_i32_1 = arith.constant 0 : i32
    %c0_i32_2 = arith.constant 0 : i32
    return %c0_i32, %c0_i32_0, %c0_i32_1 : i32, i32, i32
  }
  func.func @transform_4(%arg0: i32) -> (i32, i32, i32) {
    %c0_i32 = arith.constant 0 : i32
    %c0_i32_0 = arith.constant 0 : i32
    %c0_i32_1 = arith.constant 0 : i32
    %c0_i32_2 = arith.constant 0 : i32
    return %c0_i32, %c0_i32_0, %c0_i32_1 : i32, i32, i32
  }
  func.func @transform_5(%arg0: i32) -> (i32, i32, i32) {
    %c0_i32 = arith.constant 0 : i32
    %c0_i32_0 = arith.constant 0 : i32
    %c0_i32_1 = arith.constant 0 : i32
    return %arg0, %c0_i32, %c0_i32_0 : i32, i32, i32
  }
}

</mosaic_0001>

<llo_original>
// kernel: tpu_custom_call.1
$region0: #{tpu_custom_call.1}
  #allocation0 [shape = 'u32[]', space=smem, size = 0x4, offset = 0x4, fixed_abs, tag = 'smem constant byte address 0x4 - core index']
  #allocation1 [shape = 'u32[144,128]{1,0:T(1,128)}', space=vmem, size = 0x12000, scoped, tag = 'internal scratch']
  %s0 = inlined_call_operand.vmem [shape: f32[2,16,512], index: 0, kind: input, shape index: {}]
  %s1 = inlined_call_operand.vmem [shape: f32[8,16], index: 1, kind: input, shape index: {}]
  %s2 = inlined_call_operand.vmem [shape: f32[16,8], index: 2, kind: input, shape index: {}]
  %s3 = inlined_call_operand.vmem [shape: f32[32,8,1], index: 3, kind: input, shape index: {}]
  %s4 = inlined_call_operand.vmem [shape: f32[64,8,1], index: 4, kind: input, shape index: {}]
  %s5 = inlined_call_operand.hbm [shape: f32[2,16,1024], index: 5, kind: output, shape index: {}]
  %s6 = sld [smem:[#allocation0]]
  $region53: #{tpu_custom_call.1} parent=0
    _
  %s8 = ssub.s32 1, %s6
  %s9 = scalar_select 0, %s8, %s6
  $region1: #{tpu_custom_call.1} parent=0
    #allocation2 [shape = 'u8[131072]{0}', space=vmem, size = 0x20000, scoped, tag = 'output window, operand 0']
    #allocation3 [shape = 's32[2]{0}', space=sflag, size = 0x8, scoped, tag = 'scoped memory for tpu_custom_call.1']
    %10 = vsyncpa [#allocation3], 0
    %s11 = scalar_lea.sflag [#allocation3], 1
    %12 = vsyncpa %s11, 0
    loop: start=0, step=1, limit=4
    $region2: #{tpu_custom_call.1} parent=1 // loop_pre_header
      _
    $region3: #{tpu_custom_call.1} parent=1 // loop_header
      %s14 = sphi 0, %s18
      %p15 = scmp.ge.s32.totalorder %s14, 4
      %s24 = sphi 0, %s26
      %s27 = sphi 0, %s24
      %s28 = sphi 0, %s27
      %s44 = sphi 0, %s28
      %s48 = sphi 0, %s48
      %s50 = sphi 0, %s48
      %s51 = sphi 0, %s50
      %s65 = sphi 0, %s51
      %s69 = sphi 0, %s69
      %s71 = sphi 0, %s69
      %s72 = sphi 0, %s71
      %s86 = sphi 0, %s72
      %s90 = sphi 0, %s90
      %s92 = sphi 0, %s90
      %s93 = sphi 0, %s92
      %s107 = sphi 0, %s93
      %s111 = sphi 0, %s111
      %s113 = sphi 0, %s111
      %s114 = sphi 0, %s113
      %s128 = sphi 0, %s114
      %s134 = sphi 0, %s136
      %s137 = sphi 0, %s134
      %s138 = sphi 0, %s137
      %s154 = sphi 0, %s138
    $region4: #{tpu_custom_call.1} parent=1 // loop_header_branch
      %17 = sbr.rel (%p15) target = $region8
    $region5: #{tpu_custom_call.1} parent=1 // loop_body
      %s19 = ssub.s32 %s14, 1
      %s20 = ssub.s32 %s14, 2
      %s21 = sadd.s32 %s14, 1
      %s22 = ssub.s32 %s14, %s21
      %p23 = scmp.eq.s32.totalorder %s22, 0
      %s25 = sadd.s32 %s24, 1
      %s26 = scalar_select %p23, %s24, %s25
      %p29 = pneg %p23
      %p30 = scmp.eq.s32.totalorder %s14, 1
      %p31 = por %p29, %p30
      %p32 = scmp.ne.s32.totalorder %s24, %s27
      %p33 = scmp.eq.s32.totalorder %s14, 0
      %p34 = por %p32, %p33
      %p35 = scmp.ne.s32.totalorder %s24, %s27
      %p36 = scmp.eq.s32.totalorder %s19, 1
      %p37 = por %p35, %p36
      %p38 = scmp.ne.s32.totalorder %s27, %s28
      %p39 = scmp.eq.s32.totalorder %s19, 0
      %p40 = por %p38, %p39
      %p41 = scmp.ne.s32.totalorder %s27, %s28
      %p42 = scmp.eq.s32.totalorder %s20, 1
      %p43 = por %p41, %p42
      %p45 = scmp.ne.s32.totalorder %s28, %s44
      %p46 = scmp.eq.s32.totalorder %s20, 0
      %p47 = por %p45, %p46
      %s49 = sadd.s32 %s48, 1
      %p52 = scmp.eq.s32.totalorder %s14, 1
      %p53 = scmp.ne.s32.totalorder %s48, %s50
      %p54 = scmp.eq.s32.totalorder %s14, 0
      %p55 = por %p53, %p54
      %p56 = scmp.ne.s32.totalorder %s48, %s50
      %p57 = scmp.eq.s32.totalorder %s19, 1
      %p58 = por %p56, %p57
      %p59 = scmp.ne.s32.totalorder %s50, %s51
      %p60 = scmp.eq.s32.totalorder %s19, 0
      %p61 = por %p59, %p60
      %p62 = scmp.ne.s32.totalorder %s50, %s51
      %p63 = scmp.eq.s32.totalorder %s20, 1
      %p64 = por %p62, %p63
      %p66 = scmp.ne.s32.totalorder %s51, %s65
      %p67 = scmp.eq.s32.totalorder %s20, 0
      %p68 = por %p66, %p67
      %s70 = sadd.s32 %s69, 1
      %p73 = scmp.eq.s32.totalorder %s14, 1
      %p74 = scmp.ne.s32.totalorder %s69, %s71
      %p75 = scmp.eq.s32.totalorder %s14, 0
      %p76 = por %p74, %p75
      %p77 = scmp.ne.s32.totalorder %s69, %s71
      %p78 = scmp.eq.s32.totalorder %s19, 1
      %p79 = por %p77, %p78
      %p80 = scmp.ne.s32.totalorder %s71, %s72
      %p81 = scmp.eq.s32.totalorder %s19, 0
      %p82 = por %p80, %p81
      %p83 = scmp.ne.s32.totalorder %s71, %s72
      %p84 = scmp.eq.s32.totalorder %s20, 1
      %p85 = por %p83, %p84
      %p87 = scmp.ne.s32.totalorder %s72, %s86
      %p88 = scmp.eq.s32.totalorder %s20, 0
      %p89 = por %p87, %p88
      %s91 = sadd.s32 %s90, 1
      %p94 = scmp.eq.s32.totalorder %s14, 1
      %p95 = scmp.ne.s32.totalorder %s90, %s92
      %p96 = scmp.eq.s32.totalorder %s14, 0
      %p97 = por %p95, %p96
      %p98 = scmp.ne.s32.totalorder %s90, %s92
      %p99 = scmp.eq.s32.totalorder %s19, 1
      %p100 = por %p98, %p99
      %p101 = scmp.ne.s32.totalorder %s92, %s93
      %p102 = scmp.eq.s32.totalorder %s19, 0
      %p103 = por %p101, %p102
      %p104 = scmp.ne.s32.totalorder %s92, %s93
      %p105 = scmp.eq.s32.totalorder %s20, 1
      %p106 = por %p104, %p105
      %p108 = scmp.ne.s32.totalorder %s93, %s107
      %p109 = scmp.eq.s32.totalorder %s20, 0
      %p110 = por %p108, %p109
      %s112 = sadd.s32 %s111, 1
      %p115 = scmp.eq.s32.totalorder %s14, 1
      %p116 = scmp.ne.s32.totalorder %s111, %s113
      %p117 = scmp.eq.s32.totalorder %s14, 0
      %p118 = por %p116, %p117
      %p119 = scmp.ne.s32.totalorder %s111, %s113
      %p120 = scmp.eq.s32.totalorder %s19, 1
      %p121 = por %p119, %p120
      %p122 = scmp.ne.s32.totalorder %s113, %s114
      %p123 = scmp.eq.s32.totalorder %s19, 0
      %p124 = por %p122, %p123
      %p125 = scmp.ne.s32.totalorder %s113, %s114
      %p126 = scmp.eq.s32.totalorder %s20, 1
      %p127 = por %p125, %p126
      %p129 = scmp.ne.s32.totalorder %s114, %s128
      %p130 = scmp.eq.s32.totalorder %s20, 0
      %p131 = por %p129, %p130
      %s132 = ssub.s32 %s14, %s21
      %p133 = scmp.eq.s32.totalorder %s132, 0
      %s135 = sadd.s32 %s134, 1
      %s136 = scalar_select %p133, %s134, %s135
      %p139 = pneg %p133
      %p140 = scmp.eq.s32.totalorder %s14, 1
      %p141 = por %p139, %p140
      %p142 = scmp.ne.s32.totalorder %s134, %s137
      %p143 = scmp.eq.s32.totalorder %s14, 0
      %p144 = por %p142, %p143
      %p145 = scmp.ne.s32.totalorder %s134, %s137
      %p146 = scmp.eq.s32.totalorder %s19, 1
      %p147 = por %p145, %p146
      %p148 = scmp.ne.s32.totalorder %s137, %s138
      %p149 = scmp.eq.s32.totalorder %s19, 0
      %p150 = por %p148, %p149
      %p151 = scmp.ne.s32.totalorder %s137, %s138
      %p152 = scmp.eq.s32.totalorder %s20, 1
      %p153 = por %p151, %p152
      %p155 = scmp.ne.s32.totalorder %s138, %s154
      %p156 = scmp.eq.s32.totalorder %s20, 0
      %p157 = por %p155, %p156
      %p158 = scmp.le.s32.totalorder 1, %s14
      %p159 = scmp.lt.s32.totalorder %s14, 3
      %p160 = pnand %p158, %p159
      %p161 = pneg %p160
      // Predicated region
      $region9: #{tpu_custom_call.1} parent=5 // pred_check
        _
      $region10: #{tpu_custom_call.1} parent=5 // pred_check_branch
        %163 = sbr.rel (%p160) target = $region12
      $region11: #{tpu_custom_call.1} parent=5 // pred_region
        %s164 = ssub.s32 %s14, 1
        // Predicated region
        $region13: #{tpu_custom_call.1} parent=11 // pred_check
          %p165 = pneg %p61
        $region14: #{tpu_custom_call.1} parent=11 // pred_check_branch
          %167 = sbr.rel (%p165) target = $region16
        $region15: #{tpu_custom_call.1} parent=11 // pred_region
          _
        $region16: #{tpu_custom_call.1} parent=11 // pred_fallthru
          _
        // Predicated region
        $region17: #{tpu_custom_call.1} parent=11 // pred_check
          %p168 = pneg %p82
        $region18: #{tpu_custom_call.1} parent=11 // pred_check_branch
          %170 = sbr.rel (%p168) target = $region20
        $region19: #{tpu_custom_call.1} parent=11 // pred_region
          _
        $region20: #{tpu_custom_call.1} parent=11 // pred_fallthru
          _
        // Predicated region
        $region21: #{tpu_custom_call.1} parent=11 // pred_check
          %p171 = pneg %p103
        $region22: #{tpu_custom_call.1} parent=11 // pred_check_branch
          %173 = sbr.rel (%p171) target = $region24
        $region23: #{tpu_custom_call.1} parent=11 // pred_region
          _
        $region24: #{tpu_custom_call.1} parent=11 // pred_fallthru
          _
        // Predicated region
        $region25: #{tpu_custom_call.1} parent=11 // pred_check
          %p174 = pneg %p124
        $region26: #{tpu_custom_call.1} parent=11 // pred_check_branch
          %176 = sbr.rel (%p174) target = $region28
        $region27: #{tpu_custom_call.1} parent=11 // pred_region
          _
        $region28: #{tpu_custom_call.1} parent=11 // pred_fallthru
          _
      $region12: #{tpu_custom_call.1} parent=5 // pred_fallthru
        _
      %p177 = scmp.lt.s32.totalorder %s14, 2
      // Predicated region
      $region29: #{tpu_custom_call.1} parent=5 // pred_check
        %p178 = pneg %p177
      $region30: #{tpu_custom_call.1} parent=5 // pred_check_branch
        %180 = sbr.rel (%p178) target = $region32
      $region31: #{tpu_custom_call.1} parent=5 // pred_region
        // Predicated region
        $region33: #{tpu_custom_call.1} parent=31 // pred_check
          %p181 = pneg %p34
        $region34: #{tpu_custom_call.1} parent=31 // pred_check_branch
          %183 = sbr.rel (%p181) target = $region36
        $region35: #{tpu_custom_call.1} parent=31 // pred_region
          %p184 = scmp.lt.s32.totalorder %s14, 1
          %s185 = scalar_select %p184, %s14, 1
          %s186 = smul.addr %s185, 8
          %s187 = smul.addr %s186, 8
          %s188 = scalar_lea.vmem %s0, %s187
        $region36: #{tpu_custom_call.1} parent=31 // pred_fallthru
          _
      $region32: #{tpu_custom_call.1} parent=5 // pred_fallthru
        _
      %p189 = scmp.le.s32.totalorder 1, %s14
      %p190 = scmp.lt.s32.totalorder %s14, 3
      %p191 = pnand %p189, %p190
      %p192 = pneg %p191
      // Predicated region
      $region37: #{tpu_custom_call.1} parent=5 // pred_check
        _
      $region38: #{tpu_custom_call.1} parent=5 // pred_check_branch
        %194 = sbr.rel (%p191) target = $region40
      $region39: #{tpu_custom_call.1} parent=5 // pred_region
        %s195 = ssub.s32 %s14, 1
        %p196 = scmp.lt.s32.totalorder %s19, 1
        %s197 = scalar_select %p196, %s19, 1
        %s198 = smul.addr %s197, 8
        %s199 = smul.addr %s198, 8
        %s200 = scalar_lea.vmem %s0, %s199
        %p201 = pneg %p40
        %p202 = pneg %p37
        %p203 = pneg %p61
        %p204 = pneg %p58
        %p205 = pneg %p82
        %p206 = pneg %p79
        %p207 = pneg %p103
        %p208 = pneg %p100
        %p209 = pneg %p124
        %p210 = pneg %p121
        %p211 = pneg %p150
        %p212 = pneg %p147
        %s213 = sand.u32 %s137, 1
        %s214 = scalar_lea.sflag [#allocation3], %s213
        %s215 = sand.u32 %s137, 1
        %s216 = smul.addr %s215, 128
        %s217 = scalar_lea.vmem [#allocation2], %s216
        %p218 = scmp.lt.s32.totalorder %s19, 1
        %s219 = scalar_select %p218, %s19, 1
        %s220 = smul.addr %s219, 8
        %s221 = smul.addr %s220, 8
        %s222 = scalar_lea.vmem %s0, %s221
        %v223 = vld [vmem:[%s1] sm:$0xff]
        %v224 = vld [vmem:[%s2] sm:$0xff]
        %v225 = vld [vmem:[%s2 + $0x8] sm:$0xff]
        %v226 = vld [vmem:[%s222] sm:$0xff]
        %v227 = vld [vmem:[%s222 + $0x8] sm:$0xff]
        %v228 = vld [vmem:[%s222 + $0x10] sm:$0xff]
        %v229 = vld [vmem:[%s222 + $0x18] sm:$0xff]
        %v230 = vld [vmem:[%s222 + $0x20] sm:$0xff]
        %v231 = vld [vmem:[%s222 + $0x28] sm:$0xff]
        %v232 = vld [vmem:[%s222 + $0x30] sm:$0xff]
        %v233 = vld [vmem:[%s222 + $0x38] sm:$0xff]
        %vm234 = vcmask 130048
        %v236 = vsel %vm234, %v223, 0
        %238 = vmatprep.subr.mxu0 %v227
        %239 = vmatpush1.msra.mxu0 %v226
        %240 = vmatprep.subr.mxu0 %v231
        %241 = vmatpush1.msra.mxu0 %v230
        %242 = vmatprep.subr.mxu0 0.0
        %243 = vmatpush1.msra.mxu0 0.0
        %244 = vmatprep.subr.mxu0 0.0
        %245 = vmatpush1.msra.mxu0 0.0
        %246 = vmatprep.subr.mxu0 0.0
        %247 = vmatpush1.msra.mxu0 0.0
        %248 = vmatprep.subr.mxu0 0.0
        %249 = vmatpush1.msra.mxu0 0.0
        %250 = vmatprep.subr.mxu0 0.0
        %251 = vmatpush1.msra.mxu0 0.0
        %252 = vmatprep.subr.mxu0 0.0
        %253 = vmatpush1.msra.mxu0 0.0
        %254 = vmatprep.subr.mxu0 0.0
        %255 = vmatpush1.msra.mxu0 0.0
        %256 = vmatprep.subr.mxu0 0.0
        %257 = vmatpush1.msra.mxu0 0.0
        %258 = vmatprep.subr.mxu0 0.0
        %259 = vmatpush1.msra.mxu0 0.0
        %260 = vmatprep.subr.mxu0 0.0
        %261 = vmatpush1.msra.mxu0 0.0
        %262 = vmatprep.subr.mxu0 0.0
        %263 = vmatpush1.msra.mxu0 0.0
        %264 = vmatprep.subr.mxu0 0.0
        %265 = vmatpush1.msra.mxu0 0.0
        %266 = vmatprep.subr.mxu0 0.0
        %267 = vmatpush1.msra.mxu0 0.0
        %268 = vmatprep.subr.mxu0 0.0
        %269 = vmatpush1.msra.mxu0 0.0
        %270 = vmatprep.subr.mxu0 0.0
        %271 = vmatpush1.msra.mxu0 0.0
        %272 = vmatprep.subr.mxu0 0.0
        %273 = vmatpush1.msra.mxu0 0.0
        %274 = vmatprep.subr.mxu0 0.0
        %275 = vmatpush1.msra.mxu0 0.0
        %276 = vmatprep.subr.mxu0 0.0
        %277 = vmatpush1.msra.mxu0 0.0
        %278 = vmatprep.subr.mxu0 0.0
        %279 = vmatpush1.msra.mxu0 0.0
        %280 = vmatprep.subr.mxu0 0.0
        %281 = vmatpush1.msra.mxu0 0.0
        %282 = vmatprep.subr.mxu0 0.0
        %283 = vmatpush1.msra.mxu0 0.0
        %284 = vmatprep.subr.mxu0 0.0
        %285 = vmatpush1.msra.mxu0 0.0
        %286 = vmatprep.subr.mxu0 0.0
        %287 = vmatpush1.msra.mxu0 0.0
        %288 = vmatprep.subr.mxu0 0.0
        %289 = vmatpush1.msra.mxu0 0.0
        %290 = vmatprep.subr.mxu0 0.0
        %291 = vmatpush1.msra.mxu0 0.0
        %292 = vmatprep.subr.mxu0 0.0
        %293 = vmatpush1.msra.mxu0 0.0
        %294 = vmatprep.subr.mxu0 0.0
        %295 = vmatpush1.msra.mxu0 0.0
        %296 = vmatprep.subr.mxu0 0.0
        %297 = vmatpush1.msra.mxu0 0.0
        %298 = vmatprep.subr.mxu0 0.0
        %299 = vmatpush1.msra.mxu0 0.0
        %300 = vmatprep.subr.mxu0 0.0
        %301 = vmatpush1.msra.mxu0 0.0
        %302 = vmatprep.mubr.f32.mxu0 0.0
        %303 = vmatmul.mubr.f32.gmra.mrb[0].mxu0 %v236
        %v304 = vpop.f32.mrb[0].mxu0
        %v305 = vadd.f32 0.0, %v304
        %v306 = vpop.f32.mrb[0].mxu0
        %v307 = vadd.f32 0.0, %v306
        %308 = vdwg.mxu0
        %309 = vmatprep.subr.mxu0 %v229
        %310 = vmatpush1.msra.mxu0 %v228
        %311 = vmatprep.subr.mxu0 %v233
        %312 = vmatpush1.msra.mxu0 %v232
        %313 = vmatprep.subr.mxu0 0.0
        %314 = vmatpush1.msra.mxu0 0.0
        %315 = vmatprep.subr.mxu0 0.0
        %316 = vmatpush1.msra.mxu0 0.0
        %317 = vmatprep.subr.mxu0 0.0
        %318 = vmatpush1.msra.mxu0 0.0
        %319 = vmatprep.subr.mxu0 0.0
        %320 = vmatpush1.msra.mxu0 0.0
        %321 = vmatprep.subr.mxu0 0.0
        %322 = vmatpush1.msra.mxu0 0.0
        %323 = vmatprep.subr.mxu0 0.0
        %324 = vmatpush1.msra.mxu0 0.0
        %325 = vmatprep.subr.mxu0 0.0
        %326 = vmatpush1.msra.mxu0 0.0
        %327 = vmatprep.subr.mxu0 0.0
        %328 = vmatpush1.msra.mxu0 0.0
        %329 = vmatprep.subr.mxu0 0.0
        %330 = vmatpush1.msra.mxu0 0.0
        %331 = vmatprep.subr.mxu0 0.0
        %332 = vmatpush1.msra.mxu0 0.0
        %333 = vmatprep.subr.mxu0 0.0
        %334 = vmatpush1.msra.mxu0 0.0
        %335 = vmatprep.subr.mxu0 0.0
        %336 = vmatpush1.msra.mxu0 0.0
        %337 = vmatprep.subr.mxu0 0.0
        %338 = vmatpush1.msra.mxu0 0.0
        %339 = vmatprep.subr.mxu0 0.0
        %340 = vmatpush1.msra.mxu0 0.0
        %341 = vmatprep.subr.mxu0 0.0
        %342 = vmatpush1.msra.mxu0 0.0
        %343 = vmatprep.subr.mxu0 0.0
        %344 = vmatpush1.msra.mxu0 0.0
        %345 = vmatprep.subr.mxu0 0.0
        %346 = vmatpush1.msra.mxu0 0.0
        %347 = vmatprep.subr.mxu0 0.0
        %348 = vmatpush1.msra.mxu0 0.0
        %349 = vmatprep.subr.mxu0 0.0
        %350 = vmatpush1.msra.mxu0 0.0
        %351 = vmatprep.subr.mxu0 0.0
        %352 = vmatpush1.msra.mxu0 0.0
        %353 = vmatprep.subr.mxu0 0.0
        %354 = vmatpush1.msra.mxu0 0.0
        %355 = vmatprep.subr.mxu0 0.0
        %356 = vmatpush1.msra.mxu0 0.0
        %357 = vmatprep.subr.mxu0 0.0
        %358 = vmatpush1.msra.mxu0 0.0
        %359 = vmatprep.subr.mxu0 0.0
        %360 = vmatpush1.msra.mxu0 0.0
        %361 = vmatprep.subr.mxu0 0.0
        %362 = vmatpush1.msra.mxu0 0.0
        %363 = vmatprep.subr.mxu0 0.0
        %364 = vmatpush1.msra.mxu0 0.0
        %365 = vmatprep.subr.mxu0 0.0
        %366 = vmatpush1.msra.mxu0 0.0
        %367 = vmatprep.subr.mxu0 0.0
        %368 = vmatpush1.msra.mxu0 0.0
        %369 = vmatprep.subr.mxu0 0.0
        %370 = vmatpush1.msra.mxu0 0.0
        %371 = vmatprep.subr.mxu0 0.0
        %372 = vmatpush1.msra.mxu0 0.0
        %373 = vmatprep.mubr.f32.mxu0 0.0
        %374 = vmatmul.mubr.f32.gmra.mrb[0].mxu0 %v236
        %v375 = vpop.f32.mrb[0].mxu0
        %v376 = vadd.f32 0.0, %v375
        %v377 = vpop.f32.mrb[0].mxu0
        %v378 = vadd.f32 0.0, %v377
        %379 = vdwg.mxu0
        %v380 = vld [vmem:[%s3] sm:$0xff]
        %382 = vset.pattern.permute.xlu0 0
        %383 = vperm.xlu0 %382, %v380
        %v384 = vpop.permute.xlu0 %383
        %v386 = vmul.f32 %v384, %v305
        %s387 = scalar_lea.vmem %s3, 8
        %v388 = vld [vmem:[%s387] sm:$0xff]
        %390 = vset.pattern.permute.xlu0 0
        %391 = vperm.xlu0 %390, %v388
        %v392 = vpop.permute.xlu0 %391
        %v394 = vmul.f32 %v392, %v307
        %v395 = vadd.f32 %v386, %v394
        %s396 = scalar_lea.vmem %s3, 16
        %v397 = vld [vmem:[%s396] sm:$0xff]
        %399 = vset.pattern.permute.xlu0 0
        %400 = vperm.xlu0 %399, %v397
        %v401 = vpop.permute.xlu0 %400
        %v403 = vmul.f32 %v401, %v376
        %v404 = vadd.f32 %v395, %v403
        %s405 = scalar_lea.vmem %s3, 24
        %v406 = vld [vmem:[%s405] sm:$0xff]
        %408 = vset.pattern.permute.xlu0 0
        %409 = vperm.xlu0 %408, %v406
        %v410 = vpop.permute.xlu0 %409
        %v412 = vmul.f32 %v410, %v378
        %v413 = vadd.f32 %v404, %v412
        %s414 = scalar_lea.vmem %s3, 32
        %v415 = vld [vmem:[%s414] sm:$0xff]
        %417 = vset.pattern.permute.xlu0 0
        %418 = vperm.xlu0 %417, %v415
        %v419 = vpop.permute.xlu0 %418
        %v421 = vmul.f32 %v419, %v305
        %s422 = scalar_lea.vmem %s3, 40
        %v423 = vld [vmem:[%s422] sm:$0xff]
        %425 = vset.pattern.permute.xlu0 0
        %426 = vperm.xlu0 %425, %v423
        %v427 = vpop.permute.xlu0 %426
        %v429 = vmul.f32 %v427, %v307
        %v430 = vadd.f32 %v421, %v429
        %s431 = scalar_lea.vmem %s3, 48
        %v432 = vld [vmem:[%s431] sm:$0xff]
        %434 = vset.pattern.permute.xlu0 0
        %435 = vperm.xlu0 %434, %v432
        %v436 = vpop.permute.xlu0 %435
        %v438 = vmul.f32 %v436, %v376
        %v439 = vadd.f32 %v430, %v438
        %s440 = scalar_lea.vmem %s3, 56
        %v441 = vld [vmem:[%s440] sm:$0xff]
        %443 = vset.pattern.permute.xlu0 0
        %444 = vperm.xlu0 %443, %v441
        %v445 = vpop.permute.xlu0 %444
        %v447 = vmul.f32 %v445, %v378
        %v448 = vadd.f32 %v439, %v447
        %s449 = scalar_lea.vmem %s3, 64
        %v450 = vld [vmem:[%s449] sm:$0xff]
        %452 = vset.pattern.permute.xlu0 0
        %453 = vperm.xlu0 %452, %v450
        %v454 = vpop.permute.xlu0 %453
        %v456 = vmul.f32 %v454, %v305
        %s457 = scalar_lea.vmem %s3, 72
        %v458 = vld [vmem:[%s457] sm:$0xff]
        %460 = vset.pattern.permute.xlu0 0
        %461 = vperm.xlu0 %460, %v458
        %v462 = vpop.permute.xlu0 %461
        %v464 = vmul.f32 %v462, %v307
        %v465 = vadd.f32 %v456, %v464
        %s466 = scalar_lea.vmem %s3, 80
        %v467 = vld [vmem:[%s466] sm:$0xff]
        %469 = vset.pattern.permute.xlu0 0
        %470 = vperm.xlu0 %469, %v467
        %v471 = vpop.permute.xlu0 %470
        %v473 = vmul.f32 %v471, %v376
        %v474 = vadd.f32 %v465, %v473
        %s475 = scalar_lea.vmem %s3, 88
        %v476 = vld [vmem:[%s475] sm:$0xff]
        %478 = vset.pattern.permute.xlu0 0
        %479 = vperm.xlu0 %478, %v476
        %v480 = vpop.permute.xlu0 %479
        %v482 = vmul.f32 %v480, %v378
        %v483 = vadd.f32 %v474, %v482
        %s484 = scalar_lea.vmem %s3, 96
        %v485 = vld [vmem:[%s484] sm:$0xff]
        %487 = vset.pattern.permute.xlu0 0
        %488 = vperm.xlu0 %487, %v485
        %v489 = vpop.permute.xlu0 %488
        %v491 = vmul.f32 %v489, %v305
        %s492 = scalar_lea.vmem %s3, 104
        %v493 = vld [vmem:[%s492] sm:$0xff]
        %495 = vset.pattern.permute.xlu0 0
        %496 = vperm.xlu0 %495, %v493
        %v497 = vpop.permute.xlu0 %496
        %v499 = vmul.f32 %v497, %v307
        %v500 = vadd.f32 %v491, %v499
        %s501 = scalar_lea.vmem %s3, 112
        %v502 = vld [vmem:[%s501] sm:$0xff]
        %504 = vset.pattern.permute.xlu0 0
        %505 = vperm.xlu0 %504, %v502
        %v506 = vpop.permute.xlu0 %505
        %v508 = vmul.f32 %v506, %v376
        %v509 = vadd.f32 %v500, %v508
        %s510 = scalar_lea.vmem %s3, 120
        %v511 = vld [vmem:[%s510] sm:$0xff]
        %513 = vset.pattern.permute.xlu0 0
        %514 = vperm.xlu0 %513, %v511
        %v515 = vpop.permute.xlu0 %514
        %v517 = vmul.f32 %v515, %v378
        %v518 = vadd.f32 %v509, %v517
        %s519 = scalar_lea.vmem %s3, 128
        %v520 = vld [vmem:[%s519] sm:$0xff]
        %522 = vset.pattern.permute.xlu0 0
        %523 = vperm.xlu0 %522, %v520
        %v524 = vpop.permute.xlu0 %523
        %v526 = vmul.f32 %v524, %v305
        %s527 = scalar_lea.vmem %s3, 136
        %v528 = vld [vmem:[%s527] sm:$0xff]
        %530 = vset.pattern.permute.xlu0 0
        %531 = vperm.xlu0 %530, %v528
        %v532 = vpop.permute.xlu0 %531
        %v534 = vmul.f32 %v532, %v307
        %v535 = vadd.f32 %v526, %v534
        %s536 = scalar_lea.vmem %s3, 144
        %v537 = vld [vmem:[%s536] sm:$0xff]
        %539 = vset.pattern.permute.xlu0 0
        %540 = vperm.xlu0 %539, %v537
        %v541 = vpop.permute.xlu0 %540
        %v543 = vmul.f32 %v541, %v376
        %v544 = vadd.f32 %v535, %v543
        %s545 = scalar_lea.vmem %s3, 152
        %v546 = vld [vmem:[%s545] sm:$0xff]
        %548 = vset.pattern.permute.xlu0 0
        %549 = vperm.xlu0 %548, %v546
        %v550 = vpop.permute.xlu0 %549
        %v552 = vmul.f32 %v550, %v378
        %v553 = vadd.f32 %v544, %v552
        %s554 = scalar_lea.vmem %s3, 160
        %v555 = vld [vmem:[%s554] sm:$0xff]
        %557 = vset.pattern.permute.xlu0 0
        %558 = vperm.xlu0 %557, %v555
        %v559 = vpop.permute.xlu0 %558
        %v561 = vmul.f32 %v559, %v305
        %s562 = scalar_lea.vmem %s3, 168
        %v563 = vld [vmem:[%s562] sm:$0xff]
        %565 = vset.pattern.permute.xlu0 0
        %566 = vperm.xlu0 %565, %v563
        %v567 = vpop.permute.xlu0 %566
        %v569 = vmul.f32 %v567, %v307
        %v570 = vadd.f32 %v561, %v569
        %s571 = scalar_lea.vmem %s3, 176
        %v572 = vld [vmem:[%s571] sm:$0xff]
        %574 = vset.pattern.permute.xlu0 0
        %575 = vperm.xlu0 %574, %v572
        %v576 = vpop.permute.xlu0 %575
        %v578 = vmul.f32 %v576, %v376
        %v579 = vadd.f32 %v570, %v578
        %s580 = scalar_lea.vmem %s3, 184
        %v581 = vld [vmem:[%s580] sm:$0xff]
        %583 = vset.pattern.permute.xlu0 0
        %584 = vperm.xlu0 %583, %v581
        %v585 = vpop.permute.xlu0 %584
        %v587 = vmul.f32 %v585, %v378
        %v588 = vadd.f32 %v579, %v587
        %s589 = scalar_lea.vmem %s3, 192
        %v590 = vld [vmem:[%s589] sm:$0xff]
        %592 = vset.pattern.permute.xlu0 0
        %593 = vperm.xlu0 %592, %v590
        %v594 = vpop.permute.xlu0 %593
        %v596 = vmul.f32 %v594, %v305
        %s597 = scalar_lea.vmem %s3, 200
        %v598 = vld [vmem:[%s597] sm:$0xff]
        %600 = vset.pattern.permute.xlu0 0
        %601 = vperm.xlu0 %600, %v598
        %v602 = vpop.permute.xlu0 %601
        %v604 = vmul.f32 %v602, %v307
        %v605 = vadd.f32 %v596, %v604
        %s606 = scalar_lea.vmem %s3, 208
        %v607 = vld [vmem:[%s606] sm:$0xff]
        %609 = vset.pattern.permute.xlu0 0
        %610 = vperm.xlu0 %609, %v607
        %v611 = vpop.permute.xlu0 %610
        %v613 = vmul.f32 %v611, %v376
        %v614 = vadd.f32 %v605, %v613
        %s615 = scalar_lea.vmem %s3, 216
        %v616 = vld [vmem:[%s615] sm:$0xff]
        %618 = vset.pattern.permute.xlu0 0
        %619 = vperm.xlu0 %618, %v616
        %v620 = vpop.permute.xlu0 %619
        %v622 = vmul.f32 %v620, %v378
        %v623 = vadd.f32 %v614, %v622
        %s624 = scalar_lea.vmem %s3, 224
        %v625 = vld [vmem:[%s624] sm:$0xff]
        %627 = vset.pattern.permute.xlu0 0
        %628 = vperm.xlu0 %627, %v625
        %v629 = vpop.permute.xlu0 %628
        %v631 = vmul.f32 %v629, %v305
        %s632 = scalar_lea.vmem %s3, 232
        %v633 = vld [vmem:[%s632] sm:$0xff]
        %635 = vset.pattern.permute.xlu0 0
        %636 = vperm.xlu0 %635, %v633
        %v637 = vpop.permute.xlu0 %636
        %v639 = vmul.f32 %v637, %v307
        %v640 = vadd.f32 %v631, %v639
        %s641 = scalar_lea.vmem %s3, 240
        %v642 = vld [vmem:[%s641] sm:$0xff]
        %644 = vset.pattern.permute.xlu0 0
        %645 = vperm.xlu0 %644, %v642
        %v646 = vpop.permute.xlu0 %645
        %v648 = vmul.f32 %v646, %v376
        %v649 = vadd.f32 %v640, %v648
        %s650 = scalar_lea.vmem %s3, 248
        %v651 = vld [vmem:[%s650] sm:$0xff]
        %653 = vset.pattern.permute.xlu0 0
        %654 = vperm.xlu0 %653, %v651
        %v655 = vpop.permute.xlu0 %654
        %v657 = vmul.f32 %v655, %v378
        %v658 = vadd.f32 %v649, %v657
        %vm659 = vcmask 64512
        %v661 = vsel %vm659, %v224, 0
        %v664 = vsel %vm659, %v225, 0
        %666 = vmatprep.subr.mxu0 %v448
        %667 = vmatpush1.msra.mxu0 %v413
        %668 = vmatprep.subr.mxu0 0.0
        %669 = vmatpush1.msra.mxu0 0.0
        %670 = vmatprep.subr.mxu0 0.0
        %671 = vmatpush1.msra.mxu0 0.0
        %672 = vmatprep.subr.mxu0 0.0
        %673 = vmatpush1.msra.mxu0 0.0
        %674 = vmatprep.subr.mxu0 0.0
        %675 = vmatpush1.msra.mxu0 0.0
        %676 = vmatprep.subr.mxu0 0.0
        %677 = vmatpush1.msra.mxu0 0.0
        %678 = vmatprep.subr.mxu0 0.0
        %679 = vmatpush1.msra.mxu0 0.0
        %680 = vmatprep.subr.mxu0 0.0
        %681 = vmatpush1.msra.mxu0 0.0
        %682 = vmatprep.subr.mxu0 0.0
        %683 = vmatpush1.msra.mxu0 0.0
        %684 = vmatprep.subr.mxu0 0.0
        %685 = vmatpush1.msra.mxu0 0.0
        %686 = vmatprep.subr.mxu0 0.0
        %687 = vmatpush1.msra.mxu0 0.0
        %688 = vmatprep.subr.mxu0 0.0
        %689 = vmatpush1.msra.mxu0 0.0
        %690 = vmatprep.subr.mxu0 0.0
        %691 = vmatpush1.msra.mxu0 0.0
        %692 = vmatprep.subr.mxu0 0.0
        %693 = vmatpush1.msra.mxu0 0.0
        %694 = vmatprep.subr.mxu0 0.0
        %695 = vmatpush1.msra.mxu0 0.0
        %696 = vmatprep.subr.mxu0 0.0
        %697 = vmatpush1.msra.mxu0 0.0
        %698 = vmatprep.subr.mxu0 0.0
        %699 = vmatpush1.msra.mxu0 0.0
        %700 = vmatprep.subr.mxu0 0.0
        %701 = vmatpush1.msra.mxu0 0.0
        %702 = vmatprep.subr.mxu0 0.0
        %703 = vmatpush1.msra.mxu0 0.0
        %704 = vmatprep.subr.mxu0 0.0
        %705 = vmatpush1.msra.mxu0 0.0
        %706 = vmatprep.subr.mxu0 0.0
        %707 = vmatpush1.msra.mxu0 0.0
        %708 = vmatprep.subr.mxu0 0.0
        %709 = vmatpush1.msra.mxu0 0.0
        %710 = vmatprep.subr.mxu0 0.0
        %711 = vmatpush1.msra.mxu0 0.0
        %712 = vmatprep.subr.mxu0 0.0
        %713 = vmatpush1.msra.mxu0 0.0
        %714 = vmatprep.subr.mxu0 0.0
        %715 = vmatpush1.msra.mxu0 0.0
        %716 = vmatprep.subr.mxu0 0.0
        %717 = vmatpush1.msra.mxu0 0.0
        %718 = vmatprep.subr.mxu0 0.0
        %719 = vmatpush1.msra.mxu0 0.0
        %720 = vmatprep.subr.mxu0 0.0
        %721 = vmatpush1.msra.mxu0 0.0
        %722 = vmatprep.subr.mxu0 0.0
        %723 = vmatpush1.msra.mxu0 0.0
        %724 = vmatprep.subr.mxu0 0.0
        %725 = vmatpush1.msra.mxu0 0.0
        %726 = vmatprep.subr.mxu0 0.0
        %727 = vmatpush1.msra.mxu0 0.0
        %728 = vmatprep.subr.mxu0 0.0
        %729 = vmatpush1.msra.mxu0 0.0
        %730 = vmatprep.mubr.f32.mxu0 0.0
        %731 = vmatmul.mubr.f32.gmra.mrb[0].mxu0 %v661
        %v732 = vpop.f32.mrb[0].mxu0
        %v733 = vadd.f32 0.0, %v732
        %v734 = vpop.f32.mrb[0].mxu0
        %v735 = vadd.f32 0.0, %v734
        %736 = vmatprep.mubr.f32.mxu0 0.0
        %737 = vmatmul.mubr.f32.gmra.mrb[0].mxu0 %v664
        %v738 = vpop.f32.mrb[0].mxu0
        %v739 = vadd.f32 0.0, %v738
        %v740 = vpop.f32.mrb[0].mxu0
        %v741 = vadd.f32 0.0, %v740
        %742 = vdwg.mxu0
        %743 = vmatprep.subr.mxu0 %v518
        %744 = vmatpush1.msra.mxu0 %v483
        %745 = vmatprep.subr.mxu0 0.0
        %746 = vmatpush1.msra.mxu0 0.0
        %747 = vmatprep.subr.mxu0 0.0
        %748 = vmatpush1.msra.mxu0 0.0
        %749 = vmatprep.subr.mxu0 0.0
        %750 = vmatpush1.msra.mxu0 0.0
        %751 = vmatprep.subr.mxu0 0.0
        %752 = vmatpush1.msra.mxu0 0.0
        %753 = vmatprep.subr.mxu0 0.0
        %754 = vmatpush1.msra.mxu0 0.0
        %755 = vmatprep.subr.mxu0 0.0
        %756 = vmatpush1.msra.mxu0 0.0
        %757 = vmatprep.subr.mxu0 0.0
        %758 = vmatpush1.msra.mxu0 0.0
        %759 = vmatprep.subr.mxu0 0.0
        %760 = vmatpush1.msra.mxu0 0.0
        %761 = vmatprep.subr.mxu0 0.0
        %762 = vmatpush1.msra.mxu0 0.0
        %763 = vmatprep.subr.mxu0 0.0
        %764 = vmatpush1.msra.mxu0 0.0
        %765 = vmatprep.subr.mxu0 0.0
        %766 = vmatpush1.msra.mxu0 0.0
        %767 = vmatprep.subr.mxu0 0.0
        %768 = vmatpush1.msra.mxu0 0.0
        %769 = vmatprep.subr.mxu0 0.0
        %770 = vmatpush1.msra.mxu0 0.0
        %771 = vmatprep.subr.mxu0 0.0
        %772 = vmatpush1.msra.mxu0 0.0
        %773 = vmatprep.subr.mxu0 0.0
        %774 = vmatpush1.msra.mxu0 0.0
        %775 = vmatprep.subr.mxu0 0.0
        %776 = vmatpush1.msra.mxu0 0.0
        %777 = vmatprep.subr.mxu0 0.0
        %778 = vmatpush1.msra.mxu0 0.0
        %779 = vmatprep.subr.mxu0 0.0
        %780 = vmatpush1.msra.mxu0 0.0
        %781 = vmatprep.subr.mxu0 0.0
        %782 = vmatpush1.msra.mxu0 0.0
        %783 = vmatprep.subr.mxu0 0.0
        %784 = vmatpush1.msra.mxu0 0.0
        %785 = vmatprep.subr.mxu0 0.0
        %786 = vmatpush1.msra.mxu0 0.0
        %787 = vmatprep.subr.mxu0 0.0
        %788 = vmatpush1.msra.mxu0 0.0
        %789 = vmatprep.subr.mxu0 0.0
        %790 = vmatpush1.msra.mxu0 0.0
        %791 = vmatprep.subr.mxu0 0.0
        %792 = vmatpush1.msra.mxu0 0.0
        %793 = vmatprep.subr.mxu0 0.0
        %794 = vmatpush1.msra.mxu0 0.0
        %795 = vmatprep.subr.mxu0 0.0
        %796 = vmatpush1.msra.mxu0 0.0
        %797 = vmatprep.subr.mxu0 0.0
        %798 = vmatpush1.msra.mxu0 0.0
        %799 = vmatprep.subr.mxu0 0.0
        %800 = vmatpush1.msra.mxu0 0.0
        %801 = vmatprep.subr.mxu0 0.0
        %802 = vmatpush1.msra.mxu0 0.0
        %803 = vmatprep.subr.mxu0 0.0
        %804 = vmatpush1.msra.mxu0 0.0
        %805 = vmatprep.subr.mxu0 0.0
        %806 = vmatpush1.msra.mxu0 0.0
        %807 = vmatprep.mubr.f32.mxu0 0.0
        %808 = vmatmul.mubr.f32.gmra.mrb[0].mxu0 %v661
        %v809 = vpop.f32.mrb[0].mxu0
        %v810 = vadd.f32 0.0, %v809
        %v811 = vpop.f32.mrb[0].mxu0
        %v812 = vadd.f32 0.0, %v811
        %813 = vmatprep.mubr.f32.mxu0 0.0
        %814 = vmatmul.mubr.f32.gmra.mrb[0].mxu0 %v664
        %v815 = vpop.f32.mrb[0].mxu0
        %v816 = vadd.f32 0.0, %v815
        %v817 = vpop.f32.mrb[0].mxu0
        %v818 = vadd.f32 0.0, %v817
        %819 = vdwg.mxu0
        %820 = vmatprep.subr.mxu0 %v588
        %821 = vmatpush1.msra.mxu0 %v553
        %822 = vmatprep.subr.mxu0 0.0
        %823 = vmatpush1.msra.mxu0 0.0
        %824 = vmatprep.subr.mxu0 0.0
        %825 = vmatpush1.msra.mxu0 0.0
        %826 = vmatprep.subr.mxu0 0.0
        %827 = vmatpush1.msra.mxu0 0.0
        %828 = vmatprep.subr.mxu0 0.0
        %829 = vmatpush1.msra.mxu0 0.0
        %830 = vmatprep.subr.mxu0 0.0
        %831 = vmatpush1.msra.mxu0 0.0
        %832 = vmatprep.subr.mxu0 0.0
        %833 = vmatpush1.msra.mxu0 0.0
        %834 = vmatprep.subr.mxu0 0.0
        %835 = vmatpush1.msra.mxu0 0.0
        %836 = vmatprep.subr.mxu0 0.0
        %837 = vmatpush1.msra.mxu0 0.0
        %838 = vmatprep.subr.mxu0 0.0
        %839 = vmatpush1.msra.mxu0 0.0
        %840 = vmatprep.subr.mxu0 0.0
        %841 = vmatpush1.msra.mxu0 0.0
        %842 = vmatprep.subr.mxu0 0.0
        %843 = vmatpush1.msra.mxu0 0.0
        %844 = vmatprep.subr.mxu0 0.0
        %845 = vmatpush1.msra.mxu0 0.0
        %846 = vmatprep.subr.mxu0 0.0
        %847 = vmatpush1.msra.mxu0 0.0
        %848 = vmatprep.subr.mxu0 0.0
        %849 = vmatpush1.msra.mxu0 0.0
        %850 = vmatprep.subr.mxu0 0.0
        %851 = vmatpush1.msra.mxu0 0.0
        %852 = vmatprep.subr.mxu0 0.0
        %853 = vmatpush1.msra.mxu0 0.0
        %854 = vmatprep.subr.mxu0 0.0
        %855 = vmatpush1.msra.mxu0 0.0
        %856 = vmatprep.subr.mxu0 0.0
        %857 = vmatpush1.msra.mxu0 0.0
        %858 = vmatprep.subr.mxu0 0.0
        %859 = vmatpush1.msra.mxu0 0.0
        %860 = vmatprep.subr.mxu0 0.0
        %861 = vmatpush1.msra.mxu0 0.0
        %862 = vmatprep.subr.mxu0 0.0
        %863 = vmatpush1.msra.mxu0 0.0
        %864 = vmatprep.subr.mxu0 0.0
        %865 = vmatpush1.msra.mxu0 0.0
        %866 = vmatprep.subr.mxu0 0.0
        %867 = vmatpush1.msra.mxu0 0.0
        %868 = vmatprep.subr.mxu0 0.0
        %869 = vmatpush1.msra.mxu0 0.0
        %870 = vmatprep.subr.mxu0 0.0
        %871 = vmatpush1.msra.mxu0 0.0
        %872 = vmatprep.subr.mxu0 0.0
        %873 = vmatpush1.msra.mxu0 0.0
        %874 = vmatprep.subr.mxu0 0.0
        %875 = vmatpush1.msra.mxu0 0.0
        %876 = vmatprep.subr.mxu0 0.0
        %877 = vmatpush1.msra.mxu0 0.0
        %878 = vmatprep.subr.mxu0 0.0
        %879 = vmatpush1.msra.mxu0 0.0
        %880 = vmatprep.subr.mxu0 0.0
        %881 = vmatpush1.msra.mxu0 0.0
        %882 = vmatprep.subr.mxu0 0.0
        %883 = vmatpush1.msra.mxu0 0.0
        %884 = vmatprep.mubr.f32.mxu0 0.0
        %885 = vmatmul.mubr.f32.gmra.mrb[0].mxu0 %v661
        %v886 = vpop.f32.mrb[0].mxu0
        %v887 = vadd.f32 0.0, %v886
        %v888 = vpop.f32.mrb[0].mxu0
        %v889 = vadd.f32 0.0, %v888
        %890 = vmatprep.mubr.f32.mxu0 0.0
        %891 = vmatmul.mubr.f32.gmra.mrb[0].mxu0 %v664
        %v892 = vpop.f32.mrb[0].mxu0
        %v893 = vadd.f32 0.0, %v892
        %v894 = vpop.f32.mrb[0].mxu0
        %v895 = vadd.f32 0.0, %v894
        %896 = vdwg.mxu0
        %897 = vmatprep.subr.mxu0 %v658
        %898 = vmatpush1.msra.mxu0 %v623
        %899 = vmatprep.subr.mxu0 0.0
        %900 = vmatpush1.msra.mxu0 0.0
        %901 = vmatprep.subr.mxu0 0.0
        %902 = vmatpush1.msra.mxu0 0.0
        %903 = vmatprep.subr.mxu0 0.0
        %904 = vmatpush1.msra.mxu0 0.0
        %905 = vmatprep.subr.mxu0 0.0
        %906 = vmatpush1.msra.mxu0 0.0
        %907 = vmatprep.subr.mxu0 0.0
        %908 = vmatpush1.msra.mxu0 0.0
        %909 = vmatprep.subr.mxu0 0.0
        %910 = vmatpush1.msra.mxu0 0.0
        %911 = vmatprep.subr.mxu0 0.0
        %912 = vmatpush1.msra.mxu0 0.0
        %913 = vmatprep.subr.mxu0 0.0
        %914 = vmatpush1.msra.mxu0 0.0
        %915 = vmatprep.subr.mxu0 0.0
        %916 = vmatpush1.msra.mxu0 0.0
        %917 = vmatprep.subr.mxu0 0.0
        %918 = vmatpush1.msra.mxu0 0.0
        %919 = vmatprep.subr.mxu0 0.0
        %920 = vmatpush1.msra.mxu0 0.0
        %921 = vmatprep.subr.mxu0 0.0
        %922 = vmatpush1.msra.mxu0 0.0
        %923 = vmatprep.subr.mxu0 0.0
        %924 = vmatpush1.msra.mxu0 0.0
        %925 = vmatprep.subr.mxu0 0.0
        %926 = vmatpush1.msra.mxu0 0.0
        %927 = vmatprep.subr.mxu0 0.0
        %928 = vmatpush1.msra.mxu0 0.0
        %929 = vmatprep.subr.mxu0 0.0
        %930 = vmatpush1.msra.mxu0 0.0
        %931 = vmatprep.subr.mxu0 0.0
        %932 = vmatpush1.msra.mxu0 0.0
        %933 = vmatprep.subr.mxu0 0.0
        %934 = vmatpush1.msra.mxu0 0.0
        %935 = vmatprep.subr.mxu0 0.0
        %936 = vmatpush1.msra.mxu0 0.0
        %937 = vmatprep.subr.mxu0 0.0
        %938 = vmatpush1.msra.mxu0 0.0
        %939 = vmatprep.subr.mxu0 0.0
        %940 = vmatpush1.msra.mxu0 0.0
        %941 = vmatprep.subr.mxu0 0.0
        %942 = vmatpush1.msra.mxu0 0.0
        %943 = vmatprep.subr.mxu0 0.0
        %944 = vmatpush1.msra.mxu0 0.0
        %945 = vmatprep.subr.mxu0 0.0
        %946 = vmatpush1.msra.mxu0 0.0
        %947 = vmatprep.subr.mxu0 0.0
        %948 = vmatpush1.msra.mxu0 0.0
        %949 = vmatprep.subr.mxu0 0.0
        %950 = vmatpush1.msra.mxu0 0.0
        %951 = vmatprep.subr.mxu0 0.0
        %952 = vmatpush1.msra.mxu0 0.0
        %953 = vmatprep.subr.mxu0 0.0
        %954 = vmatpush1.msra.mxu0 0.0
        %955 = vmatprep.subr.mxu0 0.0
        %956 = vmatpush1.msra.mxu0 0.0
        %957 = vmatprep.subr.mxu0 0.0
        %958 = vmatpush1.msra.mxu0 0.0
        %959 = vmatprep.subr.mxu0 0.0
        %960 = vmatpush1.msra.mxu0 0.0
        %961 = vmatprep.mubr.f32.mxu0 0.0
        %962 = vmatmul.mubr.f32.gmra.mrb[0].mxu0 %v661
        %v963 = vpop.f32.mrb[0].mxu0
        %v964 = vadd.f32 0.0, %v963
        %v965 = vpop.f32.mrb[0].mxu0
        %v966 = vadd.f32 0.0, %v965
        %967 = vmatprep.mubr.f32.mxu0 0.0
        %968 = vmatmul.mubr.f32.gmra.mrb[0].mxu0 %v664
        %v969 = vpop.f32.mrb[0].mxu0
        %v970 = vadd.f32 0.0, %v969
        %v971 = vpop.f32.mrb[0].mxu0
        %v972 = vadd.f32 0.0, %v971
        %973 = vdwg.mxu0
        %v974 = vmax.f32 %v733, 0.0
        %v975 = vmax.f32 %v735, 0.0
        %v976 = vmax.f32 %v810, 0.0
        %v977 = vmax.f32 %v812, 0.0
        %v978 = vmax.f32 %v887, 0.0
        %v979 = vmax.f32 %v889, 0.0
        %v980 = vmax.f32 %v964, 0.0
        %v981 = vmax.f32 %v966, 0.0
        %v982 = vmax.f32 %v739, 0.0
        %v983 = vmax.f32 %v741, 0.0
        %v984 = vmax.f32 %v816, 0.0
        %v985 = vmax.f32 %v818, 0.0
        %v986 = vmax.f32 %v893, 0.0
        %v987 = vmax.f32 %v895, 0.0
        %v988 = vmax.f32 %v970, 0.0
        %v989 = vmax.f32 %v972, 0.0
        %990 = vmatprep.subr.mxu0 %v975
        %991 = vmatpush1.msra.mxu0 %v974
        %992 = vmatprep.subr.mxu0 %v983
        %993 = vmatpush1.msra.mxu0 %v982
        %994 = vmatprep.subr.mxu0 0.0
        %995 = vmatpush1.msra.mxu0 0.0
        %996 = vmatprep.subr.mxu0 0.0
        %997 = vmatpush1.msra.mxu0 0.0
        %998 = vmatprep.subr.mxu0 0.0
        %999 = vmatpush1.msra.mxu0 0.0
        %1000 = vmatprep.subr.mxu0 0.0
        %1001 = vmatpush1.msra.mxu0 0.0
        %1002 = vmatprep.subr.mxu0 0.0
        %1003 = vmatpush1.msra.mxu0 0.0
        %1004 = vmatprep.subr.mxu0 0.0
        %1005 = vmatpush1.msra.mxu0 0.0
        %1006 = vmatprep.subr.mxu0 0.0
        %1007 = vmatpush1.msra.mxu0 0.0
        %1008 = vmatprep.subr.mxu0 0.0
        %1009 = vmatpush1.msra.mxu0 0.0
        %1010 = vmatprep.subr.mxu0 0.0
        %1011 = vmatpush1.msra.mxu0 0.0
        %1012 = vmatprep.subr.mxu0 0.0
        %1013 = vmatpush1.msra.mxu0 0.0
        %1014 = vmatprep.subr.mxu0 0.0
        %1015 = vmatpush1.msra.mxu0 0.0
        %1016 = vmatprep.subr.mxu0 0.0
        %1017 = vmatpush1.msra.mxu0 0.0
        %1018 = vmatprep.subr.mxu0 0.0
        %1019 = vmatpush1.msra.mxu0 0.0
        %1020 = vmatprep.subr.mxu0 0.0
        %1021 = vmatpush1.msra.mxu0 0.0
        %1022 = vmatprep.subr.mxu0 0.0
        %1023 = vmatpush1.msra.mxu0 0.0
        %1024 = vmatprep.subr.mxu0 0.0
        %1025 = vmatpush1.msra.mxu0 0.0
        %1026 = vmatprep.subr.mxu0 0.0
        %1027 = vmatpush1.msra.mxu0 0.0
        %1028 = vmatprep.subr.mxu0 0.0
        %1029 = vmatpush1.msra.mxu0 0.0
        %1030 = vmatprep.subr.mxu0 0.0
        %1031 = vmatpush1.msra.mxu0 0.0
        %1032 = vmatprep.subr.mxu0 0.0
        %1033 = vmatpush1.msra.mxu0 0.0
        %1034 = vmatprep.subr.mxu0 0.0
        %1035 = vmatpush1.msra.mxu0 0.0
        %1036 = vmatprep.subr.mxu0 0.0
        %1037 = vmatpush1.msra.mxu0 0.0
        %1038 = vmatprep.subr.mxu0 0.0
        %1039 = vmatpush1.msra.mxu0 0.0
        %1040 = vmatprep.subr.mxu0 0.0
        %1041 = vmatpush1.msra.mxu0 0.0
        %1042 = vmatprep.subr.mxu0 0.0
        %1043 = vmatpush1.msra.mxu0 0.0
        %1044 = vmatprep.subr.mxu0 0.0
        %1045 = vmatpush1.msra.mxu0 0.0
        %1046 = vmatprep.subr.mxu0 0.0
        %1047 = vmatpush1.msra.mxu0 0.0
        %1048 = vmatprep.subr.mxu0 0.0
        %1049 = vmatpush1.msra.mxu0 0.0
        %1050 = vmatprep.subr.mxu0 0.0
        %1051 = vmatpush1.msra.mxu0 0.0
        %1052 = vmatprep.subr.mxu0 0.0
        %1053 = vmatpush1.msra.mxu0 0.0
        %1054 = vmatprep.mubr.f32.mxu0 0.0
        %1055 = vmatmul.mubr.f32.gmra.mrb[0].mxu0 %v236
        %v1056 = vpop.f32.mrb[0].mxu0
        %v1057 = vadd.f32 0.0, %v1056
        %v1058 = vpop.f32.mrb[0].mxu0
        %v1059 = vadd.f32 0.0, %v1058
        %1060 = vdwg.mxu0
        %1061 = vmatprep.subr.mxu0 %v977
        %1062 = vmatpush1.msra.mxu0 %v976
        %1063 = vmatprep.subr.mxu0 %v985
        %1064 = vmatpush1.msra.mxu0 %v984
        %1065 = vmatprep.subr.mxu0 0.0
        %1066 = vmatpush1.msra.mxu0 0.0
        %1067 = vmatprep.subr.mxu0 0.0
        %1068 = vmatpush1.msra.mxu0 0.0
        %1069 = vmatprep.subr.mxu0 0.0
        %1070 = vmatpush1.msra.mxu0 0.0
        %1071 = vmatprep.subr.mxu0 0.0
        %1072 = vmatpush1.msra.mxu0 0.0
        %1073 = vmatprep.subr.mxu0 0.0
        %1074 = vmatpush1.msra.mxu0 0.0
        %1075 = vmatprep.subr.mxu0 0.0
        %1076 = vmatpush1.msra.mxu0 0.0
        %1077 = vmatprep.subr.mxu0 0.0
        %1078 = vmatpush1.msra.mxu0 0.0
        %1079 = vmatprep.subr.mxu0 0.0
        %1080 = vmatpush1.msra.mxu0 0.0
        %1081 = vmatprep.subr.mxu0 0.0
        %1082 = vmatpush1.msra.mxu0 0.0
        %1083 = vmatprep.subr.mxu0 0.0
        %1084 = vmatpush1.msra.mxu0 0.0
        %1085 = vmatprep.subr.mxu0 0.0
        %1086 = vmatpush1.msra.mxu0 0.0
        %1087 = vmatprep.subr.mxu0 0.0
        %1088 = vmatpush1.msra.mxu0 0.0
        %1089 = vmatprep.subr.mxu0 0.0
        %1090 = vmatpush1.msra.mxu0 0.0
        %1091 = vmatprep.subr.mxu0 0.0
        %1092 = vmatpush1.msra.mxu0 0.0
        %1093 = vmatprep.subr.mxu0 0.0
        %1094 = vmatpush1.msra.mxu0 0.0
        %1095 = vmatprep.subr.mxu0 0.0
        %1096 = vmatpush1.msra.mxu0 0.0
        %1097 = vmatprep.subr.mxu0 0.0
        %1098 = vmatpush1.msra.mxu0 0.0
        %1099 = vmatprep.subr.mxu0 0.0
        %1100 = vmatpush1.msra.mxu0 0.0
        %1101 = vmatprep.subr.mxu0 0.0
        %1102 = vmatpush1.msra.mxu0 0.0
        %1103 = vmatprep.subr.mxu0 0.0
        %1104 = vmatpush1.msra.mxu0 0.0
        %1105 = vmatprep.subr.mxu0 0.0
        %1106 = vmatpush1.msra.mxu0 0.0
        %1107 = vmatprep.subr.mxu0 0.0
        %1108 = vmatpush1.msra.mxu0 0.0
        %1109 = vmatprep.subr.mxu0 0.0
        %1110 = vmatpush1.msra.mxu0 0.0
        %1111 = vmatprep.subr.mxu0 0.0
        %1112 = vmatpush1.msra.mxu0 0.0
        %1113 = vmatprep.subr.mxu0 0.0
        %1114 = vmatpush1.msra.mxu0 0.0
        %1115 = vmatprep.subr.mxu0 0.0
        %1116 = vmatpush1.msra.mxu0 0.0
        %1117 = vmatprep.subr.mxu0 0.0
        %1118 = vmatpush1.msra.mxu0 0.0
        %1119 = vmatprep.subr.mxu0 0.0
        %1120 = vmatpush1.msra.mxu0 0.0
        %1121 = vmatprep.subr.mxu0 0.0
        %1122 = vmatpush1.msra.mxu0 0.0
        %1123 = vmatprep.subr.mxu0 0.0
        %1124 = vmatpush1.msra.mxu0 0.0
        %1125 = vmatprep.mubr.f32.mxu0 0.0
        %1126 = vmatmul.mubr.f32.gmra.mrb[0].mxu0 %v236
        %v1127 = vpop.f32.mrb[0].mxu0
        %v1128 = vadd.f32 0.0, %v1127
        %v1129 = vpop.f32.mrb[0].mxu0
        %v1130 = vadd.f32 0.0, %v1129
        %1131 = vdwg.mxu0
        %1132 = vmatprep.subr.mxu0 %v979
        %1133 = vmatpush1.msra.mxu0 %v978
        %1134 = vmatprep.subr.mxu0 %v987
        %1135 = vmatpush1.msra.mxu0 %v986
        %1136 = vmatprep.subr.mxu0 0.0
        %1137 = vmatpush1.msra.mxu0 0.0
        %1138 = vmatprep.subr.mxu0 0.0
        %1139 = vmatpush1.msra.mxu0 0.0
        %1140 = vmatprep.subr.mxu0 0.0
        %1141 = vmatpush1.msra.mxu0 0.0
        %1142 = vmatprep.subr.mxu0 0.0
        %1143 = vmatpush1.msra.mxu0 0.0
        %1144 = vmatprep.subr.mxu0 0.0
        %1145 = vmatpush1.msra.mxu0 0.0
        %1146 = vmatprep.subr.mxu0 0.0
        %1147 = vmatpush1.msra.mxu0 0.0
        %1148 = vmatprep.subr.mxu0 0.0
        %1149 = vmatpush1.msra.mxu0 0.0
        %1150 = vmatprep.subr.mxu0 0.0
        %1151 = vmatpush1.msra.mxu0 0.0
        %1152 = vmatprep.subr.mxu0 0.0
        %1153 = vmatpush1.msra.mxu0 0.0
        %1154 = vmatprep.subr.mxu0 0.0
        %1155 = vmatpush1.msra.mxu0 0.0
        %1156 = vmatprep.subr.mxu0 0.0
        %1157 = vmatpush1.msra.mxu0 0.0
        %1158 = vmatprep.subr.mxu0 0.0
        %1159 = vmatpush1.msra.mxu0 0.0
        %1160 = vmatprep.subr.mxu0 0.0
        %1161 = vmatpush1.msra.mxu0 0.0
        %1162 = vmatprep.subr.mxu0 0.0
        %1163 = vmatpush1.msra.mxu0 0.0
        %1164 = vmatprep.subr.mxu0 0.0
        %1165 = vmatpush1.msra.mxu0 0.0
        %1166 = vmatprep.subr.mxu0 0.0
        %1167 = vmatpush1.msra.mxu0 0.0
        %1168 = vmatprep.subr.mxu0 0.0
        %1169 = vmatpush1.msra.mxu0 0.0
        %1170 = vmatprep.subr.mxu0 0.0
        %1171 = vmatpush1.msra.mxu0 0.0
        %1172 = vmatprep.subr.mxu0 0.0
        %1173 = vmatpush1.msra.mxu0 0.0
        %1174 = vmatprep.subr.mxu0 0.0
        %1175 = vmatpush1.msra.mxu0 0.0
        %1176 = vmatprep.subr.mxu0 0.0
        %1177 = vmatpush1.msra.mxu0 0.0
        %1178 = vmatprep.subr.mxu0 0.0
        %1179 = vmatpush1.msra.mxu0 0.0
        %1180 = vmatprep.subr.mxu0 0.0
        %1181 = vmatpush1.msra.mxu0 0.0
        %1182 = vmatprep.subr.mxu0 0.0
        %1183 = vmatpush1.msra.mxu0 0.0
        %1184 = vmatprep.subr.mxu0 0.0
        %1185 = vmatpush1.msra.mxu0 0.0
        %1186 = vmatprep.subr.mxu0 0.0
        %1187 = vmatpush1.msra.mxu0 0.0
        %1188 = vmatprep.subr.mxu0 0.0
        %1189 = vmatpush1.msra.mxu0 0.0
        %1190 = vmatprep.subr.mxu0 0.0
        %1191 = vmatpush1.msra.mxu0 0.0
        %1192 = vmatprep.subr.mxu0 0.0
        %1193 = vmatpush1.msra.mxu0 0.0
        %1194 = vmatprep.subr.mxu0 0.0
        %1195 = vmatpush1.msra.mxu0 0.0
        %1196 = vmatprep.mubr.f32.mxu0 0.0
        %1197 = vmatmul.mubr.f32.gmra.mrb[0].mxu0 %v236
        %v1198 = vpop.f32.mrb[0].mxu0
        %v1199 = vadd.f32 0.0, %v1198
        %v1200 = vpop.f32.mrb[0].mxu0
        %v1201 = vadd.f32 0.0, %v1200
        %1202 = vdwg.mxu0
        %1203 = vmatprep.subr.mxu0 %v981
        %1204 = vmatpush1.msra.mxu0 %v980
        %1205 = vmatprep.subr.mxu0 %v989
        %1206 = vmatpush1.msra.mxu0 %v988
        %1207 = vmatprep.subr.mxu0 0.0
        %1208 = vmatpush1.msra.mxu0 0.0
        %1209 = vmatprep.subr.mxu0 0.0
        %1210 = vmatpush1.msra.mxu0 0.0
        %1211 = vmatprep.subr.mxu0 0.0
        %1212 = vmatpush1.msra.mxu0 0.0
        %1213 = vmatprep.subr.mxu0 0.0
        %1214 = vmatpush1.msra.mxu0 0.0
        %1215 = vmatprep.subr.mxu0 0.0
        %1216 = vmatpush1.msra.mxu0 0.0
        %1217 = vmatprep.subr.mxu0 0.0
        %1218 = vmatpush1.msra.mxu0 0.0
        %1219 = vmatprep.subr.mxu0 0.0
        %1220 = vmatpush1.msra.mxu0 0.0
        %1221 = vmatprep.subr.mxu0 0.0
        %1222 = vmatpush1.msra.mxu0 0.0
        %1223 = vmatprep.subr.mxu0 0.0
        %1224 = vmatpush1.msra.mxu0 0.0
        %1225 = vmatprep.subr.mxu0 0.0
        %1226 = vmatpush1.msra.mxu0 0.0
        %1227 = vmatprep.subr.mxu0 0.0
        %1228 = vmatpush1.msra.mxu0 0.0
        %1229 = vmatprep.subr.mxu0 0.0
        %1230 = vmatpush1.msra.mxu0 0.0
        %1231 = vmatprep.subr.mxu0 0.0
        %1232 = vmatpush1.msra.mxu0 0.0
        %1233 = vmatprep.subr.mxu0 0.0
        %1234 = vmatpush1.msra.mxu0 0.0
        %1235 = vmatprep.subr.mxu0 0.0
        %1236 = vmatpush1.msra.mxu0 0.0
        %1237 = vmatprep.subr.mxu0 0.0
        %1238 = vmatpush1.msra.mxu0 0.0
        %1239 = vmatprep.subr.mxu0 0.0
        %1240 = vmatpush1.msra.mxu0 0.0
        %1241 = vmatprep.subr.mxu0 0.0
        %1242 = vmatpush1.msra.mxu0 0.0
        %1243 = vmatprep.subr.mxu0 0.0
        %1244 = vmatpush1.msra.mxu0 0.0
        %1245 = vmatprep.subr.mxu0 0.0
        %1246 = vmatpush1.msra.mxu0 0.0
        %1247 = vmatprep.subr.mxu0 0.0
        %1248 = vmatpush1.msra.mxu0 0.0
        %1249 = vmatprep.subr.mxu0 0.0
        %1250 = vmatpush1.msra.mxu0 0.0
        %1251 = vmatprep.subr.mxu0 0.0
        %1252 = vmatpush1.msra.mxu0 0.0
        %1253 = vmatprep.subr.mxu0 0.0
        %1254 = vmatpush1.msra.mxu0 0.0
        %1255 = vmatprep.subr.mxu0 0.0
        %1256 = vmatpush1.msra.mxu0 0.0
        %1257 = vmatprep.subr.mxu0 0.0
        %1258 = vmatpush1.msra.mxu0 0.0
        %1259 = vmatprep.subr.mxu0 0.0
        %1260 = vmatpush1.msra.mxu0 0.0
        %1261 = vmatprep.subr.mxu0 0.0
        %1262 = vmatpush1.msra.mxu0 0.0
        %1263 = vmatprep.subr.mxu0 0.0
        %1264 = vmatpush1.msra.mxu0 0.0
        %1265 = vmatprep.subr.mxu0 0.0
        %1266 = vmatpush1.msra.mxu0 0.0
        %1267 = vmatprep.mubr.f32.mxu0 0.0
        %1268 = vmatmul.mubr.f32.gmra.mrb[0].mxu0 %v236
        %v1269 = vpop.f32.mrb[0].mxu0
        %v1270 = vadd.f32 0.0, %v1269
        %v1271 = vpop.f32.mrb[0].mxu0
        %v1272 = vadd.f32 0.0, %v1271
        %1273 = vdwg.mxu0
        %v1274 = vld [vmem:[%s4] sm:$0xff]
        %1276 = vset.pattern.permute.xlu0 0
        %1277 = vperm.xlu0 %1276, %v1274
        %v1278 = vpop.permute.xlu0 %1277
        %v1280 = vmul.f32 %v1278, %v1057
        %s1281 = scalar_lea.vmem %s4, 8
        %v1282 = vld [vmem:[%s1281] sm:$0xff]
        %1284 = vset.pattern.permute.xlu0 0
        %1285 = vperm.xlu0 %1284, %v1282
        %v1286 = vpop.permute.xlu0 %1285
        %v1288 = vmul.f32 %v1286, %v1059
        %v1289 = vadd.f32 %v1280, %v1288
        %s1290 = scalar_lea.vmem %s4, 16
        %v1291 = vld [vmem:[%s1290] sm:$0xff]
        %1293 = vset.pattern.permute.xlu0 0
        %1294 = vperm.xlu0 %1293, %v1291
        %v1295 = vpop.permute.xlu0 %1294
        %v1297 = vmul.f32 %v1295, %v1128
        %v1298 = vadd.f32 %v1289, %v1297
        %s1299 = scalar_lea.vmem %s4, 24
        %v1300 = vld [vmem:[%s1299] sm:$0xff]
        %1302 = vset.pattern.permute.xlu0 0
        %1303 = vperm.xlu0 %1302, %v1300
        %v1304 = vpop.permute.xlu0 %1303
        %v1306 = vmul.f32 %v1304, %v1130
        %v1307 = vadd.f32 %v1298, %v1306
        %s1308 = scalar_lea.vmem %s4, 32
        %v1309 = vld [vmem:[%s1308] sm:$0xff]
        %1311 = vset.pattern.permute.xlu0 0
        %1312 = vperm.xlu0 %1311, %v1309
        %v1313 = vpop.permute.xlu0 %1312
        %v1315 = vmul.f32 %v1313, %v1199
        %v1316 = vadd.f32 %v1307, %v1315
        %s1317 = scalar_lea.vmem %s4, 40
        %v1318 = vld [vmem:[%s1317] sm:$0xff]
        %1320 = vset.pattern.permute.xlu0 0
        %1321 = vperm.xlu0 %1320, %v1318
        %v1322 = vpop.permute.xlu0 %1321
        %v1324 = vmul.f32 %v1322, %v1201
        %v1325 = vadd.f32 %v1316, %v1324
        %s1326 = scalar_lea.vmem %s4, 48
        %v1327 = vld [vmem:[%s1326] sm:$0xff]
        %1329 = vset.pattern.permute.xlu0 0
        %1330 = vperm.xlu0 %1329, %v1327
        %v1331 = vpop.permute.xlu0 %1330
        %v1333 = vmul.f32 %v1331, %v1270
        %v1334 = vadd.f32 %v1325, %v1333
        %s1335 = scalar_lea.vmem %s4, 56
        %v1336 = vld [vmem:[%s1335] sm:$0xff]
        %1338 = vset.pattern.permute.xlu0 0
        %1339 = vperm.xlu0 %1338, %v1336
        %v1340 = vpop.permute.xlu0 %1339
        %v1342 = vmul.f32 %v1340, %v1272
        %v1343 = vadd.f32 %v1334, %v1342
        %s1344 = scalar_lea.vmem %s4, 64
        %v1345 = vld [vmem:[%s1344] sm:$0xff]
        %1347 = vset.pattern.permute.xlu0 0
        %1348 = vperm.xlu0 %1347, %v1345
        %v1349 = vpop.permute.xlu0 %1348
        %v1351 = vmul.f32 %v1349, %v1057
        %s1352 = scalar_lea.vmem %s4, 72
        %v1353 = vld [vmem:[%s1352] sm:$0xff]
        %1355 = vset.pattern.permute.xlu0 0
        %1356 = vperm.xlu0 %1355, %v1353
        %v1357 = vpop.permute.xlu0 %1356
        %v1359 = vmul.f32 %v1357, %v1059
        %v1360 = vadd.f32 %v1351, %v1359
        %s1361 = scalar_lea.vmem %s4, 80
        %v1362 = vld [vmem:[%s1361] sm:$0xff]
        %1364 = vset.pattern.permute.xlu0 0
        %1365 = vperm.xlu0 %1364, %v1362
        %v1366 = vpop.permute.xlu0 %1365
        %v1368 = vmul.f32 %v1366, %v1128
        %v1369 = vadd.f32 %v1360, %v1368
        %s1370 = scalar_lea.vmem %s4, 88
        %v1371 = vld [vmem:[%s1370] sm:$0xff]
        %1373 = vset.pattern.permute.xlu0 0
        %1374 = vperm.xlu0 %1373, %v1371
        %v1375 = vpop.permute.xlu0 %1374
        %v1377 = vmul.f32 %v1375, %v1130
        %v1378 = vadd.f32 %v1369, %v1377
        %s1379 = scalar_lea.vmem %s4, 96
        %v1380 = vld [vmem:[%s1379] sm:$0xff]
        %1382 = vset.pattern.permute.xlu0 0
        %1383 = vperm.xlu0 %1382, %v1380
        %v1384 = vpop.permute.xlu0 %1383
        %v1386 = vmul.f32 %v1384, %v1199
        %v1387 = vadd.f32 %v1378, %v1386
        %s1388 = scalar_lea.vmem %s4, 104
        %v1389 = vld [vmem:[%s1388] sm:$0xff]
        %1391 = vset.pattern.permute.xlu0 0
        %1392 = vperm.xlu0 %1391, %v1389
        %v1393 = vpop.permute.xlu0 %1392
        %v1395 = vmul.f32 %v1393, %v1201
        %v1396 = vadd.f32 %v1387, %v1395
        %s1397 = scalar_lea.vmem %s4, 112
        %v1398 = vld [vmem:[%s1397] sm:$0xff]
        %1400 = vset.pattern.permute.xlu0 0
        %1401 = vperm.xlu0 %1400, %v1398
        %v1402 = vpop.permute.xlu0 %1401
        %v1404 = vmul.f32 %v1402, %v1270
        %v1405 = vadd.f32 %v1396, %v1404
        %s1406 = scalar_lea.vmem %s4, 120
        %v1407 = vld [vmem:[%s1406] sm:$0xff]
        %1409 = vset.pattern.permute.xlu0 0
        %1410 = vperm.xlu0 %1409, %v1407
        %v1411 = vpop.permute.xlu0 %1410
        %v1413 = vmul.f32 %v1411, %v1272
        %v1414 = vadd.f32 %v1405, %v1413
        %s1415 = scalar_lea.vmem %s4, 128
        %v1416 = vld [vmem:[%s1415] sm:$0xff]
        %1418 = vset.pattern.permute.xlu0 0
        %1419 = vperm.xlu0 %1418, %v1416
        %v1420 = vpop.permute.xlu0 %1419
        %v1422 = vmul.f32 %v1420, %v1057
        %s1423 = scalar_lea.vmem %s4, 136
        %v1424 = vld [vmem:[%s1423] sm:$0xff]
        %1426 = vset.pattern.permute.xlu0 0
        %1427 = vperm.xlu0 %1426, %v1424
        %v1428 = vpop.permute.xlu0 %1427
        %v1430 = vmul.f32 %v1428, %v1059
        %v1431 = vadd.f32 %v1422, %v1430
        %s1432 = scalar_lea.vmem %s4, 144
        %v1433 = vld [vmem:[%s1432] sm:$0xff]
        %1435 = vset.pattern.permute.xlu0 0
        %1436 = vperm.xlu0 %1435, %v1433
        %v1437 = vpop.permute.xlu0 %1436
        %v1439 = vmul.f32 %v1437, %v1128
        %v1440 = vadd.f32 %v1431, %v1439
        %s1441 = scalar_lea.vmem %s4, 152
        %v1442 = vld [vmem:[%s1441] sm:$0xff]
        %1444 = vset.pattern.permute.xlu0 0
        %1445 = vperm.xlu0 %1444, %v1442
        %v1446 = vpop.permute.xlu0 %1445
        %v1448 = vmul.f32 %v1446, %v1130
        %v1449 = vadd.f32 %v1440, %v1448
        %s1450 = scalar_lea.vmem %s4, 160
        %v1451 = vld [vmem:[%s1450] sm:$0xff]
        %1453 = vset.pattern.permute.xlu0 0
        %1454 = vperm.xlu0 %1453, %v1451
        %v1455 = vpop.permute.xlu0 %1454
        %v1457 = vmul.f32 %v1455, %v1199
        %v1458 = vadd.f32 %v1449, %v1457
        %s1459 = scalar_lea.vmem %s4, 168
        %v1460 = vld [vmem:[%s1459] sm:$0xff]
        %1462 = vset.pattern.permute.xlu0 0
        %1463 = vperm.xlu0 %1462, %v1460
        %v1464 = vpop.permute.xlu0 %1463
        %v1466 = vmul.f32 %v1464, %v1201
        %v1467 = vadd.f32 %v1458, %v1466
        %s1468 = scalar_lea.vmem %s4, 176
        %v1469 = vld [vmem:[%s1468] sm:$0xff]
        %1471 = vset.pattern.permute.xlu0 0
        %1472 = vperm.xlu0 %1471, %v1469
        %v1473 = vpop.permute.xlu0 %1472
        %v1475 = vmul.f32 %v1473, %v1270
        %v1476 = vadd.f32 %v1467, %v1475
        %s1477 = scalar_lea.vmem %s4, 184
        %v1478 = vld [vmem:[%s1477] sm:$0xff]
        %1480 = vset.pattern.permute.xlu0 0
        %1481 = vperm.xlu0 %1480, %v1478
        %v1482 = vpop.permute.xlu0 %1481
        %v1484 = vmul.f32 %v1482, %v1272
        %v1485 = vadd.f32 %v1476, %v1484
        %s1486 = scalar_lea.vmem %s4, 192
        %v1487 = vld [vmem:[%s1486] sm:$0xff]
        %1489 = vset.pattern.permute.xlu0 0
        %1490 = vperm.xlu0 %1489, %v1487
        %v1491 = vpop.permute.xlu0 %1490
        %v1493 = vmul.f32 %v1491, %v1057
        %s1494 = scalar_lea.vmem %s4, 200
        %v1495 = vld [vmem:[%s1494] sm:$0xff]
        %1497 = vset.pattern.permute.xlu0 0
        %1498 = vperm.xlu0 %1497, %v1495
        %v1499 = vpop.permute.xlu0 %1498
        %v1501 = vmul.f32 %v1499, %v1059
        %v1502 = vadd.f32 %v1493, %v1501
        %s1503 = scalar_lea.vmem %s4, 208
        %v1504 = vld [vmem:[%s1503] sm:$0xff]
        %1506 = vset.pattern.permute.xlu0 0
        %1507 = vperm.xlu0 %1506, %v1504
        %v1508 = vpop.permute.xlu0 %1507
        %v1510 = vmul.f32 %v1508, %v1128
        %v1511 = vadd.f32 %v1502, %v1510
        %s1512 = scalar_lea.vmem %s4, 216
        %v1513 = vld [vmem:[%s1512] sm:$0xff]
        %1515 = vset.pattern.permute.xlu0 0
        %1516 = vperm.xlu0 %1515, %v1513
        %v1517 = vpop.permute.xlu0 %1516
        %v1519 = vmul.f32 %v1517, %v1130
        %v1520 = vadd.f32 %v1511, %v1519
        %s1521 = scalar_lea.vmem %s4, 224
        %v1522 = vld [vmem:[%s1521] sm:$0xff]
        %1524 = vset.pattern.permute.xlu0 0
        %1525 = vperm.xlu0 %1524, %v1522
        %v1526 = vpop.permute.xlu0 %1525
        %v1528 = vmul.f32 %v1526, %v1199
        %v1529 = vadd.f32 %v1520, %v1528
        %s1530 = scalar_lea.vmem %s4, 232
        %v1531 = vld [vmem:[%s1530] sm:$0xff]
        %1533 = vset.pattern.permute.xlu0 0
        %1534 = vperm.xlu0 %1533, %v1531
        %v1535 = vpop.permute.xlu0 %1534
        %v1537 = vmul.f32 %v1535, %v1201
        %v1538 = vadd.f32 %v1529, %v1537
        %s1539 = scalar_lea.vmem %s4, 240
        %v1540 = vld [vmem:[%s1539] sm:$0xff]
        %1542 = vset.pattern.permute.xlu0 0
        %1543 = vperm.xlu0 %1542, %v1540
        %v1544 = vpop.permute.xlu0 %1543
        %v1546 = vmul.f32 %v1544, %v1270
        %v1547 = vadd.f32 %v1538, %v1546
        %s1548 = scalar_lea.vmem %s4, 248
        %v1549 = vld [vmem:[%s1548] sm:$0xff]
        %1551 = vset.pattern.permute.xlu0 0
        %1552 = vperm.xlu0 %1551, %v1549
        %v1553 = vpop.permute.xlu0 %1552
        %v1555 = vmul.f32 %v1553, %v1272
        %v1556 = vadd.f32 %v1547, %v1555
        %s1557 = scalar_lea.vmem %s4, 256
        %v1558 = vld [vmem:[%s1557] sm:$0xff]
        %1560 = vset.pattern.permute.xlu0 0
        %1561 = vperm.xlu0 %1560, %v1558
        %v1562 = vpop.permute.xlu0 %1561
        %v1564 = vmul.f32 %v1562, %v1057
        %s1565 = scalar_lea.vmem %s4, 264
        %v1566 = vld [vmem:[%s1565] sm:$0xff]
        %1568 = vset.pattern.permute.xlu0 0
        %1569 = vperm.xlu0 %1568, %v1566
        %v1570 = vpop.permute.xlu0 %1569
        %v1572 = vmul.f32 %v1570, %v1059
        %v1573 = vadd.f32 %v1564, %v1572
        %s1574 = scalar_lea.vmem %s4, 272
        %v1575 = vld [vmem:[%s1574] sm:$0xff]
        %1577 = vset.pattern.permute.xlu0 0
        %1578 = vperm.xlu0 %1577, %v1575
        %v1579 = vpop.permute.xlu0 %1578
        %v1581 = vmul.f32 %v1579, %v1128
        %v1582 = vadd.f32 %v1573, %v1581
        %s1583 = scalar_lea.vmem %s4, 280
        %v1584 = vld [vmem:[%s1583] sm:$0xff]
        %1586 = vset.pattern.permute.xlu0 0
        %1587 = vperm.xlu0 %1586, %v1584
        %v1588 = vpop.permute.xlu0 %1587
        %v1590 = vmul.f32 %v1588, %v1130
        %v1591 = vadd.f32 %v1582, %v1590
        %s1592 = scalar_lea.vmem %s4, 288
        %v1593 = vld [vmem:[%s1592] sm:$0xff]
        %1595 = vset.pattern.permute.xlu0 0
        %1596 = vperm.xlu0 %1595, %v1593
        %v1597 = vpop.permute.xlu0 %1596
        %v1599 = vmul.f32 %v1597, %v1199
        %v1600 = vadd.f32 %v1591, %v1599
        %s1601 = scalar_lea.vmem %s4, 296
        %v1602 = vld [vmem:[%s1601] sm:$0xff]
        %1604 = vset.pattern.permute.xlu0 0
        %1605 = vperm.xlu0 %1604, %v1602
        %v1606 = vpop.permute.xlu0 %1605
        %v1608 = vmul.f32 %v1606, %v1201
        %v1609 = vadd.f32 %v1600, %v1608
        %s1610 = scalar_lea.vmem %s4, 304
        %v1611 = vld [vmem:[%s1610] sm:$0xff]
        %1613 = vset.pattern.permute.xlu0 0
        %1614 = vperm.xlu0 %1613, %v1611
        %v1615 = vpop.permute.xlu0 %1614
        %v1617 = vmul.f32 %v1615, %v1270
        %v1618 = vadd.f32 %v1609, %v1617
        %s1619 = scalar_lea.vmem %s4, 312
        %v1620 = vld [vmem:[%s1619] sm:$0xff]
        %1622 = vset.pattern.permute.xlu0 0
        %1623 = vperm.xlu0 %1622, %v1620
        %v1624 = vpop.permute.xlu0 %1623
        %v1626 = vmul.f32 %v1624, %v1272
        %v1627 = vadd.f32 %v1618, %v1626
        %s1628 = scalar_lea.vmem %s4, 320
        %v1629 = vld [vmem:[%s1628] sm:$0xff]
        %1631 = vset.pattern.permute.xlu0 0
        %1632 = vperm.xlu0 %1631, %v1629
        %v1633 = vpop.permute.xlu0 %1632
        %v1635 = vmul.f32 %v1633, %v1057
        %s1636 = scalar_lea.vmem %s4, 328
        %v1637 = vld [vmem:[%s1636] sm:$0xff]
        %1639 = vset.pattern.permute.xlu0 0
        %1640 = vperm.xlu0 %1639, %v1637
        %v1641 = vpop.permute.xlu0 %1640
        %v1643 = vmul.f32 %v1641, %v1059
        %v1644 = vadd.f32 %v1635, %v1643
        %s1645 = scalar_lea.vmem %s4, 336
        %v1646 = vld [vmem:[%s1645] sm:$0xff]
        %1648 = vset.pattern.permute.xlu0 0
        %1649 = vperm.xlu0 %1648, %v1646
        %v1650 = vpop.permute.xlu0 %1649
        %v1652 = vmul.f32 %v1650, %v1128
        %v1653 = vadd.f32 %v1644, %v1652
        %s1654 = scalar_lea.vmem %s4, 344
        %v1655 = vld [vmem:[%s1654] sm:$0xff]
        %1657 = vset.pattern.permute.xlu0 0
        %1658 = vperm.xlu0 %1657, %v1655
        %v1659 = vpop.permute.xlu0 %1658
        %v1661 = vmul.f32 %v1659, %v1130
        %v1662 = vadd.f32 %v1653, %v1661
        %s1663 = scalar_lea.vmem %s4, 352
        %v1664 = vld [vmem:[%s1663] sm:$0xff]
        %1666 = vset.pattern.permute.xlu0 0
        %1667 = vperm.xlu0 %1666, %v1664
        %v1668 = vpop.permute.xlu0 %1667
        %v1670 = vmul.f32 %v1668, %v1199
        %v1671 = vadd.f32 %v1662, %v1670
        %s1672 = scalar_lea.vmem %s4, 360
        %v1673 = vld [vmem:[%s1672] sm:$0xff]
        %1675 = vset.pattern.permute.xlu0 0
        %1676 = vperm.xlu0 %1675, %v1673
        %v1677 = vpop.permute.xlu0 %1676
        %v1679 = vmul.f32 %v1677, %v1201
        %v1680 = vadd.f32 %v1671, %v1679
        %s1681 = scalar_lea.vmem %s4, 368
        %v1682 = vld [vmem:[%s1681] sm:$0xff]
        %1684 = vset.pattern.permute.xlu0 0
        %1685 = vperm.xlu0 %1684, %v1682
        %v1686 = vpop.permute.xlu0 %1685
        %v1688 = vmul.f32 %v1686, %v1270
        %v1689 = vadd.f32 %v1680, %v1688
        %s1690 = scalar_lea.vmem %s4, 376
        %v1691 = vld [vmem:[%s1690] sm:$0xff]
        %1693 = vset.pattern.permute.xlu0 0
        %1694 = vperm.xlu0 %1693, %v1691
        %v1695 = vpop.permute.xlu0 %1694
        %v1697 = vmul.f32 %v1695, %v1272
        %v1698 = vadd.f32 %v1689, %v1697
        %s1699 = scalar_lea.vmem %s4, 384
        %v1700 = vld [vmem:[%s1699] sm:$0xff]
        %1702 = vset.pattern.permute.xlu0 0
        %1703 = vperm.xlu0 %1702, %v1700
        %v1704 = vpop.permute.xlu0 %1703
        %v1706 = vmul.f32 %v1704, %v1057
        %s1707 = scalar_lea.vmem %s4, 392
        %v1708 = vld [vmem:[%s1707] sm:$0xff]
        %1710 = vset.pattern.permute.xlu0 0
        %1711 = vperm.xlu0 %1710, %v1708
        %v1712 = vpop.permute.xlu0 %1711
        %v1714 = vmul.f32 %v1712, %v1059
        %v1715 = vadd.f32 %v1706, %v1714
        %s1716 = scalar_lea.vmem %s4, 400
        %v1717 = vld [vmem:[%s1716] sm:$0xff]
        %1719 = vset.pattern.permute.xlu0 0
        %1720 = vperm.xlu0 %1719, %v1717
        %v1721 = vpop.permute.xlu0 %1720
        %v1723 = vmul.f32 %v1721, %v1128
        %v1724 = vadd.f32 %v1715, %v1723
        %s1725 = scalar_lea.vmem %s4, 408
        %v1726 = vld [vmem:[%s1725] sm:$0xff]
        %1728 = vset.pattern.permute.xlu0 0
        %1729 = vperm.xlu0 %1728, %v1726
        %v1730 = vpop.permute.xlu0 %1729
        %v1732 = vmul.f32 %v1730, %v1130
        %v1733 = vadd.f32 %v1724, %v1732
        %s1734 = scalar_lea.vmem %s4, 416
        %v1735 = vld [vmem:[%s1734] sm:$0xff]
        %1737 = vset.pattern.permute.xlu0 0
        %1738 = vperm.xlu0 %1737, %v1735
        %v1739 = vpop.permute.xlu0 %1738
        %v1741 = vmul.f32 %v1739, %v1199
        %v1742 = vadd.f32 %v1733, %v1741
        %s1743 = scalar_lea.vmem %s4, 424
        %v1744 = vld [vmem:[%s1743] sm:$0xff]
        %1746 = vset.pattern.permute.xlu0 0
        %1747 = vperm.xlu0 %1746, %v1744
        %v1748 = vpop.permute.xlu0 %1747
        %v1750 = vmul.f32 %v1748, %v1201
        %v1751 = vadd.f32 %v1742, %v1750
        %s1752 = scalar_lea.vmem %s4, 432
        %v1753 = vld [vmem:[%s1752] sm:$0xff]
        %1755 = vset.pattern.permute.xlu0 0
        %1756 = vperm.xlu0 %1755, %v1753
        %v1757 = vpop.permute.xlu0 %1756
        %v1759 = vmul.f32 %v1757, %v1270
        %v1760 = vadd.f32 %v1751, %v1759
        %s1761 = scalar_lea.vmem %s4, 440
        %v1762 = vld [vmem:[%s1761] sm:$0xff]
        %1764 = vset.pattern.permute.xlu0 0
        %1765 = vperm.xlu0 %1764, %v1762
        %v1766 = vpop.permute.xlu0 %1765
        %v1768 = vmul.f32 %v1766, %v1272
        %v1769 = vadd.f32 %v1760, %v1768
        %s1770 = scalar_lea.vmem %s4, 448
        %v1771 = vld [vmem:[%s1770] sm:$0xff]
        %1773 = vset.pattern.permute.xlu0 0
        %1774 = vperm.xlu0 %1773, %v1771
        %v1775 = vpop.permute.xlu0 %1774
        %v1777 = vmul.f32 %v1775, %v1057
        %s1778 = scalar_lea.vmem %s4, 456
        %v1779 = vld [vmem:[%s1778] sm:$0xff]
        %1781 = vset.pattern.permute.xlu0 0
        %1782 = vperm.xlu0 %1781, %v1779
        %v1783 = vpop.permute.xlu0 %1782
        %v1785 = vmul.f32 %v1783, %v1059
        %v1786 = vadd.f32 %v1777, %v1785
        %s1787 = scalar_lea.vmem %s4, 464
        %v1788 = vld [vmem:[%s1787] sm:$0xff]
        %1790 = vset.pattern.permute.xlu0 0
        %1791 = vperm.xlu0 %1790, %v1788
        %v1792 = vpop.permute.xlu0 %1791
        %v1794 = vmul.f32 %v1792, %v1128
        %v1795 = vadd.f32 %v1786, %v1794
        %s1796 = scalar_lea.vmem %s4, 472
        %v1797 = vld [vmem:[%s1796] sm:$0xff]
        %1799 = vset.pattern.permute.xlu0 0
        %1800 = vperm.xlu0 %1799, %v1797
        %v1801 = vpop.permute.xlu0 %1800
        %v1803 = vmul.f32 %v1801, %v1130
        %v1804 = vadd.f32 %v1795, %v1803
        %s1805 = scalar_lea.vmem %s4, 480
        %v1806 = vld [vmem:[%s1805] sm:$0xff]
        %1808 = vset.pattern.permute.xlu0 0
        %1809 = vperm.xlu0 %1808, %v1806
        %v1810 = vpop.permute.xlu0 %1809
        %v1812 = vmul.f32 %v1810, %v1199
        %v1813 = vadd.f32 %v1804, %v1812
        %s1814 = scalar_lea.vmem %s4, 488
        %v1815 = vld [vmem:[%s1814] sm:$0xff]
        %1817 = vset.pattern.permute.xlu0 0
        %1818 = vperm.xlu0 %1817, %v1815
        %v1819 = vpop.permute.xlu0 %1818
        %v1821 = vmul.f32 %v1819, %v1201
        %v1822 = vadd.f32 %v1813, %v1821
        %s1823 = scalar_lea.vmem %s4, 496
        %v1824 = vld [vmem:[%s1823] sm:$0xff]
        %1826 = vset.pattern.permute.xlu0 0
        %1827 = vperm.xlu0 %1826, %v1824
        %v1828 = vpop.permute.xlu0 %1827
        %v1830 = vmul.f32 %v1828, %v1270
        %v1831 = vadd.f32 %v1822, %v1830
        %s1832 = scalar_lea.vmem %s4, 504
        %v1833 = vld [vmem:[%s1832] sm:$0xff]
        %1835 = vset.pattern.permute.xlu0 0
        %1836 = vperm.xlu0 %1835, %v1833
        %v1837 = vpop.permute.xlu0 %1836
        %v1839 = vmul.f32 %v1837, %v1272
        %v1840 = vadd.f32 %v1831, %v1839
        %1841 = vmatprep.subr.mxu0 %v1414
        %1842 = vmatpush1.msra.mxu0 %v1343
        %1843 = vmatprep.subr.mxu0 0.0
        %1844 = vmatpush1.msra.mxu0 0.0
        %1845 = vmatprep.subr.mxu0 0.0
        %1846 = vmatpush1.msra.mxu0 0.0
        %1847 = vmatprep.subr.mxu0 0.0
        %1848 = vmatpush1.msra.mxu0 0.0
        %1849 = vmatprep.subr.mxu0 0.0
        %1850 = vmatpush1.msra.mxu0 0.0
        %1851 = vmatprep.subr.mxu0 0.0
        %1852 = vmatpush1.msra.mxu0 0.0
        %1853 = vmatprep.subr.mxu0 0.0
        %1854 = vmatpush1.msra.mxu0 0.0
        %1855 = vmatprep.subr.mxu0 0.0
        %1856 = vmatpush1.msra.mxu0 0.0
        %1857 = vmatprep.subr.mxu0 0.0
        %1858 = vmatpush1.msra.mxu0 0.0
        %1859 = vmatprep.subr.mxu0 0.0
        %1860 = vmatpush1.msra.mxu0 0.0
        %1861 = vmatprep.subr.mxu0 0.0
        %1862 = vmatpush1.msra.mxu0 0.0
        %1863 = vmatprep.subr.mxu0 0.0
        %1864 = vmatpush1.msra.mxu0 0.0
        %1865 = vmatprep.subr.mxu0 0.0
        %1866 = vmatpush1.msra.mxu0 0.0
        %1867 = vmatprep.subr.mxu0 0.0
        %1868 = vmatpush1.msra.mxu0 0.0
        %1869 = vmatprep.subr.mxu0 0.0
        %1870 = vmatpush1.msra.mxu0 0.0
        %1871 = vmatprep.subr.mxu0 0.0
        %1872 = vmatpush1.msra.mxu0 0.0
        %1873 = vmatprep.subr.mxu0 0.0
        %1874 = vmatpush1.msra.mxu0 0.0
        %1875 = vmatprep.subr.mxu0 0.0
        %1876 = vmatpush1.msra.mxu0 0.0
        %1877 = vmatprep.subr.mxu0 0.0
        %1878 = vmatpush1.msra.mxu0 0.0
        %1879 = vmatprep.subr.mxu0 0.0
        %1880 = vmatpush1.msra.mxu0 0.0
        %1881 = vmatprep.subr.mxu0 0.0
        %1882 = vmatpush1.msra.mxu0 0.0
        %1883 = vmatprep.subr.mxu0 0.0
        %1884 = vmatpush1.msra.mxu0 0.0
        %1885 = vmatprep.subr.mxu0 0.0
        %1886 = vmatpush1.msra.mxu0 0.0
        %1887 = vmatprep.subr.mxu0 0.0
        %1888 = vmatpush1.msra.mxu0 0.0
        %1889 = vmatprep.subr.mxu0 0.0
        %1890 = vmatpush1.msra.mxu0 0.0
        %1891 = vmatprep.subr.mxu0 0.0
        %1892 = vmatpush1.msra.mxu0 0.0
        %1893 = vmatprep.subr.mxu0 0.0
        %1894 = vmatpush1.msra.mxu0 0.0
        %1895 = vmatprep.subr.mxu0 0.0
        %1896 = vmatpush1.msra.mxu0 0.0
        %1897 = vmatprep.subr.mxu0 0.0
        %1898 = vmatpush1.msra.mxu0 0.0
        %1899 = vmatprep.subr.mxu0 0.0
        %1900 = vmatpush1.msra.mxu0 0.0
        %1901 = vmatprep.subr.mxu0 0.0
        %1902 = vmatpush1.msra.mxu0 0.0
        %1903 = vmatprep.subr.mxu0 0.0
        %1904 = vmatpush1.msra.mxu0 0.0
        %1905 = vmatprep.mubr.f32.mxu0 0.0
        %1906 = vmatmul.mubr.f32.gmra.mrb[0].mxu0 %v661
        %v1907 = vpop.f32.mrb[0].mxu0
        %v1908 = vadd.f32 0.0, %v1907
        %v1909 = vpop.f32.mrb[0].mxu0
        %v1910 = vadd.f32 0.0, %v1909
        %1911 = vmatprep.mubr.f32.mxu0 0.0
        %1912 = vmatmul.mubr.f32.gmra.mrb[0].mxu0 %v664
        %v1913 = vpop.f32.mrb[0].mxu0
        %v1914 = vadd.f32 0.0, %v1913
        %v1915 = vpop.f32.mrb[0].mxu0
        %v1916 = vadd.f32 0.0, %v1915
        %1917 = vdwg.mxu0
        %1918 = vmatprep.subr.mxu0 %v1556
        %1919 = vmatpush1.msra.mxu0 %v1485
        %1920 = vmatprep.subr.mxu0 0.0
        %1921 = vmatpush1.msra.mxu0 0.0
        %1922 = vmatprep.subr.mxu0 0.0
        %1923 = vmatpush1.msra.mxu0 0.0
        %1924 = vmatprep.subr.mxu0 0.0
        %1925 = vmatpush1.msra.mxu0 0.0
        %1926 = vmatprep.subr.mxu0 0.0
        %1927 = vmatpush1.msra.mxu0 0.0
        %1928 = vmatprep.subr.mxu0 0.0
        %1929 = vmatpush1.msra.mxu0 0.0
        %1930 = vmatprep.subr.mxu0 0.0
        %1931 = vmatpush1.msra.mxu0 0.0
        %1932 = vmatprep.subr.mxu0 0.0
        %1933 = vmatpush1.msra.mxu0 0.0
        %1934 = vmatprep.subr.mxu0 0.0
        %1935 = vmatpush1.msra.mxu0 0.0
        %1936 = vmatprep.subr.mxu0 0.0
        %1937 = vmatpush1.msra.mxu0 0.0
        %1938 = vmatprep.subr.mxu0 0.0
        %1939 = vmatpush1.msra.mxu0 0.0
        %1940 = vmatprep.subr.mxu0 0.0
        %1941 = vmatpush1.msra.mxu0 0.0
        %1942 = vmatprep.subr.mxu0 0.0
        %1943 = vmatpush1.msra.mxu0 0.0
        %1944 = vmatprep.subr.mxu0 0.0
        %1945 = vmatpush1.msra.mxu0 0.0
        %1946 = vmatprep.subr.mxu0 0.0
        %1947 = vmatpush1.msra.mxu0 0.0
        %1948 = vmatprep.subr.mxu0 0.0
        %1949 = vmatpush1.msra.mxu0 0.0
        %1950 = vmatprep.subr.mxu0 0.0
        %1951 = vmatpush1.msra.mxu0 0.0
        %1952 = vmatprep.subr.mxu0 0.0
        %1953 = vmatpush1.msra.mxu0 0.0
        %1954 = vmatprep.subr.mxu0 0.0
        %1955 = vmatpush1.msra.mxu0 0.0
        %1956 = vmatprep.subr.mxu0 0.0
        %1957 = vmatpush1.msra.mxu0 0.0
        %1958 = vmatprep.subr.mxu0 0.0
        %1959 = vmatpush1.msra.mxu0 0.0
        %1960 = vmatprep.subr.mxu0 0.0
        %1961 = vmatpush1.msra.mxu0 0.0
        %1962 = vmatprep.subr.mxu0 0.0
        %1963 = vmatpush1.msra.mxu0 0.0
        %1964 = vmatprep.subr.mxu0 0.0
        %1965 = vmatpush1.msra.mxu0 0.0
        %1966 = vmatprep.subr.mxu0 0.0
        %1967 = vmatpush1.msra.mxu0 0.0
        %1968 = vmatprep.subr.mxu0 0.0
        %1969 = vmatpush1.msra.mxu0 0.0
        %1970 = vmatprep.subr.mxu0 0.0
        %1971 = vmatpush1.msra.mxu0 0.0
        %1972 = vmatprep.subr.mxu0 0.0
        %1973 = vmatpush1.msra.mxu0 0.0
        %1974 = vmatprep.subr.mxu0 0.0
        %1975 = vmatpush1.msra.mxu0 0.0
        %1976 = vmatprep.subr.mxu0 0.0
        %1977 = vmatpush1.msra.mxu0 0.0
        %1978 = vmatprep.subr.mxu0 0.0
        %1979 = vmatpush1.msra.mxu0 0.0
        %1980 = vmatprep.subr.mxu0 0.0
        %1981 = vmatpush1.msra.mxu0 0.0
        %1982 = vmatprep.mubr.f32.mxu0 0.0
        %1983 = vmatmul.mubr.f32.gmra.mrb[0].mxu0 %v661
        %v1984 = vpop.f32.mrb[0].mxu0
        %v1985 = vadd.f32 0.0, %v1984
        %v1986 = vpop.f32.mrb[0].mxu0
        %v1987 = vadd.f32 0.0, %v1986
        %1988 = vmatprep.mubr.f32.mxu0 0.0
        %1989 = vmatmul.mubr.f32.gmra.mrb[0].mxu0 %v664
        %v1990 = vpop.f32.mrb[0].mxu0
        %v1991 = vadd.f32 0.0, %v1990
        %v1992 = vpop.f32.mrb[0].mxu0
        %v1993 = vadd.f32 0.0, %v1992
        %1994 = vdwg.mxu0
        %1995 = vmatprep.subr.mxu0 %v1698
        %1996 = vmatpush1.msra.mxu0 %v1627
        %1997 = vmatprep.subr.mxu0 0.0
        %1998 = vmatpush1.msra.mxu0 0.0
        %1999 = vmatprep.subr.mxu0 0.0
        %2000 = vmatpush1.msra.mxu0 0.0
        %2001 = vmatprep.subr.mxu0 0.0
        %2002 = vmatpush1.msra.mxu0 0.0
        %2003 = vmatprep.subr.mxu0 0.0
        %2004 = vmatpush1.msra.mxu0 0.0
        %2005 = vmatprep.subr.mxu0 0.0
        %2006 = vmatpush1.msra.mxu0 0.0
        %2007 = vmatprep.subr.mxu0 0.0
        %2008 = vmatpush1.msra.mxu0 0.0
        %2009 = vmatprep.subr.mxu0 0.0
        %2010 = vmatpush1.msra.mxu0 0.0
        %2011 = vmatprep.subr.mxu0 0.0
        %2012 = vmatpush1.msra.mxu0 0.0
        %2013 = vmatprep.subr.mxu0 0.0
        %2014 = vmatpush1.msra.mxu0 0.0
        %2015 = vmatprep.subr.mxu0 0.0
        %2016 = vmatpush1.msra.mxu0 0.0
        %2017 = vmatprep.subr.mxu0 0.0
        %2018 = vmatpush1.msra.mxu0 0.0
        %2019 = vmatprep.subr.mxu0 0.0
        %2020 = vmatpush1.msra.mxu0 0.0
        %2021 = vmatprep.subr.mxu0 0.0
        %2022 = vmatpush1.msra.mxu0 0.0
        %2023 = vmatprep.subr.mxu0 0.0
        %2024 = vmatpush1.msra.mxu0 0.0
        %2025 = vmatprep.subr.mxu0 0.0
        %2026 = vmatpush1.msra.mxu0 0.0
        %2027 = vmatprep.subr.mxu0 0.0
        %2028 = vmatpush1.msra.mxu0 0.0
        %2029 = vmatprep.subr.mxu0 0.0
        %2030 = vmatpush1.msra.mxu0 0.0
        %2031 = vmatprep.subr.mxu0 0.0
        %2032 = vmatpush1.msra.mxu0 0.0
        %2033 = vmatprep.subr.mxu0 0.0
        %2034 = vmatpush1.msra.mxu0 0.0
        %2035 = vmatprep.subr.mxu0 0.0
        %2036 = vmatpush1.msra.mxu0 0.0
        %2037 = vmatprep.subr.mxu0 0.0
        %2038 = vmatpush1.msra.mxu0 0.0
        %2039 = vmatprep.subr.mxu0 0.0
        %2040 = vmatpush1.msra.mxu0 0.0
        %2041 = vmatprep.subr.mxu0 0.0
        %2042 = vmatpush1.msra.mxu0 0.0
        %2043 = vmatprep.subr.mxu0 0.0
        %2044 = vmatpush1.msra.mxu0 0.0
        %2045 = vmatprep.subr.mxu0 0.0
        %2046 = vmatpush1.msra.mxu0 0.0
        %2047 = vmatprep.subr.mxu0 0.0
        %2048 = vmatpush1.msra.mxu0 0.0
        %2049 = vmatprep.subr.mxu0 0.0
        %2050 = vmatpush1.msra.mxu0 0.0
        %2051 = vmatprep.subr.mxu0 0.0
        %2052 = vmatpush1.msra.mxu0 0.0
        %2053 = vmatprep.subr.mxu0 0.0
        %2054 = vmatpush1.msra.mxu0 0.0
        %2055 = vmatprep.subr.mxu0 0.0
        %2056 = vmatpush1.msra.mxu0 0.0
        %2057 = vmatprep.subr.mxu0 0.0
        %2058 = vmatpush1.msra.mxu0 0.0
        %2059 = vmatprep.mubr.f32.mxu0 0.0
        %2060 = vmatmul.mubr.f32.gmra.mrb[0].mxu0 %v661
        %v2061 = vpop.f32.mrb[0].mxu0
        %v2062 = vadd.f32 0.0, %v2061
        %v2063 = vpop.f32.mrb[0].mxu0
        %v2064 = vadd.f32 0.0, %v2063
        %2065 = vmatprep.mubr.f32.mxu0 0.0
        %2066 = vmatmul.mubr.f32.gmra.mrb[0].mxu0 %v664
        %v2067 = vpop.f32.mrb[0].mxu0
        %v2068 = vadd.f32 0.0, %v2067
        %v2069 = vpop.f32.mrb[0].mxu0
        %v2070 = vadd.f32 0.0, %v2069
        %2071 = vdwg.mxu0
        %2072 = vmatprep.subr.mxu0 %v1840
        %2073 = vmatpush1.msra.mxu0 %v1769
        %2074 = vmatprep.subr.mxu0 0.0
        %2075 = vmatpush1.msra.mxu0 0.0
        %2076 = vmatprep.subr.mxu0 0.0
        %2077 = vmatpush1.msra.mxu0 0.0
        %2078 = vmatprep.subr.mxu0 0.0
        %2079 = vmatpush1.msra.mxu0 0.0
        %2080 = vmatprep.subr.mxu0 0.0
        %2081 = vmatpush1.msra.mxu0 0.0
        %2082 = vmatprep.subr.mxu0 0.0
        %2083 = vmatpush1.msra.mxu0 0.0
        %2084 = vmatprep.subr.mxu0 0.0
        %2085 = vmatpush1.msra.mxu0 0.0
        %2086 = vmatprep.subr.mxu0 0.0
        %2087 = vmatpush1.msra.mxu0 0.0
        %2088 = vmatprep.subr.mxu0 0.0
        %2089 = vmatpush1.msra.mxu0 0.0
        %2090 = vmatprep.subr.mxu0 0.0
        %2091 = vmatpush1.msra.mxu0 0.0
        %2092 = vmatprep.subr.mxu0 0.0
        %2093 = vmatpush1.msra.mxu0 0.0
        %2094 = vmatprep.subr.mxu0 0.0
        %2095 = vmatpush1.msra.mxu0 0.0
        %2096 = vmatprep.subr.mxu0 0.0
        %2097 = vmatpush1.msra.mxu0 0.0
        %2098 = vmatprep.subr.mxu0 0.0
        %2099 = vmatpush1.msra.mxu0 0.0
        %2100 = vmatprep.subr.mxu0 0.0
        %2101 = vmatpush1.msra.mxu0 0.0
        %2102 = vmatprep.subr.mxu0 0.0
        %2103 = vmatpush1.msra.mxu0 0.0
        %2104 = vmatprep.subr.mxu0 0.0
        %2105 = vmatpush1.msra.mxu0 0.0
        %2106 = vmatprep.subr.mxu0 0.0
        %2107 = vmatpush1.msra.mxu0 0.0
        %2108 = vmatprep.subr.mxu0 0.0
        %2109 = vmatpush1.msra.mxu0 0.0
        %2110 = vmatprep.subr.mxu0 0.0
        %2111 = vmatpush1.msra.mxu0 0.0
        %2112 = vmatprep.subr.mxu0 0.0
        %2113 = vmatpush1.msra.mxu0 0.0
        %2114 = vmatprep.subr.mxu0 0.0
        %2115 = vmatpush1.msra.mxu0 0.0
        %2116 = vmatprep.subr.mxu0 0.0
        %2117 = vmatpush1.msra.mxu0 0.0
        %2118 = vmatprep.subr.mxu0 0.0
        %2119 = vmatpush1.msra.mxu0 0.0
        %2120 = vmatprep.subr.mxu0 0.0
        %2121 = vmatpush1.msra.mxu0 0.0
        %2122 = vmatprep.subr.mxu0 0.0
        %2123 = vmatpush1.msra.mxu0 0.0
        %2124 = vmatprep.subr.mxu0 0.0
        %2125 = vmatpush1.msra.mxu0 0.0
        %2126 = vmatprep.subr.mxu0 0.0
        %2127 = vmatpush1.msra.mxu0 0.0
        %2128 = vmatprep.subr.mxu0 0.0
        %2129 = vmatpush1.msra.mxu0 0.0
        %2130 = vmatprep.subr.mxu0 0.0
        %2131 = vmatpush1.msra.mxu0 0.0
        %2132 = vmatprep.subr.mxu0 0.0
        %2133 = vmatpush1.msra.mxu0 0.0
        %2134 = vmatprep.subr.mxu0 0.0
        %2135 = vmatpush1.msra.mxu0 0.0
        %2136 = vmatprep.mubr.f32.mxu0 0.0
        %2137 = vmatmul.mubr.f32.gmra.mrb[0].mxu0 %v661
        %v2138 = vpop.f32.mrb[0].mxu0
        %v2139 = vadd.f32 0.0, %v2138
        %v2140 = vpop.f32.mrb[0].mxu0
        %v2141 = vadd.f32 0.0, %v2140
        %2142 = vmatprep.mubr.f32.mxu0 0.0
        %2143 = vmatmul.mubr.f32.gmra.mrb[0].mxu0 %v664
        %v2144 = vpop.f32.mrb[0].mxu0
        %v2145 = vadd.f32 0.0, %v2144
        %v2146 = vpop.f32.mrb[0].mxu0
        %v2147 = vadd.f32 0.0, %v2146
        %2148 = vdwg.mxu0
        %v2149 = vmax.f32 %v1908, 0.0
        %v2150 = vmax.f32 %v1910, 0.0
        %v2151 = vmax.f32 %v1985, 0.0
        %v2152 = vmax.f32 %v1987, 0.0
        %v2153 = vmax.f32 %v2062, 0.0
        %v2154 = vmax.f32 %v2064, 0.0
        %v2155 = vmax.f32 %v2139, 0.0
        %v2156 = vmax.f32 %v2141, 0.0
        %v2157 = vmax.f32 %v1914, 0.0
        %v2158 = vmax.f32 %v1916, 0.0
        %v2159 = vmax.f32 %v1991, 0.0
        %v2160 = vmax.f32 %v1993, 0.0
        %v2161 = vmax.f32 %v2068, 0.0
        %v2162 = vmax.f32 %v2070, 0.0
        %v2163 = vmax.f32 %v2145, 0.0
        %v2164 = vmax.f32 %v2147, 0.0
        %2165 = vst [vmem:[%s217] sm:$0xff] %v2149
        %2166 = vst [vmem:[%s217 + $0x8] sm:$0xff] %v2150
        %2167 = vst [vmem:[%s217 + $0x10] sm:$0xff] %v2151
        %2168 = vst [vmem:[%s217 + $0x18] sm:$0xff] %v2152
        %2169 = vst [vmem:[%s217 + $0x20] sm:$0xff] %v2153
        %2170 = vst [vmem:[%s217 + $0x28] sm:$0xff] %v2154
        %2171 = vst [vmem:[%s217 + $0x30] sm:$0xff] %v2155
        %2172 = vst [vmem:[%s217 + $0x38] sm:$0xff] %v2156
        %2173 = vst [vmem:[%s217 + $0x40] sm:$0xff] %v2157
        %2174 = vst [vmem:[%s217 + $0x48] sm:$0xff] %v2158
        %2175 = vst [vmem:[%s217 + $0x50] sm:$0xff] %v2159
        %2176 = vst [vmem:[%s217 + $0x58] sm:$0xff] %v2160
        %2177 = vst [vmem:[%s217 + $0x60] sm:$0xff] %v2161
        %2178 = vst [vmem:[%s217 + $0x68] sm:$0xff] %v2162
        %2179 = vst [vmem:[%s217 + $0x70] sm:$0xff] %v2163
        %2180 = vst [vmem:[%s217 + $0x78] sm:$0xff] %v2164
        %s2181 = sand.u32 %s137, 1
        %s2182 = scalar_lea.sflag [#allocation3], %s2181
        %s2183 = sand.u32 %s137, 1
        %s2184 = smul.addr %s2183, 128
        %s2185 = scalar_lea.vmem [#allocation2], %s2184
        // Predicated region
        $region41: #{tpu_custom_call.1} parent=39 // pred_check
          %p2186 = pneg %p147
        $region42: #{tpu_custom_call.1} parent=39 // pred_check_branch
          %2188 = sbr.rel (%p2186) target = $region44
        $region43: #{tpu_custom_call.1} parent=39 // pred_region
          %s2190 = ssub.s32 2048, 2048
          %2191 = vsyncadd %s2182, %s2190
          %s2192 = smul.addr %s19, 16
          %s2193 = smul.addr %s2192, 128
          %s2194 = scalar_lea.hbm %s5, %s2193
          %s2195 = sshll.u32 %s2185, 4
          %s2196 = int_to_ptr.vmem [resolvable:$true] %s2195
          %2201 = dma.vmem_to_hbm [thread:$0]  %s2196, 2048, %s2194, %s2182, 1024, 1024, 64
        $region44: #{tpu_custom_call.1} parent=39 // pred_fallthru
          _
      $region40: #{tpu_custom_call.1} parent=5 // pred_fallthru
        _
      %p2202 = scmp.le.s32.totalorder 2, %s14
      // Predicated region
      $region45: #{tpu_custom_call.1} parent=5 // pred_check
        %p2203 = pneg %p2202
      $region46: #{tpu_custom_call.1} parent=5 // pred_check_branch
        %2205 = sbr.rel (%p2203) target = $region48
      $region47: #{tpu_custom_call.1} parent=5 // pred_region
        %s2206 = ssub.s32 %s14, 2
        // Predicated region
        $region49: #{tpu_custom_call.1} parent=47 // pred_check
          %p2207 = pneg %p153
        $region50: #{tpu_custom_call.1} parent=47 // pred_check_branch
          %2209 = sbr.rel (%p2207) target = $region52
        $region51: #{tpu_custom_call.1} parent=47 // pred_region
          %s2210 = sand.u32 %s138, 1
          %s2211 = scalar_lea.sflag [#allocation3], %s2210
          %s2212 = sand.u32 %s138, 1
          %s2213 = smul.addr %s2212, 128
          %s2214 = scalar_lea.vmem [#allocation2], %s2213
          %2215 = dma.done %s2211, 2048
        $region52: #{tpu_custom_call.1} parent=47 // pred_fallthru
          _
      $region48: #{tpu_custom_call.1} parent=5 // pred_fallthru
        _
    $region6: #{tpu_custom_call.1} parent=1 // loop_footer
      %s18 = sadd.s32 1, %s14
    $region7: #{tpu_custom_call.1} parent=1 // loop_footer_branch
      %13 = sbr.rel target = $region3
    $region8: #{tpu_custom_call.1} parent=1 // loop_exit
      _
    %2216 = vsyncpa [#allocation3], 1
    %s2217 = scalar_lea.sflag [#allocation3], 1
    %2218 = vsyncpa %s2217, 1

</llo_original>
